<compile_context>
chip_gen: v5e
topology: v5e:2x2
jax: 0.10.0
libtpu: 0.0.40
codegen_flags: <defaults>
</compile_context>

<pallas_src>
import functools

import jax
import jax.numpy as jnp
from jax.experimental import pallas as pl
from jax.experimental.pallas import tpu as pltpu


# ---------------------------------------------------------------------------
# Conv2d(kernel=3, stride=1, padding=0) (+ optional fused ReLU) as a matmul.
# ---------------------------------------------------------------------------
def _conv_matmul_kernel(w_ref, x_ref, b_ref, o_ref, *, apply_relu):
    # w_ref: (Cout, 9*Cin)  resident packed weight
    # x_ref: (9*Cin, tp)    pixel tile, pixels on the 128-lane axis
    # b_ref: (Cout, 1)
    # o_ref: (Cout, tp)     lane-dense output tile
    acc = jnp.dot(w_ref[...], x_ref[...], preferred_element_type=jnp.float32)
    acc = acc + b_ref[...]
    if apply_relu:
        acc = jnp.maximum(acc, 0.0)
    o_ref[...] = acc.astype(o_ref.dtype)


def conv3x3_valid(x, weight, bias, *, relu=False, tp=512):
    """PyTorch-style Conv2d(Cin, Cout, 3) forward (VALID padding, stride 1).

    x      : (N, Cin, H, W)
    weight : (Cout, Cin, 3, 3)
    bias   : (Cout,)
    returns: (N, Cout, H-2, W-2), ReLU'd if relu=True.
    """
    N, Cin, H, W = x.shape
    Cout = weight.shape[0]
    Hout, Wout = H - 2, W - 2
    K = 9 * Cin
    P = N * Hout * Wout

    # ---- glue: im2col with rows ordered (ci, kh, kw) to match weight.reshape ----
    # TODO(synk): for large images, generate the 9 shifted taps inside the kernel
    # (halo'd row tiles) to avoid the 9x HBM expansion of im2col; at these sizes
    # the lane-dense matmul layout dominates and the glue is cheap.
    patches = jnp.stack(
        [x[:, :, kh:kh + Hout, kw:kw + Wout] for kh in range(3) for kw in range(3)],
        axis=2)                                              # (N, Cin, 9, Hout, Wout)
    x_col = jnp.transpose(patches, (1, 2, 0, 3, 4)).reshape(K, P)
    w_flat = weight.reshape(Cout, K)
    b_col = bias.reshape(Cout, 1)

    # ---- lane-dense pixel tiling: pad P up to a multiple of the tile ----
    tp = min(tp, ((P + 127) // 128) * 128)                   # lane-aligned tile
    P_pad = pl.cdiv(P, tp) * tp
    if P_pad != P:
        x_col = jnp.pad(x_col, ((0, 0), (0, P_pad - P)))

    kernel = functools.partial(_conv_matmul_kernel, apply_relu=relu)
    flops = 2 * Cout * K * P_pad
    bytes_accessed = 4 * (Cout * K + K * P_pad + Cout + Cout * P_pad)

    y = pl.pallas_call(
        kernel,
        out_shape=jax.ShapeDtypeStruct((Cout, P_pad), x.dtype),
        grid_spec=pltpu.PrefetchScalarGridSpec(
            num_scalar_prefetch=0,
            grid=(P_pad // tp,),
            in_specs=[
                pl.BlockSpec((Cout, K), lambda i: (0, 0)),   # packed weight, resident
                pl.BlockSpec((K, tp), lambda i: (0, i)),     # pixel tile (lanes)
                pl.BlockSpec((Cout, 1), lambda i: (0, 0)),   # bias
            ],
            out_specs=pl.BlockSpec((Cout, tp), lambda i: (0, i)),
        ),
        compiler_params=pltpu.CompilerParams(
            dimension_semantics=("parallel",)),
        cost_estimate=pl.CostEstimate(
            flops=flops, transcendentals=0, bytes_accessed=bytes_accessed),
    )(w_flat, x_col, b_col)

    y = y[:, :P].reshape(Cout, N, Hout, Wout)
    return jnp.transpose(y, (1, 0, 2, 3))                    # back to NCHW


# ---------------------------------------------------------------------------
# MaxPool2d(kernel=2, stride=2), floor mode.
# ---------------------------------------------------------------------------
def _max4_kernel(a_ref, b_ref, c_ref, d_ref, o_ref):
    o_ref[...] = jnp.maximum(jnp.maximum(a_ref[...], b_ref[...]),
                             jnp.maximum(c_ref[...], d_ref[...]))


def maxpool2x2(x, *, tr=512):
    """(N, C, H, W) -> (N, C, H//2, W//2), max over non-overlapping 2x2 windows."""
    N, C, H, W = x.shape
    Hp, Wp = H // 2, W // 2
    # glue: the four 2x2-window phases (XLA strided slices); the max runs in Pallas.
    a = x[:, :, 0:2 * Hp:2, 0:2 * Wp:2]
    b = x[:, :, 0:2 * Hp:2, 1:2 * Wp:2]
    c = x[:, :, 1:2 * Hp:2, 0:2 * Wp:2]
    d = x[:, :, 1:2 * Hp:2, 1:2 * Wp:2]

    total = N * C * Hp * Wp
    LANE = 128
    rows = pl.cdiv(total, LANE)
    tr = min(tr, ((rows + 7) // 8) * 8)          # sublane-aligned row tile
    rows_p = pl.cdiv(rows, tr) * tr
    pad = rows_p * LANE - total

    def flat(t):
        return jnp.pad(t.reshape(-1), (0, pad)).reshape(rows_p, LANE)

    spec = pl.BlockSpec((tr, LANE), lambda i: (i, 0))
    y = pl.pallas_call(
        _max4_kernel,
        out_shape=jax.ShapeDtypeStruct((rows_p, LANE), x.dtype),
        grid_spec=pltpu.PrefetchScalarGridSpec(
            num_scalar_prefetch=0,
            grid=(rows_p // tr,),
            in_specs=[spec, spec, spec, spec],
            out_specs=spec,
        ),
        compiler_params=pltpu.CompilerParams(
            dimension_semantics=("parallel",)),
    )(flat(a), flat(b), flat(c), flat(d))
    return y.reshape(-1)[:total].reshape(N, C, Hp, Wp)


# ---------------------------------------------------------------------------
# Encoder forward (list of DownBlocks + MaxPool2d(2)), PyTorch semantics.
# ---------------------------------------------------------------------------
def encoder_forward(x, params):
    block_outputs = []
    for (w1, b1, w2, b2) in params:
        x = conv3x3_valid(x, w1, b1, relu=True)    # conv1 + fused ReLU
        x = conv3x3_valid(x, w2, b2, relu=False)   # conv2
        block_outputs.append(x)
        x = maxpool2x2(x)                          # pooled x feeds the next block
    return block_outputs


# ---------------------------------------------------------------------------
# Pure-JAX reference for correctness checking.
# ---------------------------------------------------------------------------
def _ref_encoder(x, params):
    outs = []
    for (w1, b1, w2, b2) in params:
        x = jax.lax.conv_general_dilated(
            x, w1, (1, 1), "VALID", dimension_numbers=("NCHW", "OIHW", "NCHW"))
        x = jnp.maximum(x + b1[None, :, None, None], 0.0)
        x = jax.lax.conv_general_dilated(
            x, w2, (1, 1), "VALID", dimension_numbers=("NCHW", "OIHW", "NCHW"))
        x = x + b2[None, :, None, None]
        outs.append(x)
        N, C, H, W = x.shape
        Hp, Wp = H // 2, W // 2
        x = x[:, :, :2 * Hp, :2 * Wp].reshape(N, C, Hp, 2, Wp, 2).max(axis=(3, 5))
    return outs


if __name__ == "__main__":
    key = jax.random.PRNGKey(0)
    channels = (3, 16, 32, 64)          # Encoder default channels
    N, H, W = 2, 64, 64                 # small spatial size that survives 3 blocks + pools

    n_blocks = len(channels) - 1
    keys = jax.random.split(key, 1 + 4 * n_blocks)
    x = jax.random.normal(keys[0], (N, channels[0], H, W), dtype=jnp.float32)

    params = []
    k = 1
    for i in range(n_blocks):
        cin, cout = channels[i], channels[i + 1]
        w1 = jax.random.normal(keys[k + 0], (cout, cin, 3, 3), jnp.float32) * 0.1
        b1 = jax.random.normal(keys[k + 1], (cout,), jnp.float32) * 0.1
        w2 = jax.random.normal(keys[k + 2], (cout, cout, 3, 3), jnp.float32) * 0.1
        b2 = jax.random.normal(keys[k + 3], (cout,), jnp.float32) * 0.1
        params.append((w1, b1, w2, b2))
        k += 4

    outs = jax.jit(encoder_forward)(x, params)
    outs = jax.block_until_ready(outs)

    refs = _ref_encoder(x, params)
    expected = [(N, 16, 60, 60), (N, 32, 26, 26), (N, 64, 9, 9)]
    for o, r, s in zip(outs, refs, expected):
        assert o.shape == s, (o.shape, s)
        max_err = float(jnp.max(jnp.abs(o - r)))
        assert jnp.allclose(o, r, atol=2e-3, rtol=2e-3), max_err

    print("KERNEL_OK")
</pallas_src>

<mosaic_0001>
module attributes {stable_mosaic.version = 11 : i64} {
  func.func @_conv_matmul_kernel(%arg0: i32, %arg1: memref<16x27xf32, #tpu.memory_space<vmem>>, %arg2: memref<27x512xf32, #tpu.memory_space<vmem>>, %arg3: memref<16x1xf32, #tpu.memory_space<vmem>>, %arg4: memref<16x512xf32, #tpu.memory_space<vmem>>) attributes {dimension_semantics = [#tpu.dimension_semantics<parallel>], iteration_bounds = array<i64: 16>, scalar_prefetch = 0 : i64, scratch_operands = 0 : i64, tpu.core_type = #tpu.core_type<tc>, window_params = [{pipeline_mode = #tpu.pipeline_mode<synchronous>, transform_indices = @transform_0, window_bounds = array<i64: 16, 27>}, {transform_indices = @transform_1, window_bounds = array<i64: 27, 512>}, {pipeline_mode = #tpu.pipeline_mode<synchronous>, transform_indices = @transform_2, window_bounds = array<i64: 16, 1>}, {transform_indices = @transform_3, window_bounds = array<i64: 16, 512>}]} {
    %c0 = arith.constant 0 : index
    %c0_0 = arith.constant 0 : index
    %0 = vector.load %arg1[%c0, %c0_0] : memref<16x27xf32, #tpu.memory_space<vmem>>, vector<16x27xf32>
    %c0_1 = arith.constant 0 : index
    %c0_2 = arith.constant 0 : index
    %1 = vector.load %arg2[%c0_1, %c0_2] : memref<27x512xf32, #tpu.memory_space<vmem>>, vector<27x512xf32>
    %cst = arith.constant dense<0.000000e+00> : vector<16x512xf32>
    %2 = tpu.matmul %0, %1, %cst {dimension_numbers = #tpu.dot_dimension_numbers<[1], [0], [0], [1], [0, 0, 1, 1], [], []>} : vector<16x27xf32>, vector<27x512xf32>, vector<16x512xf32> -> vector<16x512xf32>
    %c0_3 = arith.constant 0 : index
    %c0_4 = arith.constant 0 : index
    %3 = vector.load %arg3[%c0_3, %c0_4] : memref<16x1xf32, #tpu.memory_space<vmem>>, vector<16x1xf32>
    %4 = vector.broadcast %3 : vector<16x1xf32> to vector<16x512xf32>
    %5 = arith.addf %2, %4 : vector<16x512xf32>
    %cst_5 = arith.constant 0.000000e+00 : f32
    %6 = vector.broadcast %cst_5 : f32 to vector<16x512xf32>
    %7 = arith.maximumf %5, %6 : vector<16x512xf32>
    %c0_6 = arith.constant 0 : index
    %c0_7 = arith.constant 0 : index
    %8 = vector.load %arg4[%c0_6, %c0_7] : memref<16x512xf32, #tpu.memory_space<vmem>>, vector<16x512xf32>
    tpu.vector_store %arg4[%c0_6, %c0_7], %7 {strides = array<i32>} : memref<16x512xf32, #tpu.memory_space<vmem>>, vector<16x512xf32>,
    return
  }
  func.func @transform_0(%arg0: i32) -> (i32, i32) {
    %c0_i32 = arith.constant 0 : i32
    %c0_i32_0 = arith.constant 0 : i32
    %c0_i32_1 = arith.constant 0 : i32
    return %c0_i32, %c0_i32_0 : i32, i32
  }
  func.func @transform_1(%arg0: i32) -> (i32, i32) {
    %c0_i32 = arith.constant 0 : i32
    %c0_i32_0 = arith.constant 0 : i32
    return %c0_i32, %arg0 : i32, i32
  }
  func.func @transform_2(%arg0: i32) -> (i32, i32) {
    %c0_i32 = arith.constant 0 : i32
    %c0_i32_0 = arith.constant 0 : i32
    %c0_i32_1 = arith.constant 0 : i32
    return %c0_i32, %c0_i32_0 : i32, i32
  }
  func.func @transform_3(%arg0: i32) -> (i32, i32) {
    %c0_i32 = arith.constant 0 : i32
    %c0_i32_0 = arith.constant 0 : i32
    return %c0_i32, %arg0 : i32, i32
  }
}

module attributes {stable_mosaic.version = 11 : i64} {
  func.func @_conv_matmul_kernel(%arg0: i32, %arg1: memref<16x144xf32, #tpu.memory_space<vmem>>, %arg2: memref<144x512xf32, #tpu.memory_space<vmem>>, %arg3: memref<16x1xf32, #tpu.memory_space<vmem>>, %arg4: memref<16x512xf32, #tpu.memory_space<vmem>>) attributes {dimension_semantics = [#tpu.dimension_semantics<parallel>], iteration_bounds = array<i64: 15>, scalar_prefetch = 0 : i64, scratch_operands = 0 : i64, tpu.core_type = #tpu.core_type<tc>, window_params = [{pipeline_mode = #tpu.pipeline_mode<synchronous>, transform_indices = @transform_0, window_bounds = array<i64: 16, 144>}, {transform_indices = @transform_1, window_bounds = array<i64: 144, 512>}, {pipeline_mode = #tpu.pipeline_mode<synchronous>, transform_indices = @transform_2, window_bounds = array<i64: 16, 1>}, {transform_indices = @transform_3, window_bounds = array<i64: 16, 512>}]} {
    %c0 = arith.constant 0 : index
    %c0_0 = arith.constant 0 : index
    %0 = vector.load %arg1[%c0, %c0_0] : memref<16x144xf32, #tpu.memory_space<vmem>>, vector<16x144xf32>
    %c0_1 = arith.constant 0 : index
    %c0_2 = arith.constant 0 : index
    %1 = vector.load %arg2[%c0_1, %c0_2] : memref<144x512xf32, #tpu.memory_space<vmem>>, vector<144x512xf32>
    %cst = arith.constant dense<0.000000e+00> : vector<16x512xf32>
    %2 = tpu.matmul %0, %1, %cst {dimension_numbers = #tpu.dot_dimension_numbers<[1], [0], [0], [1], [0, 0, 1, 1], [], []>} : vector<16x144xf32>, vector<144x512xf32>, vector<16x512xf32> -> vector<16x512xf32>
    %c0_3 = arith.constant 0 : index
    %c0_4 = arith.constant 0 : index
    %3 = vector.load %arg3[%c0_3, %c0_4] : memref<16x1xf32, #tpu.memory_space<vmem>>, vector<16x1xf32>
    %4 = vector.broadcast %3 : vector<16x1xf32> to vector<16x512xf32>
    %5 = arith.addf %2, %4 : vector<16x512xf32>
    %c0_5 = arith.constant 0 : index
    %c0_6 = arith.constant 0 : index
    %6 = vector.load %arg4[%c0_5, %c0_6] : memref<16x512xf32, #tpu.memory_space<vmem>>, vector<16x512xf32>
    tpu.vector_store %arg4[%c0_5, %c0_6], %5 {strides = array<i32>} : memref<16x512xf32, #tpu.memory_space<vmem>>, vector<16x512xf32>,
    return
  }
  func.func @transform_0(%arg0: i32) -> (i32, i32) {
    %c0_i32 = arith.constant 0 : i32
    %c0_i32_0 = arith.constant 0 : i32
    %c0_i32_1 = arith.constant 0 : i32
    return %c0_i32, %c0_i32_0 : i32, i32
  }
  func.func @transform_1(%arg0: i32) -> (i32, i32) {
    %c0_i32 = arith.constant 0 : i32
    %c0_i32_0 = arith.constant 0 : i32
    return %c0_i32, %arg0 : i32, i32
  }
  func.func @transform_2(%arg0: i32) -> (i32, i32) {
    %c0_i32 = arith.constant 0 : i32
    %c0_i32_0 = arith.constant 0 : i32
    %c0_i32_1 = arith.constant 0 : i32
    return %c0_i32, %c0_i32_0 : i32, i32
  }
  func.func @transform_3(%arg0: i32) -> (i32, i32) {
    %c0_i32 = arith.constant 0 : i32
    %c0_i32_0 = arith.constant 0 : i32
    return %c0_i32, %arg0 : i32, i32
  }
}

module attributes {stable_mosaic.version = 11 : i64} {
  func.func @_max4_kernel(%arg0: i32, %arg1: memref<232x128xf32, #tpu.memory_space<vmem>>, %arg2: memref<232x128xf32, #tpu.memory_space<vmem>>, %arg3: memref<232x128xf32, #tpu.memory_space<vmem>>, %arg4: memref<232x128xf32, #tpu.memory_space<vmem>>, %arg5: memref<232x128xf32, #tpu.memory_space<vmem>>) attributes {dimension_semantics = [#tpu.dimension_semantics<parallel>], iteration_bounds = array<i64: 1>, scalar_prefetch = 0 : i64, scratch_operands = 0 : i64, tpu.core_type = #tpu.core_type<tc>, window_params = [{transform_indices = @transform_0, window_bounds = array<i64: 232, 128>}, {transform_indices = @transform_1, window_bounds = array<i64: 232, 128>}, {transform_indices = @transform_2, window_bounds = array<i64: 232, 128>}, {transform_indices = @transform_3, window_bounds = array<i64: 232, 128>}, {transform_indices = @transform_4, window_bounds = array<i64: 232, 128>}]} {
    %c0 = arith.constant 0 : index
    %c0_0 = arith.constant 0 : index
    %0 = vector.load %arg1[%c0, %c0_0] : memref<232x128xf32, #tpu.memory_space<vmem>>, vector<232x128xf32>
    %c0_1 = arith.constant 0 : index
    %c0_2 = arith.constant 0 : index
    %1 = vector.load %arg2[%c0_1, %c0_2] : memref<232x128xf32, #tpu.memory_space<vmem>>, vector<232x128xf32>
    %2 = arith.maximumf %0, %1 : vector<232x128xf32>
    %c0_3 = arith.constant 0 : index
    %c0_4 = arith.constant 0 : index
    %3 = vector.load %arg3[%c0_3, %c0_4] : memref<232x128xf32, #tpu.memory_space<vmem>>, vector<232x128xf32>
    %c0_5 = arith.constant 0 : index
    %c0_6 = arith.constant 0 : index
    %4 = vector.load %arg4[%c0_5, %c0_6] : memref<232x128xf32, #tpu.memory_space<vmem>>, vector<232x128xf32>
    %5 = arith.maximumf %3, %4 : vector<232x128xf32>
    %6 = arith.maximumf %2, %5 : vector<232x128xf32>
    %c0_7 = arith.constant 0 : index
    %c0_8 = arith.constant 0 : index
    %7 = vector.load %arg5[%c0_7, %c0_8] : memref<232x128xf32, #tpu.memory_space<vmem>>, vector<232x128xf32>
    tpu.vector_store %arg5[%c0_7, %c0_8], %6 {strides = array<i32>} : memref<232x128xf32, #tpu.memory_space<vmem>>, vector<232x128xf32>,
    return
  }
  func.func @transform_0(%arg0: i32) -> (i32, i32) {
    %c0_i32 = arith.constant 0 : i32
    %c0_i32_0 = arith.constant 0 : i32
    return %arg0, %c0_i32 : i32, i32
  }
  func.func @transform_1(%arg0: i32) -> (i32, i32) {
    %c0_i32 = arith.constant 0 : i32
    %c0_i32_0 = arith.constant 0 : i32
    return %arg0, %c0_i32 : i32, i32
  }
  func.func @transform_2(%arg0: i32) -> (i32, i32) {
    %c0_i32 = arith.constant 0 : i32
    %c0_i32_0 = arith.constant 0 : i32
    return %arg0, %c0_i32 : i32, i32
  }
  func.func @transform_3(%arg0: i32) -> (i32, i32) {
    %c0_i32 = arith.constant 0 : i32
    %c0_i32_0 = arith.constant 0 : i32
    return %arg0, %c0_i32 : i32, i32
  }
  func.func @transform_4(%arg0: i32) -> (i32, i32) {
    %c0_i32 = arith.constant 0 : i32
    %c0_i32_0 = arith.constant 0 : i32
    return %arg0, %c0_i32 : i32, i32
  }
}

module attributes {stable_mosaic.version = 11 : i64} {
  func.func @_conv_matmul_kernel(%arg0: i32, %arg1: memref<32x144xf32, #tpu.memory_space<vmem>>, %arg2: memref<144x512xf32, #tpu.memory_space<vmem>>, %arg3: memref<32x1xf32, #tpu.memory_space<vmem>>, %arg4: memref<32x512xf32, #tpu.memory_space<vmem>>) attributes {dimension_semantics = [#tpu.dimension_semantics<parallel>], iteration_bounds = array<i64: 4>, scalar_prefetch = 0 : i64, scratch_operands = 0 : i64, tpu.core_type = #tpu.core_type<tc>, window_params = [{pipeline_mode = #tpu.pipeline_mode<synchronous>, transform_indices = @transform_0, window_bounds = array<i64: 32, 144>}, {transform_indices = @transform_1, window_bounds = array<i64: 144, 512>}, {pipeline_mode = #tpu.pipeline_mode<synchronous>, transform_indices = @transform_2, window_bounds = array<i64: 32, 1>}, {transform_indices = @transform_3, window_bounds = array<i64: 32, 512>}]} {
    %c0 = arith.constant 0 : index
    %c0_0 = arith.constant 0 : index
    %0 = vector.load %arg1[%c0, %c0_0] : memref<32x144xf32, #tpu.memory_space<vmem>>, vector<32x144xf32>
    %c0_1 = arith.constant 0 : index
    %c0_2 = arith.constant 0 : index
    %1 = vector.load %arg2[%c0_1, %c0_2] : memref<144x512xf32, #tpu.memory_space<vmem>>, vector<144x512xf32>
    %cst = arith.constant dense<0.000000e+00> : vector<32x512xf32>
    %2 = tpu.matmul %0, %1, %cst {dimension_numbers = #tpu.dot_dimension_numbers<[1], [0], [0], [1], [0, 0, 1, 1], [], []>} : vector<32x144xf32>, vector<144x512xf32>, vector<32x512xf32> -> vector<32x512xf32>
    %c0_3 = arith.constant 0 : index
    %c0_4 = arith.constant 0 : index
    %3 = vector.load %arg3[%c0_3, %c0_4] : memref<32x1xf32, #tpu.memory_space<vmem>>, vector<32x1xf32>
    %4 = vector.broadcast %3 : vector<32x1xf32> to vector<32x512xf32>
    %5 = arith.addf %2, %4 : vector<32x512xf32>
    %cst_5 = arith.constant 0.000000e+00 : f32
    %6 = vector.broadcast %cst_5 : f32 to vector<32x512xf32>
    %7 = arith.maximumf %5, %6 : vector<32x512xf32>
    %c0_6 = arith.constant 0 : index
    %c0_7 = arith.constant 0 : index
    %8 = vector.load %arg4[%c0_6, %c0_7] : memref<32x512xf32, #tpu.memory_space<vmem>>, vector<32x512xf32>
    tpu.vector_store %arg4[%c0_6, %c0_7], %7 {strides = array<i32>} : memref<32x512xf32, #tpu.memory_space<vmem>>, vector<32x512xf32>,
    return
  }
  func.func @transform_0(%arg0: i32) -> (i32, i32) {
    %c0_i32 = arith.constant 0 : i32
    %c0_i32_0 = arith.constant 0 : i32
    %c0_i32_1 = arith.constant 0 : i32
    return %c0_i32, %c0_i32_0 : i32, i32
  }
  func.func @transform_1(%arg0: i32) -> (i32, i32) {
    %c0_i32 = arith.constant 0 : i32
    %c0_i32_0 = arith.constant 0 : i32
    return %c0_i32, %arg0 : i32, i32
  }
  func.func @transform_2(%arg0: i32) -> (i32, i32) {
    %c0_i32 = arith.constant 0 : i32
    %c0_i32_0 = arith.constant 0 : i32
    %c0_i32_1 = arith.constant 0 : i32
    return %c0_i32, %c0_i32_0 : i32, i32
  }
  func.func @transform_3(%arg0: i32) -> (i32, i32) {
    %c0_i32 = arith.constant 0 : i32
    %c0_i32_0 = arith.constant 0 : i32
    return %c0_i32, %arg0 : i32, i32
  }
}

module attributes {stable_mosaic.version = 11 : i64} {
  func.func @_conv_matmul_kernel(%arg0: i32, %arg1: memref<32x288xf32, #tpu.memory_space<vmem>>, %arg2: memref<288x512xf32, #tpu.memory_space<vmem>>, %arg3: memref<32x1xf32, #tpu.memory_space<vmem>>, %arg4: memref<32x512xf32, #tpu.memory_space<vmem>>) attributes {dimension_semantics = [#tpu.dimension_semantics<parallel>], iteration_bounds = array<i64: 3>, scalar_prefetch = 0 : i64, scratch_operands = 0 : i64, tpu.core_type = #tpu.core_type<tc>, window_params = [{pipeline_mode = #tpu.pipeline_mode<synchronous>, transform_indices = @transform_0, window_bounds = array<i64: 32, 288>}, {transform_indices = @transform_1, window_bounds = array<i64: 288, 512>}, {pipeline_mode = #tpu.pipeline_mode<synchronous>, transform_indices = @transform_2, window_bounds = array<i64: 32, 1>}, {transform_indices = @transform_3, window_bounds = array<i64: 32, 512>}]} {
    %c0 = arith.constant 0 : index
    %c0_0 = arith.constant 0 : index
    %0 = vector.load %arg1[%c0, %c0_0] : memref<32x288xf32, #tpu.memory_space<vmem>>, vector<32x288xf32>
    %c0_1 = arith.constant 0 : index
    %c0_2 = arith.constant 0 : index
    %1 = vector.load %arg2[%c0_1, %c0_2] : memref<288x512xf32, #tpu.memory_space<vmem>>, vector<288x512xf32>
    %cst = arith.constant dense<0.000000e+00> : vector<32x512xf32>
    %2 = tpu.matmul %0, %1, %cst {dimension_numbers = #tpu.dot_dimension_numbers<[1], [0], [0], [1], [0, 0, 1, 1], [], []>} : vector<32x288xf32>, vector<288x512xf32>, vector<32x512xf32> -> vector<32x512xf32>
    %c0_3 = arith.constant 0 : index
    %c0_4 = arith.constant 0 : index
    %3 = vector.load %arg3[%c0_3, %c0_4] : memref<32x1xf32, #tpu.memory_space<vmem>>, vector<32x1xf32>
    %4 = vector.broadcast %3 : vector<32x1xf32> to vector<32x512xf32>
    %5 = arith.addf %2, %4 : vector<32x512xf32>
    %c0_5 = arith.constant 0 : index
    %c0_6 = arith.constant 0 : index
    %6 = vector.load %arg4[%c0_5, %c0_6] : memref<32x512xf32, #tpu.memory_space<vmem>>, vector<32x512xf32>
    tpu.vector_store %arg4[%c0_5, %c0_6], %5 {strides = array<i32>} : memref<32x512xf32, #tpu.memory_space<vmem>>, vector<32x512xf32>,
    return
  }
  func.func @transform_0(%arg0: i32) -> (i32, i32) {
    %c0_i32 = arith.constant 0 : i32
    %c0_i32_0 = arith.constant 0 : i32
    %c0_i32_1 = arith.constant 0 : i32
    return %c0_i32, %c0_i32_0 : i32, i32
  }
  func.func @transform_1(%arg0: i32) -> (i32, i32) {
    %c0_i32 = arith.constant 0 : i32
    %c0_i32_0 = arith.constant 0 : i32
    return %c0_i32, %arg0 : i32, i32
  }
  func.func @transform_2(%arg0: i32) -> (i32, i32) {
    %c0_i32 = arith.constant 0 : i32
    %c0_i32_0 = arith.constant 0 : i32
    %c0_i32_1 = arith.constant 0 : i32
    return %c0_i32, %c0_i32_0 : i32, i32
  }
  func.func @transform_3(%arg0: i32) -> (i32, i32) {
    %c0_i32 = arith.constant 0 : i32
    %c0_i32_0 = arith.constant 0 : i32
    return %c0_i32, %arg0 : i32, i32
  }
}

module attributes {stable_mosaic.version = 11 : i64} {
  func.func @_max4_kernel(%arg0: i32, %arg1: memref<88x128xf32, #tpu.memory_space<vmem>>, %arg2: memref<88x128xf32, #tpu.memory_space<vmem>>, %arg3: memref<88x128xf32, #tpu.memory_space<vmem>>, %arg4: memref<88x128xf32, #tpu.memory_space<vmem>>, %arg5: memref<88x128xf32, #tpu.memory_space<vmem>>) attributes {dimension_semantics = [#tpu.dimension_semantics<parallel>], iteration_bounds = array<i64: 1>, scalar_prefetch = 0 : i64, scratch_operands = 0 : i64, tpu.core_type = #tpu.core_type<tc>, window_params = [{transform_indices = @transform_0, window_bounds = array<i64: 88, 128>}, {transform_indices = @transform_1, window_bounds = array<i64: 88, 128>}, {transform_indices = @transform_2, window_bounds = array<i64: 88, 128>}, {transform_indices = @transform_3, window_bounds = array<i64: 88, 128>}, {transform_indices = @transform_4, window_bounds = array<i64: 88, 128>}]} {
    %c0 = arith.constant 0 : index
    %c0_0 = arith.constant 0 : index
    %0 = vector.load %arg1[%c0, %c0_0] : memref<88x128xf32, #tpu.memory_space<vmem>>, vector<88x128xf32>
    %c0_1 = arith.constant 0 : index
    %c0_2 = arith.constant 0 : index
    %1 = vector.load %arg2[%c0_1, %c0_2] : memref<88x128xf32, #tpu.memory_space<vmem>>, vector<88x128xf32>
    %2 = arith.maximumf %0, %1 : vector<88x128xf32>
    %c0_3 = arith.constant 0 : index
    %c0_4 = arith.constant 0 : index
    %3 = vector.load %arg3[%c0_3, %c0_4] : memref<88x128xf32, #tpu.memory_space<vmem>>, vector<88x128xf32>
    %c0_5 = arith.constant 0 : index
    %c0_6 = arith.constant 0 : index
    %4 = vector.load %arg4[%c0_5, %c0_6] : memref<88x128xf32, #tpu.memory_space<vmem>>, vector<88x128xf32>
    %5 = arith.maximumf %3, %4 : vector<88x128xf32>
    %6 = arith.maximumf %2, %5 : vector<88x128xf32>
    %c0_7 = arith.constant 0 : index
    %c0_8 = arith.constant 0 : index
    %7 = vector.load %arg5[%c0_7, %c0_8] : memref<88x128xf32, #tpu.memory_space<vmem>>, vector<88x128xf32>
    tpu.vector_store %arg5[%c0_7, %c0_8], %6 {strides = array<i32>} : memref<88x128xf32, #tpu.memory_space<vmem>>, vector<88x128xf32>,
    return
  }
  func.func @transform_0(%arg0: i32) -> (i32, i32) {
    %c0_i32 = arith.constant 0 : i32
    %c0_i32_0 = arith.constant 0 : i32
    return %arg0, %c0_i32 : i32, i32
  }
  func.func @transform_1(%arg0: i32) -> (i32, i32) {
    %c0_i32 = arith.constant 0 : i32
    %c0_i32_0 = arith.constant 0 : i32
    return %arg0, %c0_i32 : i32, i32
  }
  func.func @transform_2(%arg0: i32) -> (i32, i32) {
    %c0_i32 = arith.constant 0 : i32
    %c0_i32_0 = arith.constant 0 : i32
    return %arg0, %c0_i32 : i32, i32
  }
  func.func @transform_3(%arg0: i32) -> (i32, i32) {
    %c0_i32 = arith.constant 0 : i32
    %c0_i32_0 = arith.constant 0 : i32
    return %arg0, %c0_i32 : i32, i32
  }
  func.func @transform_4(%arg0: i32) -> (i32, i32) {
    %c0_i32 = arith.constant 0 : i32
    %c0_i32_0 = arith.constant 0 : i32
    return %arg0, %c0_i32 : i32, i32
  }
}

module attributes {stable_mosaic.version = 11 : i64} {
  func.func @_conv_matmul_kernel(%arg0: i32, %arg1: memref<64x288xf32, #tpu.memory_space<vmem>>, %arg2: memref<288x256xf32, #tpu.memory_space<vmem>>, %arg3: memref<64x1xf32, #tpu.memory_space<vmem>>, %arg4: memref<64x256xf32, #tpu.memory_space<vmem>>) attributes {dimension_semantics = [#tpu.dimension_semantics<parallel>], iteration_bounds = array<i64: 1>, scalar_prefetch = 0 : i64, scratch_operands = 0 : i64, tpu.core_type = #tpu.core_type<tc>, window_params = [{pipeline_mode = #tpu.pipeline_mode<synchronous>, transform_indices = @transform_0, window_bounds = array<i64: 64, 288>}, {transform_indices = @transform_1, window_bounds = array<i64: 288, 256>}, {pipeline_mode = #tpu.pipeline_mode<synchronous>, transform_indices = @transform_2, window_bounds = array<i64: 64, 1>}, {transform_indices = @transform_3, window_bounds = array<i64: 64, 256>}]} {
    %c0 = arith.constant 0 : index
    %c0_0 = arith.constant 0 : index
    %0 = vector.load %arg1[%c0, %c0_0] : memref<64x288xf32, #tpu.memory_space<vmem>>, vector<64x288xf32>
    %c0_1 = arith.constant 0 : index
    %c0_2 = arith.constant 0 : index
    %1 = vector.load %arg2[%c0_1, %c0_2] : memref<288x256xf32, #tpu.memory_space<vmem>>, vector<288x256xf32>
    %cst = arith.constant dense<0.000000e+00> : vector<64x256xf32>
    %2 = tpu.matmul %0, %1, %cst {dimension_numbers = #tpu.dot_dimension_numbers<[1], [0], [0], [1], [0, 0, 1, 1], [], []>} : vector<64x288xf32>, vector<288x256xf32>, vector<64x256xf32> -> vector<64x256xf32>
    %c0_3 = arith.constant 0 : index
    %c0_4 = arith.constant 0 : index
    %3 = vector.load %arg3[%c0_3, %c0_4] : memref<64x1xf32, #tpu.memory_space<vmem>>, vector<64x1xf32>
    %4 = vector.broadcast %3 : vector<64x1xf32> to vector<64x256xf32>
    %5 = arith.addf %2, %4 : vector<64x256xf32>
    %cst_5 = arith.constant 0.000000e+00 : f32
    %6 = vector.broadcast %cst_5 : f32 to vector<64x256xf32>
    %7 = arith.maximumf %5, %6 : vector<64x256xf32>
    %c0_6 = arith.constant 0 : index
    %c0_7 = arith.constant 0 : index
    %8 = vector.load %arg4[%c0_6, %c0_7] : memref<64x256xf32, #tpu.memory_space<vmem>>, vector<64x256xf32>
    tpu.vector_store %arg4[%c0_6, %c0_7], %7 {strides = array<i32>} : memref<64x256xf32, #tpu.memory_space<vmem>>, vector<64x256xf32>,
    return
  }
  func.func @transform_0(%arg0: i32) -> (i32, i32) {
    %c0_i32 = arith.constant 0 : i32
    %c0_i32_0 = arith.constant 0 : i32
    %c0_i32_1 = arith.constant 0 : i32
    return %c0_i32, %c0_i32_0 : i32, i32
  }
  func.func @transform_1(%arg0: i32) -> (i32, i32) {
    %c0_i32 = arith.constant 0 : i32
    %c0_i32_0 = arith.constant 0 : i32
    return %c0_i32, %arg0 : i32, i32
  }
  func.func @transform_2(%arg0: i32) -> (i32, i32) {
    %c0_i32 = arith.constant 0 : i32
    %c0_i32_0 = arith.constant 0 : i32
    %c0_i32_1 = arith.constant 0 : i32
    return %c0_i32, %c0_i32_0 : i32, i32
  }
  func.func @transform_3(%arg0: i32) -> (i32, i32) {
    %c0_i32 = arith.constant 0 : i32
    %c0_i32_0 = arith.constant 0 : i32
    return %c0_i32, %arg0 : i32, i32
  }
}

module attributes {stable_mosaic.version = 11 : i64} {
  func.func @_conv_matmul_kernel(%arg0: i32, %arg1: memref<64x576xf32, #tpu.memory_space<vmem>>, %arg2: memref<576x256xf32, #tpu.memory_space<vmem>>, %arg3: memref<64x1xf32, #tpu.memory_space<vmem>>, %arg4: memref<64x256xf32, #tpu.memory_space<vmem>>) attributes {dimension_semantics = [#tpu.dimension_semantics<parallel>], iteration_bounds = array<i64: 1>, scalar_prefetch = 0 : i64, scratch_operands = 0 : i64, tpu.core_type = #tpu.core_type<tc>, window_params = [{pipeline_mode = #tpu.pipeline_mode<synchronous>, transform_indices = @transform_0, window_bounds = array<i64: 64, 576>}, {transform_indices = @transform_1, window_bounds = array<i64: 576, 256>}, {pipeline_mode = #tpu.pipeline_mode<synchronous>, transform_indices = @transform_2, window_bounds = array<i64: 64, 1>}, {transform_indices = @transform_3, window_bounds = array<i64: 64, 256>}]} {
    %c0 = arith.constant 0 : index
    %c0_0 = arith.constant 0 : index
    %0 = vector.load %arg1[%c0, %c0_0] : memref<64x576xf32, #tpu.memory_space<vmem>>, vector<64x576xf32>
    %c0_1 = arith.constant 0 : index
    %c0_2 = arith.constant 0 : index
    %1 = vector.load %arg2[%c0_1, %c0_2] : memref<576x256xf32, #tpu.memory_space<vmem>>, vector<576x256xf32>
    %cst = arith.constant dense<0.000000e+00> : vector<64x256xf32>
    %2 = tpu.matmul %0, %1, %cst {dimension_numbers = #tpu.dot_dimension_numbers<[1], [0], [0], [1], [0, 0, 1, 1], [], []>} : vector<64x576xf32>, vector<576x256xf32>, vector<64x256xf32> -> vector<64x256xf32>
    %c0_3 = arith.constant 0 : index
    %c0_4 = arith.constant 0 : index
    %3 = vector.load %arg3[%c0_3, %c0_4] : memref<64x1xf32, #tpu.memory_space<vmem>>, vector<64x1xf32>
    %4 = vector.broadcast %3 : vector<64x1xf32> to vector<64x256xf32>
    %5 = arith.addf %2, %4 : vector<64x256xf32>
    %c0_5 = arith.constant 0 : index
    %c0_6 = arith.constant 0 : index
    %6 = vector.load %arg4[%c0_5, %c0_6] : memref<64x256xf32, #tpu.memory_space<vmem>>, vector<64x256xf32>
    tpu.vector_store %arg4[%c0_5, %c0_6], %5 {strides = array<i32>} : memref<64x256xf32, #tpu.memory_space<vmem>>, vector<64x256xf32>,
    return
  }
  func.func @transform_0(%arg0: i32) -> (i32, i32) {
    %c0_i32 = arith.constant 0 : i32
    %c0_i32_0 = arith.constant 0 : i32
    %c0_i32_1 = arith.constant 0 : i32
    return %c0_i32, %c0_i32_0 : i32, i32
  }
  func.func @transform_1(%arg0: i32) -> (i32, i32) {
    %c0_i32 = arith.constant 0 : i32
    %c0_i32_0 = arith.constant 0 : i32
    return %c0_i32, %arg0 : i32, i32
  }
  func.func @transform_2(%arg0: i32) -> (i32, i32) {
    %c0_i32 = arith.constant 0 : i32
    %c0_i32_0 = arith.constant 0 : i32
    %c0_i32_1 = arith.constant 0 : i32
    return %c0_i32, %c0_i32_0 : i32, i32
  }
  func.func @transform_3(%arg0: i32) -> (i32, i32) {
    %c0_i32 = arith.constant 0 : i32
    %c0_i32_0 = arith.constant 0 : i32
    return %c0_i32, %arg0 : i32, i32
  }
}

</mosaic_0001>

<llo_original>
// kernel: encoder_forward.8
$region0: #{encoder_forward.8}
  #allocation0 [shape = 'u32[]', space=smem, size = 0x4, offset = 0x4, fixed_abs, tag = 'smem constant byte address 0x4 - core index']
  #allocation1 [shape = 'u32[72,128]{1,0:T(1,128)}', space=vmem, size = 0x9000, scoped, tag = 'internal scratch']
  %s0 = inlined_call_operand.vmem [shape: f32[16,27], index: 0, kind: input, shape index: {}]
  %s1 = inlined_call_operand.vmem [shape: f32[27,8192], index: 1, kind: input, shape index: {}]
  %s2 = inlined_call_operand.vmem [shape: f32[16,1], index: 2, kind: input, shape index: {}]
  %s3 = inlined_call_operand.vmem [shape: f32[16,8192], index: 3, kind: output, shape index: {}]
  %s4 = sld [smem:[#allocation0]]
  $region87: #{encoder_forward.8} parent=0
    _
  %s6 = ssub.s32 1, %s4
  %s7 = scalar_select 0, %s6, %s4
  $region1: #{encoder_forward.8} parent=0
    #allocation2 [shape = 'u8[131072]{0}', space=vmem, size = 0x20000, scoped, tag = 'input window, operand 1']
    #allocation3 [shape = 'u8[65536]{0}', space=vmem, size = 0x10000, scoped, tag = 'output window, operand 0']
    loop: start=0, step=1, limit=18
    $region2: #{encoder_forward.8} parent=1 // loop_pre_header
      _
    $region3: #{encoder_forward.8} parent=1 // loop_header
      %s9 = sphi 0, %s13
      %p10 = scmp.ge.s32.totalorder %s9, 18
      %s17 = sphi 0, %s17
      %s19 = sphi 0, %s17
      %s20 = sphi 0, %s19
      %s34 = sphi 0, %s20
      %s40 = sphi 0, %s42
      %s43 = sphi 0, %s40
      %s44 = sphi 0, %s43
      %s60 = sphi 0, %s44
      %s64 = sphi 0, %s64
      %s66 = sphi 0, %s64
      %s67 = sphi 0, %s66
      %s81 = sphi 0, %s67
      %s87 = sphi 0, %s89
      %s90 = sphi 0, %s87
      %s91 = sphi 0, %s90
      %s107 = sphi 0, %s91
    $region4: #{encoder_forward.8} parent=1 // loop_header_branch
      %12 = sbr.rel (%p10) target = $region8
    $region5: #{encoder_forward.8} parent=1 // loop_body
      %s14 = ssub.s32 %s9, 1
      %s15 = ssub.s32 %s9, 2
      %s16 = sadd.s32 %s9, 1
      %s18 = sadd.s32 %s17, 1
      %p21 = scmp.eq.s32.totalorder %s9, 15
      %p22 = scmp.ne.s32.totalorder %s17, %s19
      %p23 = scmp.eq.s32.totalorder %s9, 0
      %p24 = por %p22, %p23
      %p25 = scmp.ne.s32.totalorder %s17, %s19
      %p26 = scmp.eq.s32.totalorder %s14, 15
      %p27 = por %p25, %p26
      %p28 = scmp.ne.s32.totalorder %s19, %s20
      %p29 = scmp.eq.s32.totalorder %s14, 0
      %p30 = por %p28, %p29
      %p31 = scmp.ne.s32.totalorder %s19, %s20
      %p32 = scmp.eq.s32.totalorder %s15, 15
      %p33 = por %p31, %p32
      %p35 = scmp.ne.s32.totalorder %s20, %s34
      %p36 = scmp.eq.s32.totalorder %s15, 0
      %p37 = por %p35, %p36
      %s38 = ssub.s32 %s9, %s16
      %p39 = scmp.eq.s32.totalorder %s38, 0
      %s41 = sadd.s32 %s40, 1
      %s42 = scalar_select %p39, %s40, %s41
      %p45 = pneg %p39
      %p46 = scmp.eq.s32.totalorder %s9, 15
      %p47 = por %p45, %p46
      %p48 = scmp.ne.s32.totalorder %s40, %s43
      %p49 = scmp.eq.s32.totalorder %s9, 0
      %p50 = por %p48, %p49
      %p51 = scmp.ne.s32.totalorder %s40, %s43
      %p52 = scmp.eq.s32.totalorder %s14, 15
      %p53 = por %p51, %p52
      %p54 = scmp.ne.s32.totalorder %s43, %s44
      %p55 = scmp.eq.s32.totalorder %s14, 0
      %p56 = por %p54, %p55
      %p57 = scmp.ne.s32.totalorder %s43, %s44
      %p58 = scmp.eq.s32.totalorder %s15, 15
      %p59 = por %p57, %p58
      %p61 = scmp.ne.s32.totalorder %s44, %s60
      %p62 = scmp.eq.s32.totalorder %s15, 0
      %p63 = por %p61, %p62
      %s65 = sadd.s32 %s64, 1
      %p68 = scmp.eq.s32.totalorder %s9, 15
      %p69 = scmp.ne.s32.totalorder %s64, %s66
      %p70 = scmp.eq.s32.totalorder %s9, 0
      %p71 = por %p69, %p70
      %p72 = scmp.ne.s32.totalorder %s64, %s66
      %p73 = scmp.eq.s32.totalorder %s14, 15
      %p74 = por %p72, %p73
      %p75 = scmp.ne.s32.totalorder %s66, %s67
      %p76 = scmp.eq.s32.totalorder %s14, 0
      %p77 = por %p75, %p76
      %p78 = scmp.ne.s32.totalorder %s66, %s67
      %p79 = scmp.eq.s32.totalorder %s15, 15
      %p80 = por %p78, %p79
      %p82 = scmp.ne.s32.totalorder %s67, %s81
      %p83 = scmp.eq.s32.totalorder %s15, 0
      %p84 = por %p82, %p83
      %s85 = ssub.s32 %s9, %s16
      %p86 = scmp.eq.s32.totalorder %s85, 0
      %s88 = sadd.s32 %s87, 1
      %s89 = scalar_select %p86, %s87, %s88
      %p92 = pneg %p86
      %p93 = scmp.eq.s32.totalorder %s9, 15
      %p94 = por %p92, %p93
      %p95 = scmp.ne.s32.totalorder %s87, %s90
      %p96 = scmp.eq.s32.totalorder %s9, 0
      %p97 = por %p95, %p96
      %p98 = scmp.ne.s32.totalorder %s87, %s90
      %p99 = scmp.eq.s32.totalorder %s14, 15
      %p100 = por %p98, %p99
      %p101 = scmp.ne.s32.totalorder %s90, %s91
      %p102 = scmp.eq.s32.totalorder %s14, 0
      %p103 = por %p101, %p102
      %p104 = scmp.ne.s32.totalorder %s90, %s91
      %p105 = scmp.eq.s32.totalorder %s15, 15
      %p106 = por %p104, %p105
      %p108 = scmp.ne.s32.totalorder %s91, %s107
      %p109 = scmp.eq.s32.totalorder %s15, 0
      %p110 = por %p108, %p109
      %p111 = scmp.le.s32.totalorder 1, %s9
      %p112 = scmp.lt.s32.totalorder %s9, 17
      %p113 = pnand %p111, %p112
      %p114 = pneg %p113
      // Predicated region
      $region9: #{encoder_forward.8} parent=5 // pred_check
        _
      $region10: #{encoder_forward.8} parent=5 // pred_check_branch
        %116 = sbr.rel (%p113) target = $region12
      $region11: #{encoder_forward.8} parent=5 // pred_region
        %s117 = ssub.s32 %s9, 1
        // Predicated region
        $region13: #{encoder_forward.8} parent=11 // pred_check
          %p118 = pneg %p30
        $region14: #{encoder_forward.8} parent=11 // pred_check_branch
          %120 = sbr.rel (%p118) target = $region16
        $region15: #{encoder_forward.8} parent=11 // pred_region
          _
        $region16: #{encoder_forward.8} parent=11 // pred_fallthru
          _
        // Predicated region
        $region17: #{encoder_forward.8} parent=11 // pred_check
          %p121 = pneg %p77
        $region18: #{encoder_forward.8} parent=11 // pred_check_branch
          %123 = sbr.rel (%p121) target = $region20
        $region19: #{encoder_forward.8} parent=11 // pred_region
          _
        $region20: #{encoder_forward.8} parent=11 // pred_fallthru
          _
      $region12: #{encoder_forward.8} parent=5 // pred_fallthru
        _
      %p124 = scmp.lt.s32.totalorder %s9, 16
      // Predicated region
      $region21: #{encoder_forward.8} parent=5 // pred_check
        %p125 = pneg %p124
      $region22: #{encoder_forward.8} parent=5 // pred_check_branch
        %127 = sbr.rel (%p125) target = $region24
      $region23: #{encoder_forward.8} parent=5 // pred_region
        // Predicated region
        $region25: #{encoder_forward.8} parent=23 // pred_check
          %p128 = pneg %p50
        $region26: #{encoder_forward.8} parent=23 // pred_check_branch
          %130 = sbr.rel (%p128) target = $region28
        $region27: #{encoder_forward.8} parent=23 // pred_region
          %s131 = sand.u32 %s40, 1
          %s132 = sand.u32 %s40, 1
          %s133 = smul.addr %s132, 128
          %s134 = scalar_lea.vmem [#allocation2], %s133
          %s135 = smul.u32 4, %s9
          %s136 = smul.addr %s135, 8
          %s137 = scalar_lea.vmem %s1, %s136
          // Predicated region
          $region29: #{encoder_forward.8} parent=27 // pred_check
            _
          $region30: #{encoder_forward.8} parent=27 // pred_check_branch
            %139 = sbr.rel (0) target = $region32
          $region31: #{encoder_forward.8} parent=27 // pred_region
            // Predicated region
            $region33: #{encoder_forward.8} parent=31 // pred_check
              _
            $region34: #{encoder_forward.8} parent=31 // pred_check_branch
              %141 = sbr.rel (0) target = $region36
            $region35: #{encoder_forward.8} parent=31 // pred_region
              loop: start=0, step=1, limit=1
              $region37: #{encoder_forward.8} parent=35 // loop_pre_header
                _
              $region38: #{encoder_forward.8} parent=35 // loop_header
                %s143 = sphi 0, %s147
                %p144 = scmp.ge.s32.totalorder %s143, 1
                %s148 = sphi %s137, %s137
                %s149 = sphi %s134, %s134
              $region39: #{encoder_forward.8} parent=35 // loop_header_branch
                %146 = sbr.rel (%p144) target = $region43
              $region40: #{encoder_forward.8} parent=35 // loop_body
                %v150 = vld [vmem:[%s148] sm:$0xff]
                %151 = vst [vmem:[%s149] sm:$0xff] %v150
                %v152 = vld [vmem:[%s148 + $0x8] sm:$0xff]
                %153 = vst [vmem:[%s149 + $0x8] sm:$0xff] %v152
                %v154 = vld [vmem:[%s148 + $0x10] sm:$0xff]
                %155 = vst [vmem:[%s149 + $0x10] sm:$0xff] %v154
                %v156 = vld [vmem:[%s148 + $0x18] sm:$0xff]
                %157 = vst [vmem:[%s149 + $0x18] sm:$0xff] %v156
                %v158 = vld [vmem:[%s148 + $0x200] sm:$0xff]
                %159 = vst [vmem:[%s149 + $0x20] sm:$0xff] %v158
                %v160 = vld [vmem:[%s148 + $0x208] sm:$0xff]
                %161 = vst [vmem:[%s149 + $0x28] sm:$0xff] %v160
                %v162 = vld [vmem:[%s148 + $0x210] sm:$0xff]
                %163 = vst [vmem:[%s149 + $0x30] sm:$0xff] %v162
                %v164 = vld [vmem:[%s148 + $0x218] sm:$0xff]
                %165 = vst [vmem:[%s149 + $0x38] sm:$0xff] %v164
                %v166 = vld [vmem:[%s148 + $0x400] sm:$0xff]
                %167 = vst [vmem:[%s149 + $0x40] sm:$0xff] %v166
                %v168 = vld [vmem:[%s148 + $0x408] sm:$0xff]
                %169 = vst [vmem:[%s149 + $0x48] sm:$0xff] %v168
                %v170 = vld [vmem:[%s148 + $0x410] sm:$0xff]
                %171 = vst [vmem:[%s149 + $0x50] sm:$0xff] %v170
                %v172 = vld [vmem:[%s148 + $0x418] sm:$0xff]
                %173 = vst [vmem:[%s149 + $0x58] sm:$0xff] %v172
                %v174 = vld [vmem:[%s148 + $0x600] sm:$0xff]
                %175 = vst [vmem:[%s149 + $0x60] sm:$0xff] %v174
                %v176 = vld [vmem:[%s148 + $0x608] sm:$0xff]
                %177 = vst [vmem:[%s149 + $0x68] sm:$0xff] %v176
                %v178 = vld [vmem:[%s148 + $0x610] sm:$0xff]
                %179 = vst [vmem:[%s149 + $0x70] sm:$0xff] %v178
                %v180 = vld [vmem:[%s148 + $0x618] sm:$0xff]
                %181 = vst [vmem:[%s149 + $0x78] sm:$0xff] %v180
              $region41: #{encoder_forward.8} parent=35 // loop_footer
                %s147 = sadd.s32 1, %s143
              $region42: #{encoder_forward.8} parent=35 // loop_footer_branch
                %142 = sbr.rel target = $region38
              $region43: #{encoder_forward.8} parent=35 // loop_exit
                _
            $region36: #{encoder_forward.8} parent=31 // pred_fallthru
              _
            // Predicated region
            $region44: #{encoder_forward.8} parent=31 // pred_check
              _
            $region45: #{encoder_forward.8} parent=31 // pred_check_branch
              %183 = sbr.rel target = $region47
            $region46: #{encoder_forward.8} parent=31 // pred_region
              _
            $region47: #{encoder_forward.8} parent=31 // pred_fallthru
              _
          $region32: #{encoder_forward.8} parent=27 // pred_fallthru
            _
          %184 = vnop
        $region28: #{encoder_forward.8} parent=23 // pred_fallthru
          _
      $region24: #{encoder_forward.8} parent=5 // pred_fallthru
        _
      %p185 = scmp.le.s32.totalorder 1, %s9
      %p186 = scmp.lt.s32.totalorder %s9, 17
      %p187 = pnand %p185, %p186
      %p188 = pneg %p187
      // Predicated region
      $region48: #{encoder_forward.8} parent=5 // pred_check
        _
      $region49: #{encoder_forward.8} parent=5 // pred_check_branch
        %190 = sbr.rel (%p187) target = $region51
      $region50: #{encoder_forward.8} parent=5 // pred_region
        %s191 = ssub.s32 %s9, 1
        %s192 = sand.u32 %s43, 1
        %s193 = sand.u32 %s43, 1
        %s194 = smul.addr %s193, 128
        %s195 = scalar_lea.vmem [#allocation2], %s194
        // Predicated region
        $region52: #{encoder_forward.8} parent=50 // pred_check
          %p196 = pneg %p56
        $region53: #{encoder_forward.8} parent=50 // pred_check_branch
          %198 = sbr.rel (%p196) target = $region55
        $region54: #{encoder_forward.8} parent=50 // pred_region
          _
        $region55: #{encoder_forward.8} parent=50 // pred_fallthru
          _
        %p199 = pneg %p30
        %p200 = pneg %p27
        %s201 = sand.u32 %s43, 1
        %s202 = sand.u32 %s43, 1
        %s203 = smul.addr %s202, 128
        %s204 = scalar_lea.vmem [#allocation2], %s203
        %p205 = pneg %p56
        %p206 = pneg %p53
        %p207 = pneg %p77
        %p208 = pneg %p74
        %p209 = pneg %p103
        %p210 = pneg %p100
        %s211 = sand.u32 %s90, 1
        %s212 = sand.u32 %s90, 1
        %s213 = smul.addr %s212, 64
        %s214 = scalar_lea.vmem [#allocation3], %s213
        %s215 = smul.u32 4, %s14
        %s216 = smul.u32 4, %s14
        %v217 = vld [vmem:[%s0] sm:$0xff]
        %v218 = vld [vmem:[%s0 + $0x8] sm:$0xff]
        %v219 = vld [vmem:[%s195] sm:$0xff]
        %v220 = vld [vmem:[%s195 + $0x8] sm:$0xff]
        %v221 = vld [vmem:[%s195 + $0x10] sm:$0xff]
        %v222 = vld [vmem:[%s195 + $0x18] sm:$0xff]
        %v223 = vld [vmem:[%s195 + $0x20] sm:$0xff]
        %v224 = vld [vmem:[%s195 + $0x28] sm:$0xff]
        %v225 = vld [vmem:[%s195 + $0x30] sm:$0xff]
        %v226 = vld [vmem:[%s195 + $0x38] sm:$0xff]
        %v227 = vld [vmem:[%s195 + $0x40] sm:$0xff]
        %v228 = vld [vmem:[%s195 + $0x48] sm:$0xff]
        %v229 = vld [vmem:[%s195 + $0x50] sm:$0xff]
        %v230 = vld [vmem:[%s195 + $0x58] sm:$0xff]
        %v231 = vld [vmem:[%s195 + $0x60] sm:$0x7]
        %v232 = vld [vmem:[%s195 + $0x68] sm:$0x7]
        %v233 = vld [vmem:[%s195 + $0x70] sm:$0x7]
        %v234 = vld [vmem:[%s195 + $0x78] sm:$0x7]
        %v235 = vld [vmem:[%s2] sm:$0xff]
        %v236 = vld [vmem:[%s2 + $0x8] sm:$0xff]
        %238 = vset.pattern.permute.xlu0 0
        %239 = vperm.xlu0 %238, %v235
        %v240 = vpop.permute.xlu0 %239
        %243 = vset.pattern.permute.xlu0 0
        %244 = vperm.xlu0 %243, %v236
        %v245 = vpop.permute.xlu0 %244
        %vm247 = vcmask 220160
        %v249 = vsel %vm247, %v217, 0
        %v252 = vsel %vm247, %v218, 0
        %vm254 = vcmask 1042432
        %v256 = vsel %vm254, %v231, 0
        %v259 = vsel %vm254, %v232, 0
        %v262 = vsel %vm254, %v233, 0
        %v265 = vsel %vm254, %v234, 0
        %267 = vmatpush.msra.mxu0 0.0
        %268 = vmatpush.msra.mxu0 0.0
        %269 = vmatpush.msra.mxu0 0.0
        %270 = vmatpush.msra.mxu0 0.0
        %271 = vmatpush.msra.mxu0 0.0
        %272 = vmatpush.msra.mxu0 0.0
        %273 = vmatpush.msra.mxu0 0.0
        %274 = vmatpush.msra.mxu0 0.0
        %275 = vmatpush.msra.mxu0 0.0
        %276 = vmatpush.msra.mxu0 0.0
        %277 = vmatpush.msra.mxu0 0.0
        %278 = vmatpush.msra.mxu0 0.0
        %279 = vmatpush.msra.mxu0 %v256
        %280 = vmatpush.msra.mxu0 %v227
        %281 = vmatpush.msra.mxu0 %v223
        %282 = vmatpush.msra.mxu0 %v219
        %283 = vmatmul.f32.gmra.mxu0 %v249
        %v284 = vpop.f32.mrf.mxu0
        %v285 = vadd.f32 %v240, %v284
        %286 = vmatmul.f32.gmra.mxu0 %v252
        %v287 = vpop.f32.mrf.mxu0
        %v288 = vadd.f32 %v245, %v287
        %289 = vdwg.mxu0
        %290 = vmatpush.msra.mxu0 0.0
        %291 = vmatpush.msra.mxu0 0.0
        %292 = vmatpush.msra.mxu0 0.0
        %293 = vmatpush.msra.mxu0 0.0
        %294 = vmatpush.msra.mxu0 0.0
        %295 = vmatpush.msra.mxu0 0.0
        %296 = vmatpush.msra.mxu0 0.0
        %297 = vmatpush.msra.mxu0 0.0
        %298 = vmatpush.msra.mxu0 0.0
        %299 = vmatpush.msra.mxu0 0.0
        %300 = vmatpush.msra.mxu0 0.0
        %301 = vmatpush.msra.mxu0 0.0
        %302 = vmatpush.msra.mxu0 %v259
        %303 = vmatpush.msra.mxu0 %v228
        %304 = vmatpush.msra.mxu0 %v224
        %305 = vmatpush.msra.mxu0 %v220
        %306 = vmatmul.f32.gmra.mxu0 %v249
        %v307 = vpop.f32.mrf.mxu0
        %v308 = vadd.f32 %v240, %v307
        %309 = vmatmul.f32.gmra.mxu0 %v252
        %v310 = vpop.f32.mrf.mxu0
        %v311 = vadd.f32 %v245, %v310
        %312 = vdwg.mxu0
        %313 = vmatpush.msra.mxu0 0.0
        %314 = vmatpush.msra.mxu0 0.0
        %315 = vmatpush.msra.mxu0 0.0
        %316 = vmatpush.msra.mxu0 0.0
        %317 = vmatpush.msra.mxu0 0.0
        %318 = vmatpush.msra.mxu0 0.0
        %319 = vmatpush.msra.mxu0 0.0
        %320 = vmatpush.msra.mxu0 0.0
        %321 = vmatpush.msra.mxu0 0.0
        %322 = vmatpush.msra.mxu0 0.0
        %323 = vmatpush.msra.mxu0 0.0
        %324 = vmatpush.msra.mxu0 0.0
        %325 = vmatpush.msra.mxu0 %v262
        %326 = vmatpush.msra.mxu0 %v229
        %327 = vmatpush.msra.mxu0 %v225
        %328 = vmatpush.msra.mxu0 %v221
        %329 = vmatmul.f32.gmra.mxu0 %v249
        %v330 = vpop.f32.mrf.mxu0
        %v331 = vadd.f32 %v240, %v330
        %332 = vmatmul.f32.gmra.mxu0 %v252
        %v333 = vpop.f32.mrf.mxu0
        %v334 = vadd.f32 %v245, %v333
        %335 = vdwg.mxu0
        %336 = vmatpush.msra.mxu0 0.0
        %337 = vmatpush.msra.mxu0 0.0
        %338 = vmatpush.msra.mxu0 0.0
        %339 = vmatpush.msra.mxu0 0.0
        %340 = vmatpush.msra.mxu0 0.0
        %341 = vmatpush.msra.mxu0 0.0
        %342 = vmatpush.msra.mxu0 0.0
        %343 = vmatpush.msra.mxu0 0.0
        %344 = vmatpush.msra.mxu0 0.0
        %345 = vmatpush.msra.mxu0 0.0
        %346 = vmatpush.msra.mxu0 0.0
        %347 = vmatpush.msra.mxu0 0.0
        %348 = vmatpush.msra.mxu0 %v265
        %349 = vmatpush.msra.mxu0 %v230
        %350 = vmatpush.msra.mxu0 %v226
        %351 = vmatpush.msra.mxu0 %v222
        %352 = vmatmul.f32.gmra.mxu0 %v249
        %v353 = vpop.f32.mrf.mxu0
        %v354 = vadd.f32 %v240, %v353
        %355 = vmatmul.f32.gmra.mxu0 %v252
        %v356 = vpop.f32.mrf.mxu0
        %v357 = vadd.f32 %v245, %v356
        %358 = vdwg.mxu0
        %v359 = vmax.f32 %v285, 0.0
        %v360 = vmax.f32 %v308, 0.0
        %v361 = vmax.f32 %v331, 0.0
        %v362 = vmax.f32 %v354, 0.0
        %v363 = vmax.f32 %v288, 0.0
        %v364 = vmax.f32 %v311, 0.0
        %v365 = vmax.f32 %v334, 0.0
        %v366 = vmax.f32 %v357, 0.0
        %367 = vst [vmem:[%s214] sm:$0xff] %v359
        %368 = vst [vmem:[%s214 + $0x8] sm:$0xff] %v360
        %369 = vst [vmem:[%s214 + $0x10] sm:$0xff] %v361
        %370 = vst [vmem:[%s214 + $0x18] sm:$0xff] %v362
        %371 = vst [vmem:[%s214 + $0x20] sm:$0xff] %v363
        %372 = vst [vmem:[%s214 + $0x28] sm:$0xff] %v364
        %373 = vst [vmem:[%s214 + $0x30] sm:$0xff] %v365
        %374 = vst [vmem:[%s214 + $0x38] sm:$0xff] %v366
        %s375 = sand.u32 %s90, 1
        %s376 = sand.u32 %s90, 1
        %s377 = smul.addr %s376, 64
        %s378 = scalar_lea.vmem [#allocation3], %s377
        // Predicated region
        $region56: #{encoder_forward.8} parent=50 // pred_check
          %p379 = pneg %p100
        $region57: #{encoder_forward.8} parent=50 // pred_check_branch
          %381 = sbr.rel (%p379) target = $region59
        $region58: #{encoder_forward.8} parent=50 // pred_region
          %s382 = smul.u32 4, %s14
          %s383 = smul.addr %s382, 8
          %s384 = scalar_lea.vmem %s3, %s383
          // Predicated region
          $region60: #{encoder_forward.8} parent=58 // pred_check
            _
          $region61: #{encoder_forward.8} parent=58 // pred_check_branch
            %386 = sbr.rel (0) target = $region63
          $region62: #{encoder_forward.8} parent=58 // pred_region
            // Predicated region
            $region64: #{encoder_forward.8} parent=62 // pred_check
              _
            $region65: #{encoder_forward.8} parent=62 // pred_check_branch
              %388 = sbr.rel (0) target = $region67
            $region66: #{encoder_forward.8} parent=62 // pred_region
              loop: start=0, step=1, limit=1
              $region68: #{encoder_forward.8} parent=66 // loop_pre_header
                _
              $region69: #{encoder_forward.8} parent=66 // loop_header
                %s390 = sphi 0, %s394
                %p391 = scmp.ge.s32.totalorder %s390, 1
                %s395 = sphi %s378, %s378
                %s396 = sphi %s384, %s384
              $region70: #{encoder_forward.8} parent=66 // loop_header_branch
                %393 = sbr.rel (%p391) target = $region74
              $region71: #{encoder_forward.8} parent=66 // loop_body
                %v397 = vld [vmem:[%s395] sm:$0xff]
                %398 = vst [vmem:[%s396] sm:$0xff] %v397
                %v399 = vld [vmem:[%s395 + $0x8] sm:$0xff]
                %400 = vst [vmem:[%s396 + $0x8] sm:$0xff] %v399
                %v401 = vld [vmem:[%s395 + $0x10] sm:$0xff]
                %402 = vst [vmem:[%s396 + $0x10] sm:$0xff] %v401
                %v403 = vld [vmem:[%s395 + $0x18] sm:$0xff]
                %404 = vst [vmem:[%s396 + $0x18] sm:$0xff] %v403
                %v405 = vld [vmem:[%s395 + $0x20] sm:$0xff]
                %406 = vst [vmem:[%s396 + $0x200] sm:$0xff] %v405
                %v407 = vld [vmem:[%s395 + $0x28] sm:$0xff]
                %408 = vst [vmem:[%s396 + $0x208] sm:$0xff] %v407
                %v409 = vld [vmem:[%s395 + $0x30] sm:$0xff]
                %410 = vst [vmem:[%s396 + $0x210] sm:$0xff] %v409
                %v411 = vld [vmem:[%s395 + $0x38] sm:$0xff]
                %412 = vst [vmem:[%s396 + $0x218] sm:$0xff] %v411
              $region72: #{encoder_forward.8} parent=66 // loop_footer
                %s394 = sadd.s32 1, %s390
              $region73: #{encoder_forward.8} parent=66 // loop_footer_branch
                %389 = sbr.rel target = $region69
              $region74: #{encoder_forward.8} parent=66 // loop_exit
                _
            $region67: #{encoder_forward.8} parent=62 // pred_fallthru
              _
            // Predicated region
            $region75: #{encoder_forward.8} parent=62 // pred_check
              _
            $region76: #{encoder_forward.8} parent=62 // pred_check_branch
              %414 = sbr.rel target = $region78
            $region77: #{encoder_forward.8} parent=62 // pred_region
              _
            $region78: #{encoder_forward.8} parent=62 // pred_fallthru
              _
          $region63: #{encoder_forward.8} parent=58 // pred_fallthru
            _
          %415 = vnop
        $region59: #{encoder_forward.8} parent=50 // pred_fallthru
          _
      $region51: #{encoder_forward.8} parent=5 // pred_fallthru
        _
      %p416 = scmp.le.s32.totalorder 2, %s9
      // Predicated region
      $region79: #{encoder_forward.8} parent=5 // pred_check
        %p417 = pneg %p416
      $region80: #{encoder_forward.8} parent=5 // pred_check_branch
        %419 = sbr.rel (%p417) target = $region82
      $region81: #{encoder_forward.8} parent=5 // pred_region
        %s420 = ssub.s32 %s9, 2
        // Predicated region
        $region83: #{encoder_forward.8} parent=81 // pred_check
          %p421 = pneg %p106
        $region84: #{encoder_forward.8} parent=81 // pred_check_branch
          %423 = sbr.rel (%p421) target = $region86
        $region85: #{encoder_forward.8} parent=81 // pred_region
          %s424 = sand.u32 %s91, 1
          %s425 = sand.u32 %s91, 1
          %s426 = smul.addr %s425, 64
          %s427 = scalar_lea.vmem [#allocation3], %s426
        $region86: #{encoder_forward.8} parent=81 // pred_fallthru
          _
      $region82: #{encoder_forward.8} parent=5 // pred_fallthru
        _
    $region6: #{encoder_forward.8} parent=1 // loop_footer
      %s13 = sadd.s32 1, %s9
    $region7: #{encoder_forward.8} parent=1 // loop_footer_branch
      %8 = sbr.rel target = $region3
    $region8: #{encoder_forward.8} parent=1 // loop_exit
      _

// kernel: encoder_forward.9
$region0: #{encoder_forward.9}
  #allocation0 [shape = 'u32[]', space=smem, size = 0x4, offset = 0x4, fixed_abs, tag = 'smem constant byte address 0x4 - core index']
  #allocation1 [shape = 'u32[72,128]{1,0:T(1,128)}', space=vmem, size = 0x9000, scoped, tag = 'internal scratch']
  %s0 = inlined_call_operand.vmem [shape: f32[16,144], index: 0, kind: input, shape index: {}]
  %s1 = inlined_call_operand.vmem [shape: f32[144,7680], index: 1, kind: input, shape index: {}]
  %s2 = inlined_call_operand.vmem [shape: f32[16,1], index: 2, kind: input, shape index: {}]
  %s3 = inlined_call_operand.vmem [shape: f32[16,7680], index: 3, kind: output, shape index: {}]
  %s4 = sld [smem:[#allocation0]]
  $region87: #{encoder_forward.9} parent=0
    _
  %s6 = ssub.s32 1, %s4
  %s7 = scalar_select 0, %s6, %s4
  $region1: #{encoder_forward.9} parent=0
    #allocation2 [shape = 'u8[589824]{0}', space=vmem, size = 0x90000, scoped, tag = 'input window, operand 1']
    #allocation3 [shape = 'u8[65536]{0}', space=vmem, size = 0x10000, scoped, tag = 'output window, operand 0']
    loop: start=0, step=1, limit=17
    $region2: #{encoder_forward.9} parent=1 // loop_pre_header
      _
    $region3: #{encoder_forward.9} parent=1 // loop_header
      %s9 = sphi 0, %s13
      %p10 = scmp.ge.s32.totalorder %s9, 17
      %s17 = sphi 0, %s17
      %s19 = sphi 0, %s17
      %s20 = sphi 0, %s19
      %s34 = sphi 0, %s20
      %s40 = sphi 0, %s42
      %s43 = sphi 0, %s40
      %s44 = sphi 0, %s43
      %s60 = sphi 0, %s44
      %s64 = sphi 0, %s64
      %s66 = sphi 0, %s64
      %s67 = sphi 0, %s66
      %s81 = sphi 0, %s67
      %s87 = sphi 0, %s89
      %s90 = sphi 0, %s87
      %s91 = sphi 0, %s90
      %s107 = sphi 0, %s91
    $region4: #{encoder_forward.9} parent=1 // loop_header_branch
      %12 = sbr.rel (%p10) target = $region8
    $region5: #{encoder_forward.9} parent=1 // loop_body
      %s14 = ssub.s32 %s9, 1
      %s15 = ssub.s32 %s9, 2
      %s16 = sadd.s32 %s9, 1
      %s18 = sadd.s32 %s17, 1
      %p21 = scmp.eq.s32.totalorder %s9, 14
      %p22 = scmp.ne.s32.totalorder %s17, %s19
      %p23 = scmp.eq.s32.totalorder %s9, 0
      %p24 = por %p22, %p23
      %p25 = scmp.ne.s32.totalorder %s17, %s19
      %p26 = scmp.eq.s32.totalorder %s14, 14
      %p27 = por %p25, %p26
      %p28 = scmp.ne.s32.totalorder %s19, %s20
      %p29 = scmp.eq.s32.totalorder %s14, 0
      %p30 = por %p28, %p29
      %p31 = scmp.ne.s32.totalorder %s19, %s20
      %p32 = scmp.eq.s32.totalorder %s15, 14
      %p33 = por %p31, %p32
      %p35 = scmp.ne.s32.totalorder %s20, %s34
      %p36 = scmp.eq.s32.totalorder %s15, 0
      %p37 = por %p35, %p36
      %s38 = ssub.s32 %s9, %s16
      %p39 = scmp.eq.s32.totalorder %s38, 0
      %s41 = sadd.s32 %s40, 1
      %s42 = scalar_select %p39, %s40, %s41
      %p45 = pneg %p39
      %p46 = scmp.eq.s32.totalorder %s9, 14
      %p47 = por %p45, %p46
      %p48 = scmp.ne.s32.totalorder %s40, %s43
      %p49 = scmp.eq.s32.totalorder %s9, 0
      %p50 = por %p48, %p49
      %p51 = scmp.ne.s32.totalorder %s40, %s43
      %p52 = scmp.eq.s32.totalorder %s14, 14
      %p53 = por %p51, %p52
      %p54 = scmp.ne.s32.totalorder %s43, %s44
      %p55 = scmp.eq.s32.totalorder %s14, 0
      %p56 = por %p54, %p55
      %p57 = scmp.ne.s32.totalorder %s43, %s44
      %p58 = scmp.eq.s32.totalorder %s15, 14
      %p59 = por %p57, %p58
      %p61 = scmp.ne.s32.totalorder %s44, %s60
      %p62 = scmp.eq.s32.totalorder %s15, 0
      %p63 = por %p61, %p62
      %s65 = sadd.s32 %s64, 1
      %p68 = scmp.eq.s32.totalorder %s9, 14
      %p69 = scmp.ne.s32.totalorder %s64, %s66
      %p70 = scmp.eq.s32.totalorder %s9, 0
      %p71 = por %p69, %p70
      %p72 = scmp.ne.s32.totalorder %s64, %s66
      %p73 = scmp.eq.s32.totalorder %s14, 14
      %p74 = por %p72, %p73
      %p75 = scmp.ne.s32.totalorder %s66, %s67
      %p76 = scmp.eq.s32.totalorder %s14, 0
      %p77 = por %p75, %p76
      %p78 = scmp.ne.s32.totalorder %s66, %s67
      %p79 = scmp.eq.s32.totalorder %s15, 14
      %p80 = por %p78, %p79
      %p82 = scmp.ne.s32.totalorder %s67, %s81
      %p83 = scmp.eq.s32.totalorder %s15, 0
      %p84 = por %p82, %p83
      %s85 = ssub.s32 %s9, %s16
      %p86 = scmp.eq.s32.totalorder %s85, 0
      %s88 = sadd.s32 %s87, 1
      %s89 = scalar_select %p86, %s87, %s88
      %p92 = pneg %p86
      %p93 = scmp.eq.s32.totalorder %s9, 14
      %p94 = por %p92, %p93
      %p95 = scmp.ne.s32.totalorder %s87, %s90
      %p96 = scmp.eq.s32.totalorder %s9, 0
      %p97 = por %p95, %p96
      %p98 = scmp.ne.s32.totalorder %s87, %s90
      %p99 = scmp.eq.s32.totalorder %s14, 14
      %p100 = por %p98, %p99
      %p101 = scmp.ne.s32.totalorder %s90, %s91
      %p102 = scmp.eq.s32.totalorder %s14, 0
      %p103 = por %p101, %p102
      %p104 = scmp.ne.s32.totalorder %s90, %s91
      %p105 = scmp.eq.s32.totalorder %s15, 14
      %p106 = por %p104, %p105
      %p108 = scmp.ne.s32.totalorder %s91, %s107
      %p109 = scmp.eq.s32.totalorder %s15, 0
      %p110 = por %p108, %p109
      %p111 = scmp.le.s32.totalorder 1, %s9
      %p112 = scmp.lt.s32.totalorder %s9, 16
      %p113 = pnand %p111, %p112
      %p114 = pneg %p113
      // Predicated region
      $region9: #{encoder_forward.9} parent=5 // pred_check
        _
      $region10: #{encoder_forward.9} parent=5 // pred_check_branch
        %116 = sbr.rel (%p113) target = $region12
      $region11: #{encoder_forward.9} parent=5 // pred_region
        %s117 = ssub.s32 %s9, 1
        // Predicated region
        $region13: #{encoder_forward.9} parent=11 // pred_check
          %p118 = pneg %p30
        $region14: #{encoder_forward.9} parent=11 // pred_check_branch
          %120 = sbr.rel (%p118) target = $region16
        $region15: #{encoder_forward.9} parent=11 // pred_region
          _
        $region16: #{encoder_forward.9} parent=11 // pred_fallthru
          _
        // Predicated region
        $region17: #{encoder_forward.9} parent=11 // pred_check
          %p121 = pneg %p77
        $region18: #{encoder_forward.9} parent=11 // pred_check_branch
          %123 = sbr.rel (%p121) target = $region20
        $region19: #{encoder_forward.9} parent=11 // pred_region
          _
        $region20: #{encoder_forward.9} parent=11 // pred_fallthru
          _
      $region12: #{encoder_forward.9} parent=5 // pred_fallthru
        _
      %p124 = scmp.lt.s32.totalorder %s9, 15
      // Predicated region
      $region21: #{encoder_forward.9} parent=5 // pred_check
        %p125 = pneg %p124
      $region22: #{encoder_forward.9} parent=5 // pred_check_branch
        %127 = sbr.rel (%p125) target = $region24
      $region23: #{encoder_forward.9} parent=5 // pred_region
        // Predicated region
        $region25: #{encoder_forward.9} parent=23 // pred_check
          %p128 = pneg %p50
        $region26: #{encoder_forward.9} parent=23 // pred_check_branch
          %130 = sbr.rel (%p128) target = $region28
        $region27: #{encoder_forward.9} parent=23 // pred_region
          %s131 = sand.u32 %s40, 1
          %s132 = sand.u32 %s40, 1
          %s133 = smul.addr %s132, 576
          %s134 = scalar_lea.vmem [#allocation2], %s133
          %s135 = smul.u32 4, %s9
          %s136 = smul.addr %s135, 8
          %s137 = scalar_lea.vmem %s1, %s136
          // Predicated region
          $region29: #{encoder_forward.9} parent=27 // pred_check
            _
          $region30: #{encoder_forward.9} parent=27 // pred_check_branch
            %139 = sbr.rel (0) target = $region32
          $region31: #{encoder_forward.9} parent=27 // pred_region
            // Predicated region
            $region33: #{encoder_forward.9} parent=31 // pred_check
              _
            $region34: #{encoder_forward.9} parent=31 // pred_check_branch
              %141 = sbr.rel (0) target = $region36
            $region35: #{encoder_forward.9} parent=31 // pred_region
              loop: start=0, step=1, limit=1
              $region37: #{encoder_forward.9} parent=35 // loop_pre_header
                _
              $region38: #{encoder_forward.9} parent=35 // loop_header
                %s143 = sphi 0, %s147
                %p144 = scmp.ge.s32.totalorder %s143, 1
                %s148 = sphi %s137, %s137
                %s149 = sphi %s134, %s134
              $region39: #{encoder_forward.9} parent=35 // loop_header_branch
                %146 = sbr.rel (%p144) target = $region43
              $region40: #{encoder_forward.9} parent=35 // loop_body
                %v150 = vld [vmem:[%s148] sm:$0xff]
                %151 = vst [vmem:[%s149] sm:$0xff] %v150
                %v152 = vld [vmem:[%s148 + $0x8] sm:$0xff]
                %153 = vst [vmem:[%s149 + $0x8] sm:$0xff] %v152
                %v154 = vld [vmem:[%s148 + $0x10] sm:$0xff]
                %155 = vst [vmem:[%s149 + $0x10] sm:$0xff] %v154
                %v156 = vld [vmem:[%s148 + $0x18] sm:$0xff]
                %157 = vst [vmem:[%s149 + $0x18] sm:$0xff] %v156
                %v158 = vld [vmem:[%s148 + $0x1e0] sm:$0xff]
                %159 = vst [vmem:[%s149 + $0x20] sm:$0xff] %v158
                %v160 = vld [vmem:[%s148 + $0x1e8] sm:$0xff]
                %161 = vst [vmem:[%s149 + $0x28] sm:$0xff] %v160
                %v162 = vld [vmem:[%s148 + $0x1f0] sm:$0xff]
                %163 = vst [vmem:[%s149 + $0x30] sm:$0xff] %v162
                %v164 = vld [vmem:[%s148 + $0x1f8] sm:$0xff]
                %165 = vst [vmem:[%s149 + $0x38] sm:$0xff] %v164
                %v166 = vld [vmem:[%s148 + $0x3c0] sm:$0xff]
                %167 = vst [vmem:[%s149 + $0x40] sm:$0xff] %v166
                %v168 = vld [vmem:[%s148 + $0x3c8] sm:$0xff]
                %169 = vst [vmem:[%s149 + $0x48] sm:$0xff] %v168
                %v170 = vld [vmem:[%s148 + $0x3d0] sm:$0xff]
                %171 = vst [vmem:[%s149 + $0x50] sm:$0xff] %v170
                %v172 = vld [vmem:[%s148 + $0x3d8] sm:$0xff]
                %173 = vst [vmem:[%s149 + $0x58] sm:$0xff] %v172
                %v174 = vld [vmem:[%s148 + $0x5a0] sm:$0xff]
                %175 = vst [vmem:[%s149 + $0x60] sm:$0xff] %v174
                %v176 = vld [vmem:[%s148 + $0x5a8] sm:$0xff]
                %177 = vst [vmem:[%s149 + $0x68] sm:$0xff] %v176
                %v178 = vld [vmem:[%s148 + $0x5b0] sm:$0xff]
                %179 = vst [vmem:[%s149 + $0x70] sm:$0xff] %v178
                %v180 = vld [vmem:[%s148 + $0x5b8] sm:$0xff]
                %181 = vst [vmem:[%s149 + $0x78] sm:$0xff] %v180
                %v182 = vld [vmem:[%s148 + $0x780] sm:$0xff]
                %183 = vst [vmem:[%s149 + $0x80] sm:$0xff] %v182
                %v184 = vld [vmem:[%s148 + $0x788] sm:$0xff]
                %185 = vst [vmem:[%s149 + $0x88] sm:$0xff] %v184
                %v186 = vld [vmem:[%s148 + $0x790] sm:$0xff]
                %187 = vst [vmem:[%s149 + $0x90] sm:$0xff] %v186
                %v188 = vld [vmem:[%s148 + $0x798] sm:$0xff]
                %189 = vst [vmem:[%s149 + $0x98] sm:$0xff] %v188
                %v190 = vld [vmem:[%s148 + $0x960] sm:$0xff]
                %191 = vst [vmem:[%s149 + $0xa0] sm:$0xff] %v190
                %v192 = vld [vmem:[%s148 + $0x968] sm:$0xff]
                %193 = vst [vmem:[%s149 + $0xa8] sm:$0xff] %v192
                %v194 = vld [vmem:[%s148 + $0x970] sm:$0xff]
                %195 = vst [vmem:[%s149 + $0xb0] sm:$0xff] %v194
                %v196 = vld [vmem:[%s148 + $0x978] sm:$0xff]
                %197 = vst [vmem:[%s149 + $0xb8] sm:$0xff] %v196
                %v198 = vld [vmem:[%s148 + $0xb40] sm:$0xff]
                %199 = vst [vmem:[%s149 + $0xc0] sm:$0xff] %v198
                %v200 = vld [vmem:[%s148 + $0xb48] sm:$0xff]
                %201 = vst [vmem:[%s149 + $0xc8] sm:$0xff] %v200
                %v202 = vld [vmem:[%s148 + $0xb50] sm:$0xff]
                %203 = vst [vmem:[%s149 + $0xd0] sm:$0xff] %v202
                %v204 = vld [vmem:[%s148 + $0xb58] sm:$0xff]
                %205 = vst [vmem:[%s149 + $0xd8] sm:$0xff] %v204
                %v206 = vld [vmem:[%s148 + $0xd20] sm:$0xff]
                %207 = vst [vmem:[%s149 + $0xe0] sm:$0xff] %v206
                %v208 = vld [vmem:[%s148 + $0xd28] sm:$0xff]
                %209 = vst [vmem:[%s149 + $0xe8] sm:$0xff] %v208
                %v210 = vld [vmem:[%s148 + $0xd30] sm:$0xff]
                %211 = vst [vmem:[%s149 + $0xf0] sm:$0xff] %v210
                %v212 = vld [vmem:[%s148 + $0xd38] sm:$0xff]
                %213 = vst [vmem:[%s149 + $0xf8] sm:$0xff] %v212
                %v214 = vld [vmem:[%s148 + $0xf00] sm:$0xff]
                %215 = vst [vmem:[%s149 + $0x100] sm:$0xff] %v214
                %v216 = vld [vmem:[%s148 + $0xf08] sm:$0xff]
                %217 = vst [vmem:[%s149 + $0x108] sm:$0xff] %v216
                %v218 = vld [vmem:[%s148 + $0xf10] sm:$0xff]
                %219 = vst [vmem:[%s149 + $0x110] sm:$0xff] %v218
                %v220 = vld [vmem:[%s148 + $0xf18] sm:$0xff]
                %221 = vst [vmem:[%s149 + $0x118] sm:$0xff] %v220
                %v222 = vld [vmem:[%s148 + $0x10e0] sm:$0xff]
                %223 = vst [vmem:[%s149 + $0x120] sm:$0xff] %v222
                %v224 = vld [vmem:[%s148 + $0x10e8] sm:$0xff]
                %225 = vst [vmem:[%s149 + $0x128] sm:$0xff] %v224
                %v226 = vld [vmem:[%s148 + $0x10f0] sm:$0xff]
                %227 = vst [vmem:[%s149 + $0x130] sm:$0xff] %v226
                %v228 = vld [vmem:[%s148 + $0x10f8] sm:$0xff]
                %229 = vst [vmem:[%s149 + $0x138] sm:$0xff] %v228
                %v230 = vld [vmem:[%s148 + $0x12c0] sm:$0xff]
                %231 = vst [vmem:[%s149 + $0x140] sm:$0xff] %v230
                %v232 = vld [vmem:[%s148 + $0x12c8] sm:$0xff]
                %233 = vst [vmem:[%s149 + $0x148] sm:$0xff] %v232
                %v234 = vld [vmem:[%s148 + $0x12d0] sm:$0xff]
                %235 = vst [vmem:[%s149 + $0x150] sm:$0xff] %v234
                %v236 = vld [vmem:[%s148 + $0x12d8] sm:$0xff]
                %237 = vst [vmem:[%s149 + $0x158] sm:$0xff] %v236
                %v238 = vld [vmem:[%s148 + $0x14a0] sm:$0xff]
                %239 = vst [vmem:[%s149 + $0x160] sm:$0xff] %v238
                %v240 = vld [vmem:[%s148 + $0x14a8] sm:$0xff]
                %241 = vst [vmem:[%s149 + $0x168] sm:$0xff] %v240
                %v242 = vld [vmem:[%s148 + $0x14b0] sm:$0xff]
                %243 = vst [vmem:[%s149 + $0x170] sm:$0xff] %v242
                %v244 = vld [vmem:[%s148 + $0x14b8] sm:$0xff]
                %245 = vst [vmem:[%s149 + $0x178] sm:$0xff] %v244
                %v246 = vld [vmem:[%s148 + $0x1680] sm:$0xff]
                %247 = vst [vmem:[%s149 + $0x180] sm:$0xff] %v246
                %v248 = vld [vmem:[%s148 + $0x1688] sm:$0xff]
                %249 = vst [vmem:[%s149 + $0x188] sm:$0xff] %v248
                %v250 = vld [vmem:[%s148 + $0x1690] sm:$0xff]
                %251 = vst [vmem:[%s149 + $0x190] sm:$0xff] %v250
                %v252 = vld [vmem:[%s148 + $0x1698] sm:$0xff]
                %253 = vst [vmem:[%s149 + $0x198] sm:$0xff] %v252
                %v254 = vld [vmem:[%s148 + $0x1860] sm:$0xff]
                %255 = vst [vmem:[%s149 + $0x1a0] sm:$0xff] %v254
                %v256 = vld [vmem:[%s148 + $0x1868] sm:$0xff]
                %257 = vst [vmem:[%s149 + $0x1a8] sm:$0xff] %v256
                %v258 = vld [vmem:[%s148 + $0x1870] sm:$0xff]
                %259 = vst [vmem:[%s149 + $0x1b0] sm:$0xff] %v258
                %v260 = vld [vmem:[%s148 + $0x1878] sm:$0xff]
                %261 = vst [vmem:[%s149 + $0x1b8] sm:$0xff] %v260
                %v262 = vld [vmem:[%s148 + $0x1a40] sm:$0xff]
                %263 = vst [vmem:[%s149 + $0x1c0] sm:$0xff] %v262
                %v264 = vld [vmem:[%s148 + $0x1a48] sm:$0xff]
                %265 = vst [vmem:[%s149 + $0x1c8] sm:$0xff] %v264
                %v266 = vld [vmem:[%s148 + $0x1a50] sm:$0xff]
                %267 = vst [vmem:[%s149 + $0x1d0] sm:$0xff] %v266
                %v268 = vld [vmem:[%s148 + $0x1a58] sm:$0xff]
                %269 = vst [vmem:[%s149 + $0x1d8] sm:$0xff] %v268
                %v270 = vld [vmem:[%s148 + $0x1c20] sm:$0xff]
                %271 = vst [vmem:[%s149 + $0x1e0] sm:$0xff] %v270
                %v272 = vld [vmem:[%s148 + $0x1c28] sm:$0xff]
                %273 = vst [vmem:[%s149 + $0x1e8] sm:$0xff] %v272
                %v274 = vld [vmem:[%s148 + $0x1c30] sm:$0xff]
                %275 = vst [vmem:[%s149 + $0x1f0] sm:$0xff] %v274
                %v276 = vld [vmem:[%s148 + $0x1c38] sm:$0xff]
                %277 = vst [vmem:[%s149 + $0x1f8] sm:$0xff] %v276
                %v278 = vld [vmem:[%s148 + $0x1e00] sm:$0xff]
                %279 = vst [vmem:[%s149 + $0x200] sm:$0xff] %v278
                %v280 = vld [vmem:[%s148 + $0x1e08] sm:$0xff]
                %281 = vst [vmem:[%s149 + $0x208] sm:$0xff] %v280
                %v282 = vld [vmem:[%s148 + $0x1e10] sm:$0xff]
                %283 = vst [vmem:[%s149 + $0x210] sm:$0xff] %v282
                %v284 = vld [vmem:[%s148 + $0x1e18] sm:$0xff]
                %285 = vst [vmem:[%s149 + $0x218] sm:$0xff] %v284
                %v286 = vld [vmem:[%s148 + $0x1fe0] sm:$0xff]
                %287 = vst [vmem:[%s149 + $0x220] sm:$0xff] %v286
                %v288 = vld [vmem:[%s148 + $0x1fe8] sm:$0xff]
                %289 = vst [vmem:[%s149 + $0x228] sm:$0xff] %v288
                %v290 = vld [vmem:[%s148 + $0x1ff0] sm:$0xff]
                %291 = vst [vmem:[%s149 + $0x230] sm:$0xff] %v290
                %v292 = vld [vmem:[%s148 + $0x1ff8] sm:$0xff]
                %293 = vst [vmem:[%s149 + $0x238] sm:$0xff] %v292
              $region41: #{encoder_forward.9} parent=35 // loop_footer
                %s147 = sadd.s32 1, %s143
              $region42: #{encoder_forward.9} parent=35 // loop_footer_branch
                %142 = sbr.rel target = $region38
              $region43: #{encoder_forward.9} parent=35 // loop_exit
                _
            $region36: #{encoder_forward.9} parent=31 // pred_fallthru
              _
            // Predicated region
            $region44: #{encoder_forward.9} parent=31 // pred_check
              _
            $region45: #{encoder_forward.9} parent=31 // pred_check_branch
              %295 = sbr.rel target = $region47
            $region46: #{encoder_forward.9} parent=31 // pred_region
              _
            $region47: #{encoder_forward.9} parent=31 // pred_fallthru
              _
          $region32: #{encoder_forward.9} parent=27 // pred_fallthru
            _
          %296 = vnop
        $region28: #{encoder_forward.9} parent=23 // pred_fallthru
          _
      $region24: #{encoder_forward.9} parent=5 // pred_fallthru
        _
      %p297 = scmp.le.s32.totalorder 1, %s9
      %p298 = scmp.lt.s32.totalorder %s9, 16
      %p299 = pnand %p297, %p298
      %p300 = pneg %p299
      // Predicated region
      $region48: #{encoder_forward.9} parent=5 // pred_check
        _
      $region49: #{encoder_forward.9} parent=5 // pred_check_branch
        %302 = sbr.rel (%p299) target = $region51
      $region50: #{encoder_forward.9} parent=5 // pred_region
        %s303 = ssub.s32 %s9, 1
        %s304 = sand.u32 %s43, 1
        %s305 = sand.u32 %s43, 1
        %s306 = smul.addr %s305, 576
        %s307 = scalar_lea.vmem [#allocation2], %s306
        // Predicated region
        $region52: #{encoder_forward.9} parent=50 // pred_check
          %p308 = pneg %p56
        $region53: #{encoder_forward.9} parent=50 // pred_check_branch
          %310 = sbr.rel (%p308) target = $region55
        $region54: #{encoder_forward.9} parent=50 // pred_region
          _
        $region55: #{encoder_forward.9} parent=50 // pred_fallthru
          _
        %p311 = pneg %p30
        %p312 = pneg %p27
        %s313 = sand.u32 %s43, 1
        %s314 = sand.u32 %s43, 1
        %s315 = smul.addr %s314, 576
        %s316 = scalar_lea.vmem [#allocation2], %s315
        %p317 = pneg %p56
        %p318 = pneg %p53
        %p319 = pneg %p77
        %p320 = pneg %p74
        %p321 = pneg %p103
        %p322 = pneg %p100
        %s323 = sand.u32 %s90, 1
        %s324 = sand.u32 %s90, 1
        %s325 = smul.addr %s324, 64
        %s326 = scalar_lea.vmem [#allocation3], %s325
        %s327 = smul.u32 4, %s14
        %s328 = smul.u32 4, %s14
        %v329 = vld [vmem:[%s0] sm:$0xff]
        %v330 = vld [vmem:[%s0 + $0x8] sm:$0xff]
        %v331 = vld [vmem:[%s0 + $0x10] sm:$0xff]
        %v332 = vld [vmem:[%s0 + $0x18] sm:$0xff]
        %v333 = vld [vmem:[%s307] sm:$0xff]
        %v334 = vld [vmem:[%s307 + $0x8] sm:$0xff]
        %v335 = vld [vmem:[%s307 + $0x10] sm:$0xff]
        %v336 = vld [vmem:[%s307 + $0x18] sm:$0xff]
        %v337 = vld [vmem:[%s307 + $0x20] sm:$0xff]
        %v338 = vld [vmem:[%s307 + $0x28] sm:$0xff]
        %v339 = vld [vmem:[%s307 + $0x30] sm:$0xff]
        %v340 = vld [vmem:[%s307 + $0x38] sm:$0xff]
        %v341 = vld [vmem:[%s307 + $0x40] sm:$0xff]
        %v342 = vld [vmem:[%s307 + $0x48] sm:$0xff]
        %v343 = vld [vmem:[%s307 + $0x50] sm:$0xff]
        %v344 = vld [vmem:[%s307 + $0x58] sm:$0xff]
        %v345 = vld [vmem:[%s307 + $0x60] sm:$0xff]
        %v346 = vld [vmem:[%s307 + $0x68] sm:$0xff]
        %v347 = vld [vmem:[%s307 + $0x70] sm:$0xff]
        %v348 = vld [vmem:[%s307 + $0x78] sm:$0xff]
        %v349 = vld [vmem:[%s307 + $0x80] sm:$0xff]
        %v350 = vld [vmem:[%s307 + $0x88] sm:$0xff]
        %v351 = vld [vmem:[%s307 + $0x90] sm:$0xff]
        %v352 = vld [vmem:[%s307 + $0x98] sm:$0xff]
        %v353 = vld [vmem:[%s307 + $0xa0] sm:$0xff]
        %v354 = vld [vmem:[%s307 + $0xa8] sm:$0xff]
        %v355 = vld [vmem:[%s307 + $0xb0] sm:$0xff]
        %v356 = vld [vmem:[%s307 + $0xb8] sm:$0xff]
        %v357 = vld [vmem:[%s307 + $0xc0] sm:$0xff]
        %v358 = vld [vmem:[%s307 + $0xc8] sm:$0xff]
        %v359 = vld [vmem:[%s307 + $0xd0] sm:$0xff]
        %v360 = vld [vmem:[%s307 + $0xd8] sm:$0xff]
        %v361 = vld [vmem:[%s307 + $0xe0] sm:$0xff]
        %v362 = vld [vmem:[%s307 + $0xe8] sm:$0xff]
        %v363 = vld [vmem:[%s307 + $0xf0] sm:$0xff]
        %v364 = vld [vmem:[%s307 + $0xf8] sm:$0xff]
        %v365 = vld [vmem:[%s307 + $0x100] sm:$0xff]
        %v366 = vld [vmem:[%s307 + $0x108] sm:$0xff]
        %v367 = vld [vmem:[%s307 + $0x110] sm:$0xff]
        %v368 = vld [vmem:[%s307 + $0x118] sm:$0xff]
        %v369 = vld [vmem:[%s307 + $0x120] sm:$0xff]
        %v370 = vld [vmem:[%s307 + $0x128] sm:$0xff]
        %v371 = vld [vmem:[%s307 + $0x130] sm:$0xff]
        %v372 = vld [vmem:[%s307 + $0x138] sm:$0xff]
        %v373 = vld [vmem:[%s307 + $0x140] sm:$0xff]
        %v374 = vld [vmem:[%s307 + $0x148] sm:$0xff]
        %v375 = vld [vmem:[%s307 + $0x150] sm:$0xff]
        %v376 = vld [vmem:[%s307 + $0x158] sm:$0xff]
        %v377 = vld [vmem:[%s307 + $0x160] sm:$0xff]
        %v378 = vld [vmem:[%s307 + $0x168] sm:$0xff]
        %v379 = vld [vmem:[%s307 + $0x170] sm:$0xff]
        %v380 = vld [vmem:[%s307 + $0x178] sm:$0xff]
        %v381 = vld [vmem:[%s307 + $0x180] sm:$0xff]
        %v382 = vld [vmem:[%s307 + $0x188] sm:$0xff]
        %v383 = vld [vmem:[%s307 + $0x190] sm:$0xff]
        %v384 = vld [vmem:[%s307 + $0x198] sm:$0xff]
        %v385 = vld [vmem:[%s307 + $0x1a0] sm:$0xff]
        %v386 = vld [vmem:[%s307 + $0x1a8] sm:$0xff]
        %v387 = vld [vmem:[%s307 + $0x1b0] sm:$0xff]
        %v388 = vld [vmem:[%s307 + $0x1b8] sm:$0xff]
        %v389 = vld [vmem:[%s307 + $0x1c0] sm:$0xff]
        %v390 = vld [vmem:[%s307 + $0x1c8] sm:$0xff]
        %v391 = vld [vmem:[%s307 + $0x1d0] sm:$0xff]
        %v392 = vld [vmem:[%s307 + $0x1d8] sm:$0xff]
        %v393 = vld [vmem:[%s307 + $0x1e0] sm:$0xff]
        %v394 = vld [vmem:[%s307 + $0x1e8] sm:$0xff]
        %v395 = vld [vmem:[%s307 + $0x1f0] sm:$0xff]
        %v396 = vld [vmem:[%s307 + $0x1f8] sm:$0xff]
        %v397 = vld [vmem:[%s307 + $0x200] sm:$0xff]
        %v398 = vld [vmem:[%s307 + $0x208] sm:$0xff]
        %v399 = vld [vmem:[%s307 + $0x210] sm:$0xff]
        %v400 = vld [vmem:[%s307 + $0x218] sm:$0xff]
        %v401 = vld [vmem:[%s307 + $0x220] sm:$0xff]
        %v402 = vld [vmem:[%s307 + $0x228] sm:$0xff]
        %v403 = vld [vmem:[%s307 + $0x230] sm:$0xff]
        %v404 = vld [vmem:[%s307 + $0x238] sm:$0xff]
        %v405 = vld [vmem:[%s2] sm:$0xff]
        %v406 = vld [vmem:[%s2 + $0x8] sm:$0xff]
        %408 = vset.pattern.permute.xlu0 0
        %409 = vperm.xlu0 %408, %v405
        %v410 = vpop.permute.xlu0 %409
        %413 = vset.pattern.permute.xlu0 0
        %414 = vperm.xlu0 %413, %v406
        %v415 = vpop.permute.xlu0 %414
        %vm417 = vcmask 130048
        %v419 = vsel %vm417, %v330, 0
        %v422 = vsel %vm417, %v332, 0
        %424 = vmatpush.msra.mxu0 %v393
        %425 = vmatpush.msra.mxu0 %v389
        %426 = vmatpush.msra.mxu0 %v385
        %427 = vmatpush.msra.mxu0 %v381
        %428 = vmatpush.msra.mxu0 %v377
        %429 = vmatpush.msra.mxu0 %v373
        %430 = vmatpush.msra.mxu0 %v369
        %431 = vmatpush.msra.mxu0 %v365
        %432 = vmatpush.msra.mxu0 %v361
        %433 = vmatpush.msra.mxu0 %v357
        %434 = vmatpush.msra.mxu0 %v353
        %435 = vmatpush.msra.mxu0 %v349
        %436 = vmatpush.msra.mxu0 %v345
        %437 = vmatpush.msra.mxu0 %v341
        %438 = vmatpush.msra.mxu0 %v337
        %439 = vmatpush.msra.mxu0 %v333
        %440 = vmatmul.f32.gmra.mxu0 %v329
        %v441 = vpop.f32.mrf.mxu0
        %v442 = vadd.f32 %v410, %v441
        %443 = vmatmul.f32.gmra.mxu0 %v331
        %v444 = vpop.f32.mrf.mxu0
        %v445 = vadd.f32 %v415, %v444
        %446 = vdwg.mxu0
        %447 = vmatpush.msra.mxu0 0.0
        %448 = vmatpush.msra.mxu0 0.0
        %449 = vmatpush.msra.mxu0 0.0
        %450 = vmatpush.msra.mxu0 0.0
        %451 = vmatpush.msra.mxu0 0.0
        %452 = vmatpush.msra.mxu0 0.0
        %453 = vmatpush.msra.mxu0 0.0
        %454 = vmatpush.msra.mxu0 0.0
        %455 = vmatpush.msra.mxu0 0.0
        %456 = vmatpush.msra.mxu0 0.0
        %457 = vmatpush.msra.mxu0 0.0
        %458 = vmatpush.msra.mxu0 0.0
        %459 = vmatpush.msra.mxu0 0.0
        %460 = vmatpush.msra.mxu0 0.0
        %461 = vmatpush.msra.mxu0 %v401
        %462 = vmatpush.msra.mxu0 %v397
        %463 = vmatmul.f32.gmra.mxu0 %v419
        %v464 = vpop.f32.mrf.mxu0
        %v465 = vadd.f32 %v442, %v464
        %466 = vmatmul.f32.gmra.mxu0 %v422
        %v467 = vpop.f32.mrf.mxu0
        %v468 = vadd.f32 %v445, %v467
        %469 = vdwg.mxu0
        %470 = vmatpush.msra.mxu0 %v394
        %471 = vmatpush.msra.mxu0 %v390
        %472 = vmatpush.msra.mxu0 %v386
        %473 = vmatpush.msra.mxu0 %v382
        %474 = vmatpush.msra.mxu0 %v378
        %475 = vmatpush.msra.mxu0 %v374
        %476 = vmatpush.msra.mxu0 %v370
        %477 = vmatpush.msra.mxu0 %v366
        %478 = vmatpush.msra.mxu0 %v362
        %479 = vmatpush.msra.mxu0 %v358
        %480 = vmatpush.msra.mxu0 %v354
        %481 = vmatpush.msra.mxu0 %v350
        %482 = vmatpush.msra.mxu0 %v346
        %483 = vmatpush.msra.mxu0 %v342
        %484 = vmatpush.msra.mxu0 %v338
        %485 = vmatpush.msra.mxu0 %v334
        %486 = vmatmul.f32.gmra.mxu0 %v329
        %v487 = vpop.f32.mrf.mxu0
        %v488 = vadd.f32 %v410, %v487
        %489 = vmatmul.f32.gmra.mxu0 %v331
        %v490 = vpop.f32.mrf.mxu0
        %v491 = vadd.f32 %v415, %v490
        %492 = vdwg.mxu0
        %493 = vmatpush.msra.mxu0 0.0
        %494 = vmatpush.msra.mxu0 0.0
        %495 = vmatpush.msra.mxu0 0.0
        %496 = vmatpush.msra.mxu0 0.0
        %497 = vmatpush.msra.mxu0 0.0
        %498 = vmatpush.msra.mxu0 0.0
        %499 = vmatpush.msra.mxu0 0.0
        %500 = vmatpush.msra.mxu0 0.0
        %501 = vmatpush.msra.mxu0 0.0
        %502 = vmatpush.msra.mxu0 0.0
        %503 = vmatpush.msra.mxu0 0.0
        %504 = vmatpush.msra.mxu0 0.0
        %505 = vmatpush.msra.mxu0 0.0
        %506 = vmatpush.msra.mxu0 0.0
        %507 = vmatpush.msra.mxu0 %v402
        %508 = vmatpush.msra.mxu0 %v398
        %509 = vmatmul.f32.gmra.mxu0 %v419
        %v510 = vpop.f32.mrf.mxu0
        %v511 = vadd.f32 %v488, %v510
        %512 = vmatmul.f32.gmra.mxu0 %v422
        %v513 = vpop.f32.mrf.mxu0
        %v514 = vadd.f32 %v491, %v513
        %515 = vdwg.mxu0
        %516 = vmatpush.msra.mxu0 %v395
        %517 = vmatpush.msra.mxu0 %v391
        %518 = vmatpush.msra.mxu0 %v387
        %519 = vmatpush.msra.mxu0 %v383
        %520 = vmatpush.msra.mxu0 %v379
        %521 = vmatpush.msra.mxu0 %v375
        %522 = vmatpush.msra.mxu0 %v371
        %523 = vmatpush.msra.mxu0 %v367
        %524 = vmatpush.msra.mxu0 %v363
        %525 = vmatpush.msra.mxu0 %v359
        %526 = vmatpush.msra.mxu0 %v355
        %527 = vmatpush.msra.mxu0 %v351
        %528 = vmatpush.msra.mxu0 %v347
        %529 = vmatpush.msra.mxu0 %v343
        %530 = vmatpush.msra.mxu0 %v339
        %531 = vmatpush.msra.mxu0 %v335
        %532 = vmatmul.f32.gmra.mxu0 %v329
        %v533 = vpop.f32.mrf.mxu0
        %v534 = vadd.f32 %v410, %v533
        %535 = vmatmul.f32.gmra.mxu0 %v331
        %v536 = vpop.f32.mrf.mxu0
        %v537 = vadd.f32 %v415, %v536
        %538 = vdwg.mxu0
        %539 = vmatpush.msra.mxu0 0.0
        %540 = vmatpush.msra.mxu0 0.0
        %541 = vmatpush.msra.mxu0 0.0
        %542 = vmatpush.msra.mxu0 0.0
        %543 = vmatpush.msra.mxu0 0.0
        %544 = vmatpush.msra.mxu0 0.0
        %545 = vmatpush.msra.mxu0 0.0
        %546 = vmatpush.msra.mxu0 0.0
        %547 = vmatpush.msra.mxu0 0.0
        %548 = vmatpush.msra.mxu0 0.0
        %549 = vmatpush.msra.mxu0 0.0
        %550 = vmatpush.msra.mxu0 0.0
        %551 = vmatpush.msra.mxu0 0.0
        %552 = vmatpush.msra.mxu0 0.0
        %553 = vmatpush.msra.mxu0 %v403
        %554 = vmatpush.msra.mxu0 %v399
        %555 = vmatmul.f32.gmra.mxu0 %v419
        %v556 = vpop.f32.mrf.mxu0
        %v557 = vadd.f32 %v534, %v556
        %558 = vmatmul.f32.gmra.mxu0 %v422
        %v559 = vpop.f32.mrf.mxu0
        %v560 = vadd.f32 %v537, %v559
        %561 = vdwg.mxu0
        %562 = vmatpush.msra.mxu0 %v396
        %563 = vmatpush.msra.mxu0 %v392
        %564 = vmatpush.msra.mxu0 %v388
        %565 = vmatpush.msra.mxu0 %v384
        %566 = vmatpush.msra.mxu0 %v380
        %567 = vmatpush.msra.mxu0 %v376
        %568 = vmatpush.msra.mxu0 %v372
        %569 = vmatpush.msra.mxu0 %v368
        %570 = vmatpush.msra.mxu0 %v364
        %571 = vmatpush.msra.mxu0 %v360
        %572 = vmatpush.msra.mxu0 %v356
        %573 = vmatpush.msra.mxu0 %v352
        %574 = vmatpush.msra.mxu0 %v348
        %575 = vmatpush.msra.mxu0 %v344
        %576 = vmatpush.msra.mxu0 %v340
        %577 = vmatpush.msra.mxu0 %v336
        %578 = vmatmul.f32.gmra.mxu0 %v329
        %v579 = vpop.f32.mrf.mxu0
        %v580 = vadd.f32 %v410, %v579
        %581 = vmatmul.f32.gmra.mxu0 %v331
        %v582 = vpop.f32.mrf.mxu0
        %v583 = vadd.f32 %v415, %v582
        %584 = vdwg.mxu0
        %585 = vmatpush.msra.mxu0 0.0
        %586 = vmatpush.msra.mxu0 0.0
        %587 = vmatpush.msra.mxu0 0.0
        %588 = vmatpush.msra.mxu0 0.0
        %589 = vmatpush.msra.mxu0 0.0
        %590 = vmatpush.msra.mxu0 0.0
        %591 = vmatpush.msra.mxu0 0.0
        %592 = vmatpush.msra.mxu0 0.0
        %593 = vmatpush.msra.mxu0 0.0
        %594 = vmatpush.msra.mxu0 0.0
        %595 = vmatpush.msra.mxu0 0.0
        %596 = vmatpush.msra.mxu0 0.0
        %597 = vmatpush.msra.mxu0 0.0
        %598 = vmatpush.msra.mxu0 0.0
        %599 = vmatpush.msra.mxu0 %v404
        %600 = vmatpush.msra.mxu0 %v400
        %601 = vmatmul.f32.gmra.mxu0 %v419
        %v602 = vpop.f32.mrf.mxu0
        %v603 = vadd.f32 %v580, %v602
        %604 = vmatmul.f32.gmra.mxu0 %v422
        %v605 = vpop.f32.mrf.mxu0
        %v606 = vadd.f32 %v583, %v605
        %607 = vdwg.mxu0
        %608 = vst [vmem:[%s326] sm:$0xff] %v465
        %609 = vst [vmem:[%s326 + $0x8] sm:$0xff] %v511
        %610 = vst [vmem:[%s326 + $0x10] sm:$0xff] %v557
        %611 = vst [vmem:[%s326 + $0x18] sm:$0xff] %v603
        %612 = vst [vmem:[%s326 + $0x20] sm:$0xff] %v468
        %613 = vst [vmem:[%s326 + $0x28] sm:$0xff] %v514
        %614 = vst [vmem:[%s326 + $0x30] sm:$0xff] %v560
        %615 = vst [vmem:[%s326 + $0x38] sm:$0xff] %v606
        %s616 = sand.u32 %s90, 1
        %s617 = sand.u32 %s90, 1
        %s618 = smul.addr %s617, 64
        %s619 = scalar_lea.vmem [#allocation3], %s618
        // Predicated region
        $region56: #{encoder_forward.9} parent=50 // pred_check
          %p620 = pneg %p100
        $region57: #{encoder_forward.9} parent=50 // pred_check_branch
          %622 = sbr.rel (%p620) target = $region59
        $region58: #{encoder_forward.9} parent=50 // pred_region
          %s623 = smul.u32 4, %s14
          %s624 = smul.addr %s623, 8
          %s625 = scalar_lea.vmem %s3, %s624
          // Predicated region
          $region60: #{encoder_forward.9} parent=58 // pred_check
            _
          $region61: #{encoder_forward.9} parent=58 // pred_check_branch
            %627 = sbr.rel (0) target = $region63
          $region62: #{encoder_forward.9} parent=58 // pred_region
            // Predicated region
            $region64: #{encoder_forward.9} parent=62 // pred_check
              _
            $region65: #{encoder_forward.9} parent=62 // pred_check_branch
              %629 = sbr.rel (0) target = $region67
            $region66: #{encoder_forward.9} parent=62 // pred_region
              loop: start=0, step=1, limit=1
              $region68: #{encoder_forward.9} parent=66 // loop_pre_header
                _
              $region69: #{encoder_forward.9} parent=66 // loop_header
                %s631 = sphi 0, %s635
                %p632 = scmp.ge.s32.totalorder %s631, 1
                %s636 = sphi %s619, %s619
                %s637 = sphi %s625, %s625
              $region70: #{encoder_forward.9} parent=66 // loop_header_branch
                %634 = sbr.rel (%p632) target = $region74
              $region71: #{encoder_forward.9} parent=66 // loop_body
                %v638 = vld [vmem:[%s636] sm:$0xff]
                %639 = vst [vmem:[%s637] sm:$0xff] %v638
                %v640 = vld [vmem:[%s636 + $0x8] sm:$0xff]
                %641 = vst [vmem:[%s637 + $0x8] sm:$0xff] %v640
                %v642 = vld [vmem:[%s636 + $0x10] sm:$0xff]
                %643 = vst [vmem:[%s637 + $0x10] sm:$0xff] %v642
                %v644 = vld [vmem:[%s636 + $0x18] sm:$0xff]
                %645 = vst [vmem:[%s637 + $0x18] sm:$0xff] %v644
                %v646 = vld [vmem:[%s636 + $0x20] sm:$0xff]
                %647 = vst [vmem:[%s637 + $0x1e0] sm:$0xff] %v646
                %v648 = vld [vmem:[%s636 + $0x28] sm:$0xff]
                %649 = vst [vmem:[%s637 + $0x1e8] sm:$0xff] %v648
                %v650 = vld [vmem:[%s636 + $0x30] sm:$0xff]
                %651 = vst [vmem:[%s637 + $0x1f0] sm:$0xff] %v650
                %v652 = vld [vmem:[%s636 + $0x38] sm:$0xff]
                %653 = vst [vmem:[%s637 + $0x1f8] sm:$0xff] %v652
              $region72: #{encoder_forward.9} parent=66 // loop_footer
                %s635 = sadd.s32 1, %s631
              $region73: #{encoder_forward.9} parent=66 // loop_footer_branch
                %630 = sbr.rel target = $region69
              $region74: #{encoder_forward.9} parent=66 // loop_exit
                _
            $region67: #{encoder_forward.9} parent=62 // pred_fallthru
              _
            // Predicated region
            $region75: #{encoder_forward.9} parent=62 // pred_check
              _
            $region76: #{encoder_forward.9} parent=62 // pred_check_branch
              %655 = sbr.rel target = $region78
            $region77: #{encoder_forward.9} parent=62 // pred_region
              _
            $region78: #{encoder_forward.9} parent=62 // pred_fallthru
              _
          $region63: #{encoder_forward.9} parent=58 // pred_fallthru
            _
          %656 = vnop
        $region59: #{encoder_forward.9} parent=50 // pred_fallthru
          _
      $region51: #{encoder_forward.9} parent=5 // pred_fallthru
        _
      %p657 = scmp.le.s32.totalorder 2, %s9
      // Predicated region
      $region79: #{encoder_forward.9} parent=5 // pred_check
        %p658 = pneg %p657
      $region80: #{encoder_forward.9} parent=5 // pred_check_branch
        %660 = sbr.rel (%p658) target = $region82
      $region81: #{encoder_forward.9} parent=5 // pred_region
        %s661 = ssub.s32 %s9, 2
        // Predicated region
        $region83: #{encoder_forward.9} parent=81 // pred_check
          %p662 = pneg %p106
        $region84: #{encoder_forward.9} parent=81 // pred_check_branch
          %664 = sbr.rel (%p662) target = $region86
        $region85: #{encoder_forward.9} parent=81 // pred_region
          %s665 = sand.u32 %s91, 1
          %s666 = sand.u32 %s91, 1
          %s667 = smul.addr %s666, 64
          %s668 = scalar_lea.vmem [#allocation3], %s667
        $region86: #{encoder_forward.9} parent=81 // pred_fallthru
          _
      $region82: #{encoder_forward.9} parent=5 // pred_fallthru
        _
    $region6: #{encoder_forward.9} parent=1 // loop_footer
      %s13 = sadd.s32 1, %s9
    $region7: #{encoder_forward.9} parent=1 // loop_footer_branch
      %8 = sbr.rel target = $region3
    $region8: #{encoder_forward.9} parent=1 // loop_exit
      _

// kernel: encoder_forward.10
$region0: #{encoder_forward.10}
  #allocation0 [shape = 'u32[]', space=smem, size = 0x4, offset = 0x4, fixed_abs, tag = 'smem constant byte address 0x4 - core index']
  #allocation1 [shape = 'u32[72,128]{1,0:T(1,128)}', space=vmem, size = 0x9000, scoped, tag = 'internal scratch']
  %s0 = inlined_call_operand.vmem [shape: f32[232,128], index: 0, kind: input, shape index: {}]
  %s1 = inlined_call_operand.vmem [shape: f32[232,128], index: 1, kind: input, shape index: {}]
  %s2 = inlined_call_operand.vmem [shape: f32[232,128], index: 2, kind: input, shape index: {}]
  %s3 = inlined_call_operand.vmem [shape: f32[232,128], index: 3, kind: input, shape index: {}]
  %s4 = inlined_call_operand.vmem [shape: f32[232,128], index: 4, kind: output, shape index: {}]
  %s5 = sld [smem:[#allocation0]]
  $region26: #{encoder_forward.10} parent=0
    _
  %s7 = ssub.s32 1, %s5
  %s8 = scalar_select 0, %s7, %s5
  // Predicated region
  $region2: #{encoder_forward.10} parent=0 // pred_check
    _
  $region3: #{encoder_forward.10} parent=0 // pred_check_branch
    %10 = sbr.rel (0) target = $region5
  $region4: #{encoder_forward.10} parent=0 // pred_region
    _
  $region5: #{encoder_forward.10} parent=0 // pred_fallthru
    _
  // Predicated region
  $region6: #{encoder_forward.10} parent=0 // pred_check
    _
  $region7: #{encoder_forward.10} parent=0 // pred_check_branch
    %12 = sbr.rel (0) target = $region9
  $region8: #{encoder_forward.10} parent=0 // pred_region
    _
  $region9: #{encoder_forward.10} parent=0 // pred_fallthru
    _
  // Predicated region
  $region10: #{encoder_forward.10} parent=0 // pred_check
    _
  $region11: #{encoder_forward.10} parent=0 // pred_check_branch
    %14 = sbr.rel (0) target = $region13
  $region12: #{encoder_forward.10} parent=0 // pred_region
    _
  $region13: #{encoder_forward.10} parent=0 // pred_fallthru
    _
  // Predicated region
  $region14: #{encoder_forward.10} parent=0 // pred_check
    _
  $region15: #{encoder_forward.10} parent=0 // pred_check_branch
    %16 = sbr.rel (0) target = $region17
  $region16: #{encoder_forward.10} parent=0 // pred_region
    _
  $region17: #{encoder_forward.10} parent=0 // pred_fallthru
    _
  %v17 = vld [vmem:[%s0] sm:$0xff]
  %v18 = vld [vmem:[%s0 + $0x8] sm:$0xff]
  %v19 = vld [vmem:[%s0 + $0x10] sm:$0xff]
  %v20 = vld [vmem:[%s0 + $0x18] sm:$0xff]
  %v21 = vld [vmem:[%s0 + $0x20] sm:$0xff]
  %v22 = vld [vmem:[%s0 + $0x28] sm:$0xff]
  %v23 = vld [vmem:[%s0 + $0x30] sm:$0xff]
  %v24 = vld [vmem:[%s0 + $0x38] sm:$0xff]
  %v25 = vld [vmem:[%s0 + $0x40] sm:$0xff]
  %v26 = vld [vmem:[%s0 + $0x48] sm:$0xff]
  %v27 = vld [vmem:[%s0 + $0x50] sm:$0xff]
  %v28 = vld [vmem:[%s0 + $0x58] sm:$0xff]
  %v29 = vld [vmem:[%s0 + $0x60] sm:$0xff]
  %v30 = vld [vmem:[%s0 + $0x68] sm:$0xff]
  %v31 = vld [vmem:[%s0 + $0x70] sm:$0xff]
  %v32 = vld [vmem:[%s0 + $0x78] sm:$0xff]
  %v33 = vld [vmem:[%s0 + $0x80] sm:$0xff]
  %v34 = vld [vmem:[%s0 + $0x88] sm:$0xff]
  %v35 = vld [vmem:[%s0 + $0x90] sm:$0xff]
  %v36 = vld [vmem:[%s0 + $0x98] sm:$0xff]
  %v37 = vld [vmem:[%s0 + $0xa0] sm:$0xff]
  %v38 = vld [vmem:[%s0 + $0xa8] sm:$0xff]
  %v39 = vld [vmem:[%s0 + $0xb0] sm:$0xff]
  %v40 = vld [vmem:[%s0 + $0xb8] sm:$0xff]
  %v41 = vld [vmem:[%s0 + $0xc0] sm:$0xff]
  %v42 = vld [vmem:[%s0 + $0xc8] sm:$0xff]
  %v43 = vld [vmem:[%s0 + $0xd0] sm:$0xff]
  %v44 = vld [vmem:[%s0 + $0xd8] sm:$0xff]
  %v45 = vld [vmem:[%s0 + $0xe0] sm:$0xff]
  %v46 = vld [vmem:[%s1] sm:$0xff]
  %v47 = vld [vmem:[%s1 + $0x8] sm:$0xff]
  %v48 = vld [vmem:[%s1 + $0x10] sm:$0xff]
  %v49 = vld [vmem:[%s1 + $0x18] sm:$0xff]
  %v50 = vld [vmem:[%s1 + $0x20] sm:$0xff]
  %v51 = vld [vmem:[%s1 + $0x28] sm:$0xff]
  %v52 = vld [vmem:[%s1 + $0x30] sm:$0xff]
  %v53 = vld [vmem:[%s1 + $0x38] sm:$0xff]
  %v54 = vld [vmem:[%s1 + $0x40] sm:$0xff]
  %v55 = vld [vmem:[%s1 + $0x48] sm:$0xff]
  %v56 = vld [vmem:[%s1 + $0x50] sm:$0xff]
  %v57 = vld [vmem:[%s1 + $0x58] sm:$0xff]
  %v58 = vld [vmem:[%s1 + $0x60] sm:$0xff]
  %v59 = vld [vmem:[%s1 + $0x68] sm:$0xff]
  %v60 = vld [vmem:[%s1 + $0x70] sm:$0xff]
  %v61 = vld [vmem:[%s1 + $0x78] sm:$0xff]
  %v62 = vld [vmem:[%s1 + $0x80] sm:$0xff]
  %v63 = vld [vmem:[%s1 + $0x88] sm:$0xff]
  %v64 = vld [vmem:[%s1 + $0x90] sm:$0xff]
  %v65 = vld [vmem:[%s1 + $0x98] sm:$0xff]
  %v66 = vld [vmem:[%s1 + $0xa0] sm:$0xff]
  %v67 = vld [vmem:[%s1 + $0xa8] sm:$0xff]
  %v68 = vld [vmem:[%s1 + $0xb0] sm:$0xff]
  %v69 = vld [vmem:[%s1 + $0xb8] sm:$0xff]
  %v70 = vld [vmem:[%s1 + $0xc0] sm:$0xff]
  %v71 = vld [vmem:[%s1 + $0xc8] sm:$0xff]
  %v72 = vld [vmem:[%s1 + $0xd0] sm:$0xff]
  %v73 = vld [vmem:[%s1 + $0xd8] sm:$0xff]
  %v74 = vld [vmem:[%s1 + $0xe0] sm:$0xff]
  %v75 = vmax.f32 %v17, %v46
  %v76 = vmax.f32 %v18, %v47
  %v77 = vmax.f32 %v19, %v48
  %v78 = vmax.f32 %v20, %v49
  %v79 = vmax.f32 %v21, %v50
  %v80 = vmax.f32 %v22, %v51
  %v81 = vmax.f32 %v23, %v52
  %v82 = vmax.f32 %v24, %v53
  %v83 = vmax.f32 %v25, %v54
  %v84 = vmax.f32 %v26, %v55
  %v85 = vmax.f32 %v27, %v56
  %v86 = vmax.f32 %v28, %v57
  %v87 = vmax.f32 %v29, %v58
  %v88 = vmax.f32 %v30, %v59
  %v89 = vmax.f32 %v31, %v60
  %v90 = vmax.f32 %v32, %v61
  %v91 = vmax.f32 %v33, %v62
  %v92 = vmax.f32 %v34, %v63
  %v93 = vmax.f32 %v35, %v64
  %v94 = vmax.f32 %v36, %v65
  %v95 = vmax.f32 %v37, %v66
  %v96 = vmax.f32 %v38, %v67
  %v97 = vmax.f32 %v39, %v68
  %v98 = vmax.f32 %v40, %v69
  %v99 = vmax.f32 %v41, %v70
  %v100 = vmax.f32 %v42, %v71
  %v101 = vmax.f32 %v43, %v72
  %v102 = vmax.f32 %v44, %v73
  %v103 = vmax.f32 %v45, %v74
  %v104 = vld [vmem:[%s2] sm:$0xff]
  %v105 = vld [vmem:[%s2 + $0x8] sm:$0xff]
  %v106 = vld [vmem:[%s2 + $0x10] sm:$0xff]
  %v107 = vld [vmem:[%s2 + $0x18] sm:$0xff]
  %v108 = vld [vmem:[%s2 + $0x20] sm:$0xff]
  %v109 = vld [vmem:[%s2 + $0x28] sm:$0xff]
  %v110 = vld [vmem:[%s2 + $0x30] sm:$0xff]
  %v111 = vld [vmem:[%s2 + $0x38] sm:$0xff]
  %v112 = vld [vmem:[%s2 + $0x40] sm:$0xff]
  %v113 = vld [vmem:[%s2 + $0x48] sm:$0xff]
  %v114 = vld [vmem:[%s2 + $0x50] sm:$0xff]
  %v115 = vld [vmem:[%s2 + $0x58] sm:$0xff]
  %v116 = vld [vmem:[%s2 + $0x60] sm:$0xff]
  %v117 = vld [vmem:[%s2 + $0x68] sm:$0xff]
  %v118 = vld [vmem:[%s2 + $0x70] sm:$0xff]
  %v119 = vld [vmem:[%s2 + $0x78] sm:$0xff]
  %v120 = vld [vmem:[%s2 + $0x80] sm:$0xff]
  %v121 = vld [vmem:[%s2 + $0x88] sm:$0xff]
  %v122 = vld [vmem:[%s2 + $0x90] sm:$0xff]
  %v123 = vld [vmem:[%s2 + $0x98] sm:$0xff]
  %v124 = vld [vmem:[%s2 + $0xa0] sm:$0xff]
  %v125 = vld [vmem:[%s2 + $0xa8] sm:$0xff]
  %v126 = vld [vmem:[%s2 + $0xb0] sm:$0xff]
  %v127 = vld [vmem:[%s2 + $0xb8] sm:$0xff]
  %v128 = vld [vmem:[%s2 + $0xc0] sm:$0xff]
  %v129 = vld [vmem:[%s2 + $0xc8] sm:$0xff]
  %v130 = vld [vmem:[%s2 + $0xd0] sm:$0xff]
  %v131 = vld [vmem:[%s2 + $0xd8] sm:$0xff]
  %v132 = vld [vmem:[%s2 + $0xe0] sm:$0xff]
  %v133 = vld [vmem:[%s3] sm:$0xff]
  %v134 = vld [vmem:[%s3 + $0x8] sm:$0xff]
  %v135 = vld [vmem:[%s3 + $0x10] sm:$0xff]
  %v136 = vld [vmem:[%s3 + $0x18] sm:$0xff]
  %v137 = vld [vmem:[%s3 + $0x20] sm:$0xff]
  %v138 = vld [vmem:[%s3 + $0x28] sm:$0xff]
  %v139 = vld [vmem:[%s3 + $0x30] sm:$0xff]
  %v140 = vld [vmem:[%s3 + $0x38] sm:$0xff]
  %v141 = vld [vmem:[%s3 + $0x40] sm:$0xff]
  %v142 = vld [vmem:[%s3 + $0x48] sm:$0xff]
  %v143 = vld [vmem:[%s3 + $0x50] sm:$0xff]
  %v144 = vld [vmem:[%s3 + $0x58] sm:$0xff]
  %v145 = vld [vmem:[%s3 + $0x60] sm:$0xff]
  %v146 = vld [vmem:[%s3 + $0x68] sm:$0xff]
  %v147 = vld [vmem:[%s3 + $0x70] sm:$0xff]
  %v148 = vld [vmem:[%s3 + $0x78] sm:$0xff]
  %v149 = vld [vmem:[%s3 + $0x80] sm:$0xff]
  %v150 = vld [vmem:[%s3 + $0x88] sm:$0xff]
  %v151 = vld [vmem:[%s3 + $0x90] sm:$0xff]
  %v152 = vld [vmem:[%s3 + $0x98] sm:$0xff]
  %v153 = vld [vmem:[%s3 + $0xa0] sm:$0xff]
  %v154 = vld [vmem:[%s3 + $0xa8] sm:$0xff]
  %v155 = vld [vmem:[%s3 + $0xb0] sm:$0xff]
  %v156 = vld [vmem:[%s3 + $0xb8] sm:$0xff]
  %v157 = vld [vmem:[%s3 + $0xc0] sm:$0xff]
  %v158 = vld [vmem:[%s3 + $0xc8] sm:$0xff]
  %v159 = vld [vmem:[%s3 + $0xd0] sm:$0xff]
  %v160 = vld [vmem:[%s3 + $0xd8] sm:$0xff]
  %v161 = vld [vmem:[%s3 + $0xe0] sm:$0xff]
  %v162 = vmax.f32 %v104, %v133
  %v163 = vmax.f32 %v105, %v134
  %v164 = vmax.f32 %v106, %v135
  %v165 = vmax.f32 %v107, %v136
  %v166 = vmax.f32 %v108, %v137
  %v167 = vmax.f32 %v109, %v138
  %v168 = vmax.f32 %v110, %v139
  %v169 = vmax.f32 %v111, %v140
  %v170 = vmax.f32 %v112, %v141
  %v171 = vmax.f32 %v113, %v142
  %v172 = vmax.f32 %v114, %v143
  %v173 = vmax.f32 %v115, %v144
  %v174 = vmax.f32 %v116, %v145
  %v175 = vmax.f32 %v117, %v146
  %v176 = vmax.f32 %v118, %v147
  %v177 = vmax.f32 %v119, %v148
  %v178 = vmax.f32 %v120, %v149
  %v179 = vmax.f32 %v121, %v150
  %v180 = vmax.f32 %v122, %v151
  %v181 = vmax.f32 %v123, %v152
  %v182 = vmax.f32 %v124, %v153
  %v183 = vmax.f32 %v125, %v154
  %v184 = vmax.f32 %v126, %v155
  %v185 = vmax.f32 %v127, %v156
  %v186 = vmax.f32 %v128, %v157
  %v187 = vmax.f32 %v129, %v158
  %v188 = vmax.f32 %v130, %v159
  %v189 = vmax.f32 %v131, %v160
  %v190 = vmax.f32 %v132, %v161
  %v191 = vmax.f32 %v75, %v162
  %v192 = vmax.f32 %v76, %v163
  %v193 = vmax.f32 %v77, %v164
  %v194 = vmax.f32 %v78, %v165
  %v195 = vmax.f32 %v79, %v166
  %v196 = vmax.f32 %v80, %v167
  %v197 = vmax.f32 %v81, %v168
  %v198 = vmax.f32 %v82, %v169
  %v199 = vmax.f32 %v83, %v170
  %v200 = vmax.f32 %v84, %v171
  %v201 = vmax.f32 %v85, %v172
  %v202 = vmax.f32 %v86, %v173
  %v203 = vmax.f32 %v87, %v174
  %v204 = vmax.f32 %v88, %v175
  %v205 = vmax.f32 %v89, %v176
  %v206 = vmax.f32 %v90, %v177
  %v207 = vmax.f32 %v91, %v178
  %v208 = vmax.f32 %v92, %v179
  %v209 = vmax.f32 %v93, %v180
  %v210 = vmax.f32 %v94, %v181
  %v211 = vmax.f32 %v95, %v182
  %v212 = vmax.f32 %v96, %v183
  %v213 = vmax.f32 %v97, %v184
  %v214 = vmax.f32 %v98, %v185
  %v215 = vmax.f32 %v99, %v186
  %v216 = vmax.f32 %v100, %v187
  %v217 = vmax.f32 %v101, %v188
  %v218 = vmax.f32 %v102, %v189
  %v219 = vmax.f32 %v103, %v190
  %220 = vst [vmem:[%s4] sm:$0xff] %v191
  %221 = vst [vmem:[%s4 + $0x8] sm:$0xff] %v192
  %222 = vst [vmem:[%s4 + $0x10] sm:$0xff] %v193
  %223 = vst [vmem:[%s4 + $0x18] sm:$0xff] %v194
  %224 = vst [vmem:[%s4 + $0x20] sm:$0xff] %v195
  %225 = vst [vmem:[%s4 + $0x28] sm:$0xff] %v196
  %226 = vst [vmem:[%s4 + $0x30] sm:$0xff] %v197
  %227 = vst [vmem:[%s4 + $0x38] sm:$0xff] %v198
  %228 = vst [vmem:[%s4 + $0x40] sm:$0xff] %v199
  %229 = vst [vmem:[%s4 + $0x48] sm:$0xff] %v200
  %230 = vst [vmem:[%s4 + $0x50] sm:$0xff] %v201
  %231 = vst [vmem:[%s4 + $0x58] sm:$0xff] %v202
  %232 = vst [vmem:[%s4 + $0x60] sm:$0xff] %v203
  %233 = vst [vmem:[%s4 + $0x68] sm:$0xff] %v204
  %234 = vst [vmem:[%s4 + $0x70] sm:$0xff] %v205
  %235 = vst [vmem:[%s4 + $0x78] sm:$0xff] %v206
  %236 = vst [vmem:[%s4 + $0x80] sm:$0xff] %v207
  %237 = vst [vmem:[%s4 + $0x88] sm:$0xff] %v208
  %238 = vst [vmem:[%s4 + $0x90] sm:$0xff] %v209
  %239 = vst [vmem:[%s4 + $0x98] sm:$0xff] %v210
  %240 = vst [vmem:[%s4 + $0xa0] sm:$0xff] %v211
  %241 = vst [vmem:[%s4 + $0xa8] sm:$0xff] %v212
  %242 = vst [vmem:[%s4 + $0xb0] sm:$0xff] %v213
  %243 = vst [vmem:[%s4 + $0xb8] sm:$0xff] %v214
  %244 = vst [vmem:[%s4 + $0xc0] sm:$0xff] %v215
  %245 = vst [vmem:[%s4 + $0xc8] sm:$0xff] %v216
  %246 = vst [vmem:[%s4 + $0xd0] sm:$0xff] %v217
  %247 = vst [vmem:[%s4 + $0xd8] sm:$0xff] %v218
  %248 = vst [vmem:[%s4 + $0xe0] sm:$0xff] %v219
  // Predicated region
  $region18: #{encoder_forward.10} parent=0 // pred_check
    _
  $region19: #{encoder_forward.10} parent=0 // pred_check_branch
    %250 = sbr.rel (0) target = $region21
  $region20: #{encoder_forward.10} parent=0 // pred_region
    _
  $region21: #{encoder_forward.10} parent=0 // pred_fallthru
    _
  // Predicated region
  $region22: #{encoder_forward.10} parent=0 // pred_check
    _
  $region23: #{encoder_forward.10} parent=0 // pred_check_branch
    %252 = sbr.rel (0) target = $region25
  $region24: #{encoder_forward.10} parent=0 // pred_region
    _
  $region25: #{encoder_forward.10} parent=0 // pred_fallthru
    _

// kernel: encoder_forward.11
$region0: #{encoder_forward.11}
  #allocation0 [shape = 'u32[]', space=smem, size = 0x4, offset = 0x4, fixed_abs, tag = 'smem constant byte address 0x4 - core index']
  #allocation1 [shape = 'u32[72,128]{1,0:T(1,128)}', space=vmem, size = 0x9000, scoped, tag = 'internal scratch']
  %s0 = inlined_call_operand.vmem [shape: f32[32,144], index: 0, kind: input, shape index: {}]
  %s1 = inlined_call_operand.vmem [shape: f32[144,2048], index: 1, kind: input, shape index: {}]
  %s2 = inlined_call_operand.vmem [shape: f32[32,1], index: 2, kind: input, shape index: {}]
  %s3 = inlined_call_operand.vmem [shape: f32[32,2048], index: 3, kind: output, shape index: {}]
  %s4 = sld [smem:[#allocation0]]
  $region87: #{encoder_forward.11} parent=0
    _
  %s6 = ssub.s32 1, %s4
  %s7 = scalar_select 0, %s6, %s4
  $region1: #{encoder_forward.11} parent=0
    #allocation2 [shape = 'u8[589824]{0}', space=vmem, size = 0x90000, scoped, tag = 'input window, operand 1']
    #allocation3 [shape = 'u8[131072]{0}', space=vmem, size = 0x20000, scoped, tag = 'output window, operand 0']
    loop: start=0, step=1, limit=6
    $region2: #{encoder_forward.11} parent=1 // loop_pre_header
      _
    $region3: #{encoder_forward.11} parent=1 // loop_header
      %s9 = sphi 0, %s13
      %p10 = scmp.ge.s32.totalorder %s9, 6
      %s17 = sphi 0, %s17
      %s19 = sphi 0, %s17
      %s20 = sphi 0, %s19
      %s34 = sphi 0, %s20
      %s40 = sphi 0, %s42
      %s43 = sphi 0, %s40
      %s44 = sphi 0, %s43
      %s60 = sphi 0, %s44
      %s64 = sphi 0, %s64
      %s66 = sphi 0, %s64
      %s67 = sphi 0, %s66
      %s81 = sphi 0, %s67
      %s87 = sphi 0, %s89
      %s90 = sphi 0, %s87
      %s91 = sphi 0, %s90
      %s107 = sphi 0, %s91
    $region4: #{encoder_forward.11} parent=1 // loop_header_branch
      %12 = sbr.rel (%p10) target = $region8
    $region5: #{encoder_forward.11} parent=1 // loop_body
      %s14 = ssub.s32 %s9, 1
      %s15 = ssub.s32 %s9, 2
      %s16 = sadd.s32 %s9, 1
      %s18 = sadd.s32 %s17, 1
      %p21 = scmp.eq.s32.totalorder %s9, 3
      %p22 = scmp.ne.s32.totalorder %s17, %s19
      %p23 = scmp.eq.s32.totalorder %s9, 0
      %p24 = por %p22, %p23
      %p25 = scmp.ne.s32.totalorder %s17, %s19
      %p26 = scmp.eq.s32.totalorder %s14, 3
      %p27 = por %p25, %p26
      %p28 = scmp.ne.s32.totalorder %s19, %s20
      %p29 = scmp.eq.s32.totalorder %s14, 0
      %p30 = por %p28, %p29
      %p31 = scmp.ne.s32.totalorder %s19, %s20
      %p32 = scmp.eq.s32.totalorder %s15, 3
      %p33 = por %p31, %p32
      %p35 = scmp.ne.s32.totalorder %s20, %s34
      %p36 = scmp.eq.s32.totalorder %s15, 0
      %p37 = por %p35, %p36
      %s38 = ssub.s32 %s9, %s16
      %p39 = scmp.eq.s32.totalorder %s38, 0
      %s41 = sadd.s32 %s40, 1
      %s42 = scalar_select %p39, %s40, %s41
      %p45 = pneg %p39
      %p46 = scmp.eq.s32.totalorder %s9, 3
      %p47 = por %p45, %p46
      %p48 = scmp.ne.s32.totalorder %s40, %s43
      %p49 = scmp.eq.s32.totalorder %s9, 0
      %p50 = por %p48, %p49
      %p51 = scmp.ne.s32.totalorder %s40, %s43
      %p52 = scmp.eq.s32.totalorder %s14, 3
      %p53 = por %p51, %p52
      %p54 = scmp.ne.s32.totalorder %s43, %s44
      %p55 = scmp.eq.s32.totalorder %s14, 0
      %p56 = por %p54, %p55
      %p57 = scmp.ne.s32.totalorder %s43, %s44
      %p58 = scmp.eq.s32.totalorder %s15, 3
      %p59 = por %p57, %p58
      %p61 = scmp.ne.s32.totalorder %s44, %s60
      %p62 = scmp.eq.s32.totalorder %s15, 0
      %p63 = por %p61, %p62
      %s65 = sadd.s32 %s64, 1
      %p68 = scmp.eq.s32.totalorder %s9, 3
      %p69 = scmp.ne.s32.totalorder %s64, %s66
      %p70 = scmp.eq.s32.totalorder %s9, 0
      %p71 = por %p69, %p70
      %p72 = scmp.ne.s32.totalorder %s64, %s66
      %p73 = scmp.eq.s32.totalorder %s14, 3
      %p74 = por %p72, %p73
      %p75 = scmp.ne.s32.totalorder %s66, %s67
      %p76 = scmp.eq.s32.totalorder %s14, 0
      %p77 = por %p75, %p76
      %p78 = scmp.ne.s32.totalorder %s66, %s67
      %p79 = scmp.eq.s32.totalorder %s15, 3
      %p80 = por %p78, %p79
      %p82 = scmp.ne.s32.totalorder %s67, %s81
      %p83 = scmp.eq.s32.totalorder %s15, 0
      %p84 = por %p82, %p83
      %s85 = ssub.s32 %s9, %s16
      %p86 = scmp.eq.s32.totalorder %s85, 0
      %s88 = sadd.s32 %s87, 1
      %s89 = scalar_select %p86, %s87, %s88
      %p92 = pneg %p86
      %p93 = scmp.eq.s32.totalorder %s9, 3
      %p94 = por %p92, %p93
      %p95 = scmp.ne.s32.totalorder %s87, %s90
      %p96 = scmp.eq.s32.totalorder %s9, 0
      %p97 = por %p95, %p96
      %p98 = scmp.ne.s32.totalorder %s87, %s90
      %p99 = scmp.eq.s32.totalorder %s14, 3
      %p100 = por %p98, %p99
      %p101 = scmp.ne.s32.totalorder %s90, %s91
      %p102 = scmp.eq.s32.totalorder %s14, 0
      %p103 = por %p101, %p102
      %p104 = scmp.ne.s32.totalorder %s90, %s91
      %p105 = scmp.eq.s32.totalorder %s15, 3
      %p106 = por %p104, %p105
      %p108 = scmp.ne.s32.totalorder %s91, %s107
      %p109 = scmp.eq.s32.totalorder %s15, 0
      %p110 = por %p108, %p109
      %p111 = scmp.le.s32.totalorder 1, %s9
      %p112 = scmp.lt.s32.totalorder %s9, 5
      %p113 = pnand %p111, %p112
      %p114 = pneg %p113
      // Predicated region
      $region9: #{encoder_forward.11} parent=5 // pred_check
        _
      $region10: #{encoder_forward.11} parent=5 // pred_check_branch
        %116 = sbr.rel (%p113) target = $region12
      $region11: #{encoder_forward.11} parent=5 // pred_region
        %s117 = ssub.s32 %s9, 1
        // Predicated region
        $region13: #{encoder_forward.11} parent=11 // pred_check
          %p118 = pneg %p30
        $region14: #{encoder_forward.11} parent=11 // pred_check_branch
          %120 = sbr.rel (%p118) target = $region16
        $region15: #{encoder_forward.11} parent=11 // pred_region
          _
        $region16: #{encoder_forward.11} parent=11 // pred_fallthru
          _
        // Predicated region
        $region17: #{encoder_forward.11} parent=11 // pred_check
          %p121 = pneg %p77
        $region18: #{encoder_forward.11} parent=11 // pred_check_branch
          %123 = sbr.rel (%p121) target = $region20
        $region19: #{encoder_forward.11} parent=11 // pred_region
          _
        $region20: #{encoder_forward.11} parent=11 // pred_fallthru
          _
      $region12: #{encoder_forward.11} parent=5 // pred_fallthru
        _
      %p124 = scmp.lt.s32.totalorder %s9, 4
      // Predicated region
      $region21: #{encoder_forward.11} parent=5 // pred_check
        %p125 = pneg %p124
      $region22: #{encoder_forward.11} parent=5 // pred_check_branch
        %127 = sbr.rel (%p125) target = $region24
      $region23: #{encoder_forward.11} parent=5 // pred_region
        // Predicated region
        $region25: #{encoder_forward.11} parent=23 // pred_check
          %p128 = pneg %p50
        $region26: #{encoder_forward.11} parent=23 // pred_check_branch
          %130 = sbr.rel (%p128) target = $region28
        $region27: #{encoder_forward.11} parent=23 // pred_region
          %s131 = sand.u32 %s40, 1
          %s132 = sand.u32 %s40, 1
          %s133 = smul.addr %s132, 576
          %s134 = scalar_lea.vmem [#allocation2], %s133
          %s135 = smul.u32 4, %s9
          %s136 = smul.addr %s135, 8
          %s137 = scalar_lea.vmem %s1, %s136
          // Predicated region
          $region29: #{encoder_forward.11} parent=27 // pred_check
            _
          $region30: #{encoder_forward.11} parent=27 // pred_check_branch
            %139 = sbr.rel (0) target = $region32
          $region31: #{encoder_forward.11} parent=27 // pred_region
            // Predicated region
            $region33: #{encoder_forward.11} parent=31 // pred_check
              _
            $region34: #{encoder_forward.11} parent=31 // pred_check_branch
              %141 = sbr.rel (0) target = $region36
            $region35: #{encoder_forward.11} parent=31 // pred_region
              loop: start=0, step=1, limit=1
              $region37: #{encoder_forward.11} parent=35 // loop_pre_header
                _
              $region38: #{encoder_forward.11} parent=35 // loop_header
                %s143 = sphi 0, %s147
                %p144 = scmp.ge.s32.totalorder %s143, 1
                %s148 = sphi %s137, %s137
                %s149 = sphi %s134, %s134
              $region39: #{encoder_forward.11} parent=35 // loop_header_branch
                %146 = sbr.rel (%p144) target = $region43
              $region40: #{encoder_forward.11} parent=35 // loop_body
                %v150 = vld [vmem:[%s148] sm:$0xff]
                %151 = vst [vmem:[%s149] sm:$0xff] %v150
                %v152 = vld [vmem:[%s148 + $0x8] sm:$0xff]
                %153 = vst [vmem:[%s149 + $0x8] sm:$0xff] %v152
                %v154 = vld [vmem:[%s148 + $0x10] sm:$0xff]
                %155 = vst [vmem:[%s149 + $0x10] sm:$0xff] %v154
                %v156 = vld [vmem:[%s148 + $0x18] sm:$0xff]
                %157 = vst [vmem:[%s149 + $0x18] sm:$0xff] %v156
                %v158 = vld [vmem:[%s148 + $0x80] sm:$0xff]
                %159 = vst [vmem:[%s149 + $0x20] sm:$0xff] %v158
                %v160 = vld [vmem:[%s148 + $0x88] sm:$0xff]
                %161 = vst [vmem:[%s149 + $0x28] sm:$0xff] %v160
                %v162 = vld [vmem:[%s148 + $0x90] sm:$0xff]
                %163 = vst [vmem:[%s149 + $0x30] sm:$0xff] %v162
                %v164 = vld [vmem:[%s148 + $0x98] sm:$0xff]
                %165 = vst [vmem:[%s149 + $0x38] sm:$0xff] %v164
                %v166 = vld [vmem:[%s148 + $0x100] sm:$0xff]
                %167 = vst [vmem:[%s149 + $0x40] sm:$0xff] %v166
                %v168 = vld [vmem:[%s148 + $0x108] sm:$0xff]
                %169 = vst [vmem:[%s149 + $0x48] sm:$0xff] %v168
                %v170 = vld [vmem:[%s148 + $0x110] sm:$0xff]
                %171 = vst [vmem:[%s149 + $0x50] sm:$0xff] %v170
                %v172 = vld [vmem:[%s148 + $0x118] sm:$0xff]
                %173 = vst [vmem:[%s149 + $0x58] sm:$0xff] %v172
                %v174 = vld [vmem:[%s148 + $0x180] sm:$0xff]
                %175 = vst [vmem:[%s149 + $0x60] sm:$0xff] %v174
                %v176 = vld [vmem:[%s148 + $0x188] sm:$0xff]
                %177 = vst [vmem:[%s149 + $0x68] sm:$0xff] %v176
                %v178 = vld [vmem:[%s148 + $0x190] sm:$0xff]
                %179 = vst [vmem:[%s149 + $0x70] sm:$0xff] %v178
                %v180 = vld [vmem:[%s148 + $0x198] sm:$0xff]
                %181 = vst [vmem:[%s149 + $0x78] sm:$0xff] %v180
                %v182 = vld [vmem:[%s148 + $0x200] sm:$0xff]
                %183 = vst [vmem:[%s149 + $0x80] sm:$0xff] %v182
                %v184 = vld [vmem:[%s148 + $0x208] sm:$0xff]
                %185 = vst [vmem:[%s149 + $0x88] sm:$0xff] %v184
                %v186 = vld [vmem:[%s148 + $0x210] sm:$0xff]
                %187 = vst [vmem:[%s149 + $0x90] sm:$0xff] %v186
                %v188 = vld [vmem:[%s148 + $0x218] sm:$0xff]
                %189 = vst [vmem:[%s149 + $0x98] sm:$0xff] %v188
                %v190 = vld [vmem:[%s148 + $0x280] sm:$0xff]
                %191 = vst [vmem:[%s149 + $0xa0] sm:$0xff] %v190
                %v192 = vld [vmem:[%s148 + $0x288] sm:$0xff]
                %193 = vst [vmem:[%s149 + $0xa8] sm:$0xff] %v192
                %v194 = vld [vmem:[%s148 + $0x290] sm:$0xff]
                %195 = vst [vmem:[%s149 + $0xb0] sm:$0xff] %v194
                %v196 = vld [vmem:[%s148 + $0x298] sm:$0xff]
                %197 = vst [vmem:[%s149 + $0xb8] sm:$0xff] %v196
                %v198 = vld [vmem:[%s148 + $0x300] sm:$0xff]
                %199 = vst [vmem:[%s149 + $0xc0] sm:$0xff] %v198
                %v200 = vld [vmem:[%s148 + $0x308] sm:$0xff]
                %201 = vst [vmem:[%s149 + $0xc8] sm:$0xff] %v200
                %v202 = vld [vmem:[%s148 + $0x310] sm:$0xff]
                %203 = vst [vmem:[%s149 + $0xd0] sm:$0xff] %v202
                %v204 = vld [vmem:[%s148 + $0x318] sm:$0xff]
                %205 = vst [vmem:[%s149 + $0xd8] sm:$0xff] %v204
                %v206 = vld [vmem:[%s148 + $0x380] sm:$0xff]
                %207 = vst [vmem:[%s149 + $0xe0] sm:$0xff] %v206
                %v208 = vld [vmem:[%s148 + $0x388] sm:$0xff]
                %209 = vst [vmem:[%s149 + $0xe8] sm:$0xff] %v208
                %v210 = vld [vmem:[%s148 + $0x390] sm:$0xff]
                %211 = vst [vmem:[%s149 + $0xf0] sm:$0xff] %v210
                %v212 = vld [vmem:[%s148 + $0x398] sm:$0xff]
                %213 = vst [vmem:[%s149 + $0xf8] sm:$0xff] %v212
                %v214 = vld [vmem:[%s148 + $0x400] sm:$0xff]
                %215 = vst [vmem:[%s149 + $0x100] sm:$0xff] %v214
                %v216 = vld [vmem:[%s148 + $0x408] sm:$0xff]
                %217 = vst [vmem:[%s149 + $0x108] sm:$0xff] %v216
                %v218 = vld [vmem:[%s148 + $0x410] sm:$0xff]
                %219 = vst [vmem:[%s149 + $0x110] sm:$0xff] %v218
                %v220 = vld [vmem:[%s148 + $0x418] sm:$0xff]
                %221 = vst [vmem:[%s149 + $0x118] sm:$0xff] %v220
                %v222 = vld [vmem:[%s148 + $0x480] sm:$0xff]
                %223 = vst [vmem:[%s149 + $0x120] sm:$0xff] %v222
                %v224 = vld [vmem:[%s148 + $0x488] sm:$0xff]
                %225 = vst [vmem:[%s149 + $0x128] sm:$0xff] %v224
                %v226 = vld [vmem:[%s148 + $0x490] sm:$0xff]
                %227 = vst [vmem:[%s149 + $0x130] sm:$0xff] %v226
                %v228 = vld [vmem:[%s148 + $0x498] sm:$0xff]
                %229 = vst [vmem:[%s149 + $0x138] sm:$0xff] %v228
                %v230 = vld [vmem:[%s148 + $0x500] sm:$0xff]
                %231 = vst [vmem:[%s149 + $0x140] sm:$0xff] %v230
                %v232 = vld [vmem:[%s148 + $0x508] sm:$0xff]
                %233 = vst [vmem:[%s149 + $0x148] sm:$0xff] %v232
                %v234 = vld [vmem:[%s148 + $0x510] sm:$0xff]
                %235 = vst [vmem:[%s149 + $0x150] sm:$0xff] %v234
                %v236 = vld [vmem:[%s148 + $0x518] sm:$0xff]
                %237 = vst [vmem:[%s149 + $0x158] sm:$0xff] %v236
                %v238 = vld [vmem:[%s148 + $0x580] sm:$0xff]
                %239 = vst [vmem:[%s149 + $0x160] sm:$0xff] %v238
                %v240 = vld [vmem:[%s148 + $0x588] sm:$0xff]
                %241 = vst [vmem:[%s149 + $0x168] sm:$0xff] %v240
                %v242 = vld [vmem:[%s148 + $0x590] sm:$0xff]
                %243 = vst [vmem:[%s149 + $0x170] sm:$0xff] %v242
                %v244 = vld [vmem:[%s148 + $0x598] sm:$0xff]
                %245 = vst [vmem:[%s149 + $0x178] sm:$0xff] %v244
                %v246 = vld [vmem:[%s148 + $0x600] sm:$0xff]
                %247 = vst [vmem:[%s149 + $0x180] sm:$0xff] %v246
                %v248 = vld [vmem:[%s148 + $0x608] sm:$0xff]
                %249 = vst [vmem:[%s149 + $0x188] sm:$0xff] %v248
                %v250 = vld [vmem:[%s148 + $0x610] sm:$0xff]
                %251 = vst [vmem:[%s149 + $0x190] sm:$0xff] %v250
                %v252 = vld [vmem:[%s148 + $0x618] sm:$0xff]
                %253 = vst [vmem:[%s149 + $0x198] sm:$0xff] %v252
                %v254 = vld [vmem:[%s148 + $0x680] sm:$0xff]
                %255 = vst [vmem:[%s149 + $0x1a0] sm:$0xff] %v254
                %v256 = vld [vmem:[%s148 + $0x688] sm:$0xff]
                %257 = vst [vmem:[%s149 + $0x1a8] sm:$0xff] %v256
                %v258 = vld [vmem:[%s148 + $0x690] sm:$0xff]
                %259 = vst [vmem:[%s149 + $0x1b0] sm:$0xff] %v258
                %v260 = vld [vmem:[%s148 + $0x698] sm:$0xff]
                %261 = vst [vmem:[%s149 + $0x1b8] sm:$0xff] %v260
                %v262 = vld [vmem:[%s148 + $0x700] sm:$0xff]
                %263 = vst [vmem:[%s149 + $0x1c0] sm:$0xff] %v262
                %v264 = vld [vmem:[%s148 + $0x708] sm:$0xff]
                %265 = vst [vmem:[%s149 + $0x1c8] sm:$0xff] %v264
                %v266 = vld [vmem:[%s148 + $0x710] sm:$0xff]
                %267 = vst [vmem:[%s149 + $0x1d0] sm:$0xff] %v266
                %v268 = vld [vmem:[%s148 + $0x718] sm:$0xff]
                %269 = vst [vmem:[%s149 + $0x1d8] sm:$0xff] %v268
                %v270 = vld [vmem:[%s148 + $0x780] sm:$0xff]
                %271 = vst [vmem:[%s149 + $0x1e0] sm:$0xff] %v270
                %v272 = vld [vmem:[%s148 + $0x788] sm:$0xff]
                %273 = vst [vmem:[%s149 + $0x1e8] sm:$0xff] %v272
                %v274 = vld [vmem:[%s148 + $0x790] sm:$0xff]
                %275 = vst [vmem:[%s149 + $0x1f0] sm:$0xff] %v274
                %v276 = vld [vmem:[%s148 + $0x798] sm:$0xff]
                %277 = vst [vmem:[%s149 + $0x1f8] sm:$0xff] %v276
                %v278 = vld [vmem:[%s148 + $0x800] sm:$0xff]
                %279 = vst [vmem:[%s149 + $0x200] sm:$0xff] %v278
                %v280 = vld [vmem:[%s148 + $0x808] sm:$0xff]
                %281 = vst [vmem:[%s149 + $0x208] sm:$0xff] %v280
                %v282 = vld [vmem:[%s148 + $0x810] sm:$0xff]
                %283 = vst [vmem:[%s149 + $0x210] sm:$0xff] %v282
                %v284 = vld [vmem:[%s148 + $0x818] sm:$0xff]
                %285 = vst [vmem:[%s149 + $0x218] sm:$0xff] %v284
                %v286 = vld [vmem:[%s148 + $0x880] sm:$0xff]
                %287 = vst [vmem:[%s149 + $0x220] sm:$0xff] %v286
                %v288 = vld [vmem:[%s148 + $0x888] sm:$0xff]
                %289 = vst [vmem:[%s149 + $0x228] sm:$0xff] %v288
                %v290 = vld [vmem:[%s148 + $0x890] sm:$0xff]
                %291 = vst [vmem:[%s149 + $0x230] sm:$0xff] %v290
                %v292 = vld [vmem:[%s148 + $0x898] sm:$0xff]
                %293 = vst [vmem:[%s149 + $0x238] sm:$0xff] %v292
              $region41: #{encoder_forward.11} parent=35 // loop_footer
                %s147 = sadd.s32 1, %s143
              $region42: #{encoder_forward.11} parent=35 // loop_footer_branch
                %142 = sbr.rel target = $region38
              $region43: #{encoder_forward.11} parent=35 // loop_exit
                _
            $region36: #{encoder_forward.11} parent=31 // pred_fallthru
              _
            // Predicated region
            $region44: #{encoder_forward.11} parent=31 // pred_check
              _
            $region45: #{encoder_forward.11} parent=31 // pred_check_branch
              %295 = sbr.rel target = $region47
            $region46: #{encoder_forward.11} parent=31 // pred_region
              _
            $region47: #{encoder_forward.11} parent=31 // pred_fallthru
              _
          $region32: #{encoder_forward.11} parent=27 // pred_fallthru
            _
          %296 = vnop
        $region28: #{encoder_forward.11} parent=23 // pred_fallthru
          _
      $region24: #{encoder_forward.11} parent=5 // pred_fallthru
        _
      %p297 = scmp.le.s32.totalorder 1, %s9
      %p298 = scmp.lt.s32.totalorder %s9, 5
      %p299 = pnand %p297, %p298
      %p300 = pneg %p299
      // Predicated region
      $region48: #{encoder_forward.11} parent=5 // pred_check
        _
      $region49: #{encoder_forward.11} parent=5 // pred_check_branch
        %302 = sbr.rel (%p299) target = $region51
      $region50: #{encoder_forward.11} parent=5 // pred_region
        %s303 = ssub.s32 %s9, 1
        %s304 = sand.u32 %s43, 1
        %s305 = sand.u32 %s43, 1
        %s306 = smul.addr %s305, 576
        %s307 = scalar_lea.vmem [#allocation2], %s306
        // Predicated region
        $region52: #{encoder_forward.11} parent=50 // pred_check
          %p308 = pneg %p56
        $region53: #{encoder_forward.11} parent=50 // pred_check_branch
          %310 = sbr.rel (%p308) target = $region55
        $region54: #{encoder_forward.11} parent=50 // pred_region
          _
        $region55: #{encoder_forward.11} parent=50 // pred_fallthru
          _
        %p311 = pneg %p30
        %p312 = pneg %p27
        %s313 = sand.u32 %s43, 1
        %s314 = sand.u32 %s43, 1
        %s315 = smul.addr %s314, 576
        %s316 = scalar_lea.vmem [#allocation2], %s315
        %p317 = pneg %p56
        %p318 = pneg %p53
        %p319 = pneg %p77
        %p320 = pneg %p74
        %p321 = pneg %p103
        %p322 = pneg %p100
        %s323 = sand.u32 %s90, 1
        %s324 = sand.u32 %s90, 1
        %s325 = smul.addr %s324, 128
        %s326 = scalar_lea.vmem [#allocation3], %s325
        %s327 = smul.u32 4, %s14
        %s328 = smul.u32 4, %s14
        %v329 = vld [vmem:[%s0] sm:$0xff]
        %v330 = vld [vmem:[%s0 + $0x8] sm:$0xff]
        %v331 = vld [vmem:[%s0 + $0x10] sm:$0xff]
        %v332 = vld [vmem:[%s0 + $0x18] sm:$0xff]
        %v333 = vld [vmem:[%s0 + $0x20] sm:$0xff]
        %v334 = vld [vmem:[%s0 + $0x28] sm:$0xff]
        %v335 = vld [vmem:[%s0 + $0x30] sm:$0xff]
        %v336 = vld [vmem:[%s0 + $0x38] sm:$0xff]
        %v337 = vld [vmem:[%s307] sm:$0xff]
        %v338 = vld [vmem:[%s307 + $0x8] sm:$0xff]
        %v339 = vld [vmem:[%s307 + $0x10] sm:$0xff]
        %v340 = vld [vmem:[%s307 + $0x18] sm:$0xff]
        %v341 = vld [vmem:[%s307 + $0x20] sm:$0xff]
        %v342 = vld [vmem:[%s307 + $0x28] sm:$0xff]
        %v343 = vld [vmem:[%s307 + $0x30] sm:$0xff]
        %v344 = vld [vmem:[%s307 + $0x38] sm:$0xff]
        %v345 = vld [vmem:[%s307 + $0x40] sm:$0xff]
        %v346 = vld [vmem:[%s307 + $0x48] sm:$0xff]
        %v347 = vld [vmem:[%s307 + $0x50] sm:$0xff]
        %v348 = vld [vmem:[%s307 + $0x58] sm:$0xff]
        %v349 = vld [vmem:[%s307 + $0x60] sm:$0xff]
        %v350 = vld [vmem:[%s307 + $0x68] sm:$0xff]
        %v351 = vld [vmem:[%s307 + $0x70] sm:$0xff]
        %v352 = vld [vmem:[%s307 + $0x78] sm:$0xff]
        %v353 = vld [vmem:[%s307 + $0x80] sm:$0xff]
        %v354 = vld [vmem:[%s307 + $0x88] sm:$0xff]
        %v355 = vld [vmem:[%s307 + $0x90] sm:$0xff]
        %v356 = vld [vmem:[%s307 + $0x98] sm:$0xff]
        %v357 = vld [vmem:[%s307 + $0xa0] sm:$0xff]
        %v358 = vld [vmem:[%s307 + $0xa8] sm:$0xff]
        %v359 = vld [vmem:[%s307 + $0xb0] sm:$0xff]
        %v360 = vld [vmem:[%s307 + $0xb8] sm:$0xff]
        %v361 = vld [vmem:[%s307 + $0xc0] sm:$0xff]
        %v362 = vld [vmem:[%s307 + $0xc8] sm:$0xff]
        %v363 = vld [vmem:[%s307 + $0xd0] sm:$0xff]
        %v364 = vld [vmem:[%s307 + $0xd8] sm:$0xff]
        %v365 = vld [vmem:[%s307 + $0xe0] sm:$0xff]
        %v366 = vld [vmem:[%s307 + $0xe8] sm:$0xff]
        %v367 = vld [vmem:[%s307 + $0xf0] sm:$0xff]
        %v368 = vld [vmem:[%s307 + $0xf8] sm:$0xff]
        %v369 = vld [vmem:[%s307 + $0x100] sm:$0xff]
        %v370 = vld [vmem:[%s307 + $0x108] sm:$0xff]
        %v371 = vld [vmem:[%s307 + $0x110] sm:$0xff]
        %v372 = vld [vmem:[%s307 + $0x118] sm:$0xff]
        %v373 = vld [vmem:[%s307 + $0x120] sm:$0xff]
        %v374 = vld [vmem:[%s307 + $0x128] sm:$0xff]
        %v375 = vld [vmem:[%s307 + $0x130] sm:$0xff]
        %v376 = vld [vmem:[%s307 + $0x138] sm:$0xff]
        %v377 = vld [vmem:[%s307 + $0x140] sm:$0xff]
        %v378 = vld [vmem:[%s307 + $0x148] sm:$0xff]
        %v379 = vld [vmem:[%s307 + $0x150] sm:$0xff]
        %v380 = vld [vmem:[%s307 + $0x158] sm:$0xff]
        %v381 = vld [vmem:[%s307 + $0x160] sm:$0xff]
        %v382 = vld [vmem:[%s307 + $0x168] sm:$0xff]
        %v383 = vld [vmem:[%s307 + $0x170] sm:$0xff]
        %v384 = vld [vmem:[%s307 + $0x178] sm:$0xff]
        %v385 = vld [vmem:[%s307 + $0x180] sm:$0xff]
        %v386 = vld [vmem:[%s307 + $0x188] sm:$0xff]
        %v387 = vld [vmem:[%s307 + $0x190] sm:$0xff]
        %v388 = vld [vmem:[%s307 + $0x198] sm:$0xff]
        %v389 = vld [vmem:[%s307 + $0x1a0] sm:$0xff]
        %v390 = vld [vmem:[%s307 + $0x1a8] sm:$0xff]
        %v391 = vld [vmem:[%s307 + $0x1b0] sm:$0xff]
        %v392 = vld [vmem:[%s307 + $0x1b8] sm:$0xff]
        %v393 = vld [vmem:[%s307 + $0x1c0] sm:$0xff]
        %v394 = vld [vmem:[%s307 + $0x1c8] sm:$0xff]
        %v395 = vld [vmem:[%s307 + $0x1d0] sm:$0xff]
        %v396 = vld [vmem:[%s307 + $0x1d8] sm:$0xff]
        %v397 = vld [vmem:[%s307 + $0x1e0] sm:$0xff]
        %v398 = vld [vmem:[%s307 + $0x1e8] sm:$0xff]
        %v399 = vld [vmem:[%s307 + $0x1f0] sm:$0xff]
        %v400 = vld [vmem:[%s307 + $0x1f8] sm:$0xff]
        %v401 = vld [vmem:[%s307 + $0x200] sm:$0xff]
        %v402 = vld [vmem:[%s307 + $0x208] sm:$0xff]
        %v403 = vld [vmem:[%s307 + $0x210] sm:$0xff]
        %v404 = vld [vmem:[%s307 + $0x218] sm:$0xff]
        %v405 = vld [vmem:[%s307 + $0x220] sm:$0xff]
        %v406 = vld [vmem:[%s307 + $0x228] sm:$0xff]
        %v407 = vld [vmem:[%s307 + $0x230] sm:$0xff]
        %v408 = vld [vmem:[%s307 + $0x238] sm:$0xff]
        %v409 = vld [vmem:[%s2] sm:$0xff]
        %v410 = vld [vmem:[%s2 + $0x8] sm:$0xff]
        %v411 = vld [vmem:[%s2 + $0x10] sm:$0xff]
        %v412 = vld [vmem:[%s2 + $0x18] sm:$0xff]
        %414 = vset.pattern.permute.xlu0 0
        %415 = vperm.xlu0 %414, %v409
        %v416 = vpop.permute.xlu0 %415
        %419 = vset.pattern.permute.xlu0 0
        %420 = vperm.xlu0 %419, %v410
        %v421 = vpop.permute.xlu0 %420
        %424 = vset.pattern.permute.xlu0 0
        %425 = vperm.xlu0 %424, %v411
        %v426 = vpop.permute.xlu0 %425
        %429 = vset.pattern.permute.xlu0 0
        %430 = vperm.xlu0 %429, %v412
        %v431 = vpop.permute.xlu0 %430
        %vm433 = vcmask 130048
        %v435 = vsel %vm433, %v330, 0
        %v438 = vsel %vm433, %v332, 0
        %v441 = vsel %vm433, %v334, 0
        %v444 = vsel %vm433, %v336, 0
        %446 = vmatpush.msra.mxu0 %v397
        %447 = vmatpush.msra.mxu0 %v393
        %448 = vmatpush.msra.mxu0 %v389
        %449 = vmatpush.msra.mxu0 %v385
        %450 = vmatpush.msra.mxu0 %v381
        %451 = vmatpush.msra.mxu0 %v377
        %452 = vmatpush.msra.mxu0 %v373
        %453 = vmatpush.msra.mxu0 %v369
        %454 = vmatpush.msra.mxu0 %v365
        %455 = vmatpush.msra.mxu0 %v361
        %456 = vmatpush.msra.mxu0 %v357
        %457 = vmatpush.msra.mxu0 %v353
        %458 = vmatpush.msra.mxu0 %v349
        %459 = vmatpush.msra.mxu0 %v345
        %460 = vmatpush.msra.mxu0 %v341
        %461 = vmatpush.msra.mxu0 %v337
        %462 = vmatmul.f32.gmra.mxu0 %v329
        %v463 = vpop.f32.mrf.mxu0
        %v464 = vadd.f32 %v416, %v463
        %465 = vmatmul.f32.gmra.mxu0 %v331
        %v466 = vpop.f32.mrf.mxu0
        %v467 = vadd.f32 %v421, %v466
        %468 = vmatmul.f32.gmra.mxu0 %v333
        %v469 = vpop.f32.mrf.mxu0
        %v470 = vadd.f32 %v426, %v469
        %471 = vmatmul.f32.gmra.mxu0 %v335
        %v472 = vpop.f32.mrf.mxu0
        %v473 = vadd.f32 %v431, %v472
        %474 = vdwg.mxu0
        %475 = vmatpush.msra.mxu0 0.0
        %476 = vmatpush.msra.mxu0 0.0
        %477 = vmatpush.msra.mxu0 0.0
        %478 = vmatpush.msra.mxu0 0.0
        %479 = vmatpush.msra.mxu0 0.0
        %480 = vmatpush.msra.mxu0 0.0
        %481 = vmatpush.msra.mxu0 0.0
        %482 = vmatpush.msra.mxu0 0.0
        %483 = vmatpush.msra.mxu0 0.0
        %484 = vmatpush.msra.mxu0 0.0
        %485 = vmatpush.msra.mxu0 0.0
        %486 = vmatpush.msra.mxu0 0.0
        %487 = vmatpush.msra.mxu0 0.0
        %488 = vmatpush.msra.mxu0 0.0
        %489 = vmatpush.msra.mxu0 %v405
        %490 = vmatpush.msra.mxu0 %v401
        %491 = vmatmul.f32.gmra.mxu0 %v435
        %v492 = vpop.f32.mrf.mxu0
        %v493 = vadd.f32 %v464, %v492
        %494 = vmatmul.f32.gmra.mxu0 %v438
        %v495 = vpop.f32.mrf.mxu0
        %v496 = vadd.f32 %v467, %v495
        %497 = vmatmul.f32.gmra.mxu0 %v441
        %v498 = vpop.f32.mrf.mxu0
        %v499 = vadd.f32 %v470, %v498
        %500 = vmatmul.f32.gmra.mxu0 %v444
        %v501 = vpop.f32.mrf.mxu0
        %v502 = vadd.f32 %v473, %v501
        %503 = vdwg.mxu0
        %504 = vmatpush.msra.mxu0 %v398
        %505 = vmatpush.msra.mxu0 %v394
        %506 = vmatpush.msra.mxu0 %v390
        %507 = vmatpush.msra.mxu0 %v386
        %508 = vmatpush.msra.mxu0 %v382
        %509 = vmatpush.msra.mxu0 %v378
        %510 = vmatpush.msra.mxu0 %v374
        %511 = vmatpush.msra.mxu0 %v370
        %512 = vmatpush.msra.mxu0 %v366
        %513 = vmatpush.msra.mxu0 %v362
        %514 = vmatpush.msra.mxu0 %v358
        %515 = vmatpush.msra.mxu0 %v354
        %516 = vmatpush.msra.mxu0 %v350
        %517 = vmatpush.msra.mxu0 %v346
        %518 = vmatpush.msra.mxu0 %v342
        %519 = vmatpush.msra.mxu0 %v338
        %520 = vmatmul.f32.gmra.mxu0 %v329
        %v521 = vpop.f32.mrf.mxu0
        %v522 = vadd.f32 %v416, %v521
        %523 = vmatmul.f32.gmra.mxu0 %v331
        %v524 = vpop.f32.mrf.mxu0
        %v525 = vadd.f32 %v421, %v524
        %526 = vmatmul.f32.gmra.mxu0 %v333
        %v527 = vpop.f32.mrf.mxu0
        %v528 = vadd.f32 %v426, %v527
        %529 = vmatmul.f32.gmra.mxu0 %v335
        %v530 = vpop.f32.mrf.mxu0
        %v531 = vadd.f32 %v431, %v530
        %532 = vdwg.mxu0
        %533 = vmatpush.msra.mxu0 0.0
        %534 = vmatpush.msra.mxu0 0.0
        %535 = vmatpush.msra.mxu0 0.0
        %536 = vmatpush.msra.mxu0 0.0
        %537 = vmatpush.msra.mxu0 0.0
        %538 = vmatpush.msra.mxu0 0.0
        %539 = vmatpush.msra.mxu0 0.0
        %540 = vmatpush.msra.mxu0 0.0
        %541 = vmatpush.msra.mxu0 0.0
        %542 = vmatpush.msra.mxu0 0.0
        %543 = vmatpush.msra.mxu0 0.0
        %544 = vmatpush.msra.mxu0 0.0
        %545 = vmatpush.msra.mxu0 0.0
        %546 = vmatpush.msra.mxu0 0.0
        %547 = vmatpush.msra.mxu0 %v406
        %548 = vmatpush.msra.mxu0 %v402
        %549 = vmatmul.f32.gmra.mxu0 %v435
        %v550 = vpop.f32.mrf.mxu0
        %v551 = vadd.f32 %v522, %v550
        %552 = vmatmul.f32.gmra.mxu0 %v438
        %v553 = vpop.f32.mrf.mxu0
        %v554 = vadd.f32 %v525, %v553
        %555 = vmatmul.f32.gmra.mxu0 %v441
        %v556 = vpop.f32.mrf.mxu0
        %v557 = vadd.f32 %v528, %v556
        %558 = vmatmul.f32.gmra.mxu0 %v444
        %v559 = vpop.f32.mrf.mxu0
        %v560 = vadd.f32 %v531, %v559
        %561 = vdwg.mxu0
        %562 = vmatpush.msra.mxu0 %v399
        %563 = vmatpush.msra.mxu0 %v395
        %564 = vmatpush.msra.mxu0 %v391
        %565 = vmatpush.msra.mxu0 %v387
        %566 = vmatpush.msra.mxu0 %v383
        %567 = vmatpush.msra.mxu0 %v379
        %568 = vmatpush.msra.mxu0 %v375
        %569 = vmatpush.msra.mxu0 %v371
        %570 = vmatpush.msra.mxu0 %v367
        %571 = vmatpush.msra.mxu0 %v363
        %572 = vmatpush.msra.mxu0 %v359
        %573 = vmatpush.msra.mxu0 %v355
        %574 = vmatpush.msra.mxu0 %v351
        %575 = vmatpush.msra.mxu0 %v347
        %576 = vmatpush.msra.mxu0 %v343
        %577 = vmatpush.msra.mxu0 %v339
        %578 = vmatmul.f32.gmra.mxu0 %v329
        %v579 = vpop.f32.mrf.mxu0
        %v580 = vadd.f32 %v416, %v579
        %581 = vmatmul.f32.gmra.mxu0 %v331
        %v582 = vpop.f32.mrf.mxu0
        %v583 = vadd.f32 %v421, %v582
        %584 = vmatmul.f32.gmra.mxu0 %v333
        %v585 = vpop.f32.mrf.mxu0
        %v586 = vadd.f32 %v426, %v585
        %587 = vmatmul.f32.gmra.mxu0 %v335
        %v588 = vpop.f32.mrf.mxu0
        %v589 = vadd.f32 %v431, %v588
        %590 = vdwg.mxu0
        %591 = vmatpush.msra.mxu0 0.0
        %592 = vmatpush.msra.mxu0 0.0
        %593 = vmatpush.msra.mxu0 0.0
        %594 = vmatpush.msra.mxu0 0.0
        %595 = vmatpush.msra.mxu0 0.0
        %596 = vmatpush.msra.mxu0 0.0
        %597 = vmatpush.msra.mxu0 0.0
        %598 = vmatpush.msra.mxu0 0.0
        %599 = vmatpush.msra.mxu0 0.0
        %600 = vmatpush.msra.mxu0 0.0
        %601 = vmatpush.msra.mxu0 0.0
        %602 = vmatpush.msra.mxu0 0.0
        %603 = vmatpush.msra.mxu0 0.0
        %604 = vmatpush.msra.mxu0 0.0
        %605 = vmatpush.msra.mxu0 %v407
        %606 = vmatpush.msra.mxu0 %v403
        %607 = vmatmul.f32.gmra.mxu0 %v435
        %v608 = vpop.f32.mrf.mxu0
        %v609 = vadd.f32 %v580, %v608
        %610 = vmatmul.f32.gmra.mxu0 %v438
        %v611 = vpop.f32.mrf.mxu0
        %v612 = vadd.f32 %v583, %v611
        %613 = vmatmul.f32.gmra.mxu0 %v441
        %v614 = vpop.f32.mrf.mxu0
        %v615 = vadd.f32 %v586, %v614
        %616 = vmatmul.f32.gmra.mxu0 %v444
        %v617 = vpop.f32.mrf.mxu0
        %v618 = vadd.f32 %v589, %v617
        %619 = vdwg.mxu0
        %620 = vmatpush.msra.mxu0 %v400
        %621 = vmatpush.msra.mxu0 %v396
        %622 = vmatpush.msra.mxu0 %v392
        %623 = vmatpush.msra.mxu0 %v388
        %624 = vmatpush.msra.mxu0 %v384
        %625 = vmatpush.msra.mxu0 %v380
        %626 = vmatpush.msra.mxu0 %v376
        %627 = vmatpush.msra.mxu0 %v372
        %628 = vmatpush.msra.mxu0 %v368
        %629 = vmatpush.msra.mxu0 %v364
        %630 = vmatpush.msra.mxu0 %v360
        %631 = vmatpush.msra.mxu0 %v356
        %632 = vmatpush.msra.mxu0 %v352
        %633 = vmatpush.msra.mxu0 %v348
        %634 = vmatpush.msra.mxu0 %v344
        %635 = vmatpush.msra.mxu0 %v340
        %636 = vmatmul.f32.gmra.mxu0 %v329
        %v637 = vpop.f32.mrf.mxu0
        %v638 = vadd.f32 %v416, %v637
        %639 = vmatmul.f32.gmra.mxu0 %v331
        %v640 = vpop.f32.mrf.mxu0
        %v641 = vadd.f32 %v421, %v640
        %642 = vmatmul.f32.gmra.mxu0 %v333
        %v643 = vpop.f32.mrf.mxu0
        %v644 = vadd.f32 %v426, %v643
        %645 = vmatmul.f32.gmra.mxu0 %v335
        %v646 = vpop.f32.mrf.mxu0
        %v647 = vadd.f32 %v431, %v646
        %648 = vdwg.mxu0
        %649 = vmatpush.msra.mxu0 0.0
        %650 = vmatpush.msra.mxu0 0.0
        %651 = vmatpush.msra.mxu0 0.0
        %652 = vmatpush.msra.mxu0 0.0
        %653 = vmatpush.msra.mxu0 0.0
        %654 = vmatpush.msra.mxu0 0.0
        %655 = vmatpush.msra.mxu0 0.0
        %656 = vmatpush.msra.mxu0 0.0
        %657 = vmatpush.msra.mxu0 0.0
        %658 = vmatpush.msra.mxu0 0.0
        %659 = vmatpush.msra.mxu0 0.0
        %660 = vmatpush.msra.mxu0 0.0
        %661 = vmatpush.msra.mxu0 0.0
        %662 = vmatpush.msra.mxu0 0.0
        %663 = vmatpush.msra.mxu0 %v408
        %664 = vmatpush.msra.mxu0 %v404
        %665 = vmatmul.f32.gmra.mxu0 %v435
        %v666 = vpop.f32.mrf.mxu0
        %v667 = vadd.f32 %v638, %v666
        %668 = vmatmul.f32.gmra.mxu0 %v438
        %v669 = vpop.f32.mrf.mxu0
        %v670 = vadd.f32 %v641, %v669
        %671 = vmatmul.f32.gmra.mxu0 %v441
        %v672 = vpop.f32.mrf.mxu0
        %v673 = vadd.f32 %v644, %v672
        %674 = vmatmul.f32.gmra.mxu0 %v444
        %v675 = vpop.f32.mrf.mxu0
        %v676 = vadd.f32 %v647, %v675
        %677 = vdwg.mxu0
        %v678 = vmax.f32 %v493, 0.0
        %v679 = vmax.f32 %v551, 0.0
        %v680 = vmax.f32 %v609, 0.0
        %v681 = vmax.f32 %v667, 0.0
        %v682 = vmax.f32 %v496, 0.0
        %v683 = vmax.f32 %v554, 0.0
        %v684 = vmax.f32 %v612, 0.0
        %v685 = vmax.f32 %v670, 0.0
        %v686 = vmax.f32 %v499, 0.0
        %v687 = vmax.f32 %v557, 0.0
        %v688 = vmax.f32 %v615, 0.0
        %v689 = vmax.f32 %v673, 0.0
        %v690 = vmax.f32 %v502, 0.0
        %v691 = vmax.f32 %v560, 0.0
        %v692 = vmax.f32 %v618, 0.0
        %v693 = vmax.f32 %v676, 0.0
        %694 = vst [vmem:[%s326] sm:$0xff] %v678
        %695 = vst [vmem:[%s326 + $0x8] sm:$0xff] %v679
        %696 = vst [vmem:[%s326 + $0x10] sm:$0xff] %v680
        %697 = vst [vmem:[%s326 + $0x18] sm:$0xff] %v681
        %698 = vst [vmem:[%s326 + $0x20] sm:$0xff] %v682
        %699 = vst [vmem:[%s326 + $0x28] sm:$0xff] %v683
        %700 = vst [vmem:[%s326 + $0x30] sm:$0xff] %v684
        %701 = vst [vmem:[%s326 + $0x38] sm:$0xff] %v685
        %702 = vst [vmem:[%s326 + $0x40] sm:$0xff] %v686
        %703 = vst [vmem:[%s326 + $0x48] sm:$0xff] %v687
        %704 = vst [vmem:[%s326 + $0x50] sm:$0xff] %v688
        %705 = vst [vmem:[%s326 + $0x58] sm:$0xff] %v689
        %706 = vst [vmem:[%s326 + $0x60] sm:$0xff] %v690
        %707 = vst [vmem:[%s326 + $0x68] sm:$0xff] %v691
        %708 = vst [vmem:[%s326 + $0x70] sm:$0xff] %v692
        %709 = vst [vmem:[%s326 + $0x78] sm:$0xff] %v693
        %s710 = sand.u32 %s90, 1
        %s711 = sand.u32 %s90, 1
        %s712 = smul.addr %s711, 128
        %s713 = scalar_lea.vmem [#allocation3], %s712
        // Predicated region
        $region56: #{encoder_forward.11} parent=50 // pred_check
          %p714 = pneg %p100
        $region57: #{encoder_forward.11} parent=50 // pred_check_branch
          %716 = sbr.rel (%p714) target = $region59
        $region58: #{encoder_forward.11} parent=50 // pred_region
          %s717 = smul.u32 4, %s14
          %s718 = smul.addr %s717, 8
          %s719 = scalar_lea.vmem %s3, %s718
          // Predicated region
          $region60: #{encoder_forward.11} parent=58 // pred_check
            _
          $region61: #{encoder_forward.11} parent=58 // pred_check_branch
            %721 = sbr.rel (0) target = $region63
          $region62: #{encoder_forward.11} parent=58 // pred_region
            // Predicated region
            $region64: #{encoder_forward.11} parent=62 // pred_check
              _
            $region65: #{encoder_forward.11} parent=62 // pred_check_branch
              %723 = sbr.rel (0) target = $region67
            $region66: #{encoder_forward.11} parent=62 // pred_region
              loop: start=0, step=1, limit=1
              $region68: #{encoder_forward.11} parent=66 // loop_pre_header
                _
              $region69: #{encoder_forward.11} parent=66 // loop_header
                %s725 = sphi 0, %s729
                %p726 = scmp.ge.s32.totalorder %s725, 1
                %s730 = sphi %s713, %s713
                %s731 = sphi %s719, %s719
              $region70: #{encoder_forward.11} parent=66 // loop_header_branch
                %728 = sbr.rel (%p726) target = $region74
              $region71: #{encoder_forward.11} parent=66 // loop_body
                %v732 = vld [vmem:[%s730] sm:$0xff]
                %733 = vst [vmem:[%s731] sm:$0xff] %v732
                %v734 = vld [vmem:[%s730 + $0x8] sm:$0xff]
                %735 = vst [vmem:[%s731 + $0x8] sm:$0xff] %v734
                %v736 = vld [vmem:[%s730 + $0x10] sm:$0xff]
                %737 = vst [vmem:[%s731 + $0x10] sm:$0xff] %v736
                %v738 = vld [vmem:[%s730 + $0x18] sm:$0xff]
                %739 = vst [vmem:[%s731 + $0x18] sm:$0xff] %v738
                %v740 = vld [vmem:[%s730 + $0x20] sm:$0xff]
                %741 = vst [vmem:[%s731 + $0x80] sm:$0xff] %v740
                %v742 = vld [vmem:[%s730 + $0x28] sm:$0xff]
                %743 = vst [vmem:[%s731 + $0x88] sm:$0xff] %v742
                %v744 = vld [vmem:[%s730 + $0x30] sm:$0xff]
                %745 = vst [vmem:[%s731 + $0x90] sm:$0xff] %v744
                %v746 = vld [vmem:[%s730 + $0x38] sm:$0xff]
                %747 = vst [vmem:[%s731 + $0x98] sm:$0xff] %v746
                %v748 = vld [vmem:[%s730 + $0x40] sm:$0xff]
                %749 = vst [vmem:[%s731 + $0x100] sm:$0xff] %v748
                %v750 = vld [vmem:[%s730 + $0x48] sm:$0xff]
                %751 = vst [vmem:[%s731 + $0x108] sm:$0xff] %v750
                %v752 = vld [vmem:[%s730 + $0x50] sm:$0xff]
                %753 = vst [vmem:[%s731 + $0x110] sm:$0xff] %v752
                %v754 = vld [vmem:[%s730 + $0x58] sm:$0xff]
                %755 = vst [vmem:[%s731 + $0x118] sm:$0xff] %v754
                %v756 = vld [vmem:[%s730 + $0x60] sm:$0xff]
                %757 = vst [vmem:[%s731 + $0x180] sm:$0xff] %v756
                %v758 = vld [vmem:[%s730 + $0x68] sm:$0xff]
                %759 = vst [vmem:[%s731 + $0x188] sm:$0xff] %v758
                %v760 = vld [vmem:[%s730 + $0x70] sm:$0xff]
                %761 = vst [vmem:[%s731 + $0x190] sm:$0xff] %v760
                %v762 = vld [vmem:[%s730 + $0x78] sm:$0xff]
                %763 = vst [vmem:[%s731 + $0x198] sm:$0xff] %v762
              $region72: #{encoder_forward.11} parent=66 // loop_footer
                %s729 = sadd.s32 1, %s725
              $region73: #{encoder_forward.11} parent=66 // loop_footer_branch
                %724 = sbr.rel target = $region69
              $region74: #{encoder_forward.11} parent=66 // loop_exit
                _
            $region67: #{encoder_forward.11} parent=62 // pred_fallthru
              _
            // Predicated region
            $region75: #{encoder_forward.11} parent=62 // pred_check
              _
            $region76: #{encoder_forward.11} parent=62 // pred_check_branch
              %765 = sbr.rel target = $region78
            $region77: #{encoder_forward.11} parent=62 // pred_region
              _
            $region78: #{encoder_forward.11} parent=62 // pred_fallthru
              _
          $region63: #{encoder_forward.11} parent=58 // pred_fallthru
            _
          %766 = vnop
        $region59: #{encoder_forward.11} parent=50 // pred_fallthru
          _
      $region51: #{encoder_forward.11} parent=5 // pred_fallthru
        _
      %p767 = scmp.le.s32.totalorder 2, %s9
      // Predicated region
      $region79: #{encoder_forward.11} parent=5 // pred_check
        %p768 = pneg %p767
      $region80: #{encoder_forward.11} parent=5 // pred_check_branch
        %770 = sbr.rel (%p768) target = $region82
      $region81: #{encoder_forward.11} parent=5 // pred_region
        %s771 = ssub.s32 %s9, 2
        // Predicated region
        $region83: #{encoder_forward.11} parent=81 // pred_check
          %p772 = pneg %p106
        $region84: #{encoder_forward.11} parent=81 // pred_check_branch
          %774 = sbr.rel (%p772) target = $region86
        $region85: #{encoder_forward.11} parent=81 // pred_region
          %s775 = sand.u32 %s91, 1
          %s776 = sand.u32 %s91, 1
          %s777 = smul.addr %s776, 128
          %s778 = scalar_lea.vmem [#allocation3], %s777
        $region86: #{encoder_forward.11} parent=81 // pred_fallthru
          _
      $region82: #{encoder_forward.11} parent=5 // pred_fallthru
        _
    $region6: #{encoder_forward.11} parent=1 // loop_footer
      %s13 = sadd.s32 1, %s9
    $region7: #{encoder_forward.11} parent=1 // loop_footer_branch
      %8 = sbr.rel target = $region3
    $region8: #{encoder_forward.11} parent=1 // loop_exit
      _

// kernel: encoder_forward.12
$region0: #{encoder_forward.12}
  #allocation0 [shape = 'u32[]', space=smem, size = 0x4, offset = 0x4, fixed_abs, tag = 'smem constant byte address 0x4 - core index']
  #allocation1 [shape = 'u32[72,128]{1,0:T(1,128)}', space=vmem, size = 0x9000, scoped, tag = 'internal scratch']
  %s0 = inlined_call_operand.vmem [shape: f32[32,288], index: 0, kind: input, shape index: {}]
  %s1 = inlined_call_operand.vmem [shape: f32[288,1536], index: 1, kind: input, shape index: {}]
  %s2 = inlined_call_operand.vmem [shape: f32[32,1], index: 2, kind: input, shape index: {}]
  %s3 = inlined_call_operand.vmem [shape: f32[32,1536], index: 3, kind: output, shape index: {}]
  %s4 = sld [smem:[#allocation0]]
  $region87: #{encoder_forward.12} parent=0
    _
  %s6 = ssub.s32 1, %s4
  %s7 = scalar_select 0, %s6, %s4
  $region1: #{encoder_forward.12} parent=0
    #allocation2 [shape = 'u8[1179648]{0}', space=vmem, size = 0x120000, scoped, tag = 'input window, operand 1']
    #allocation3 [shape = 'u8[131072]{0}', space=vmem, size = 0x20000, scoped, tag = 'output window, operand 0']
    loop: start=0, step=1, limit=5
    $region2: #{encoder_forward.12} parent=1 // loop_pre_header
      _
    $region3: #{encoder_forward.12} parent=1 // loop_header
      %s9 = sphi 0, %s13
      %p10 = scmp.ge.s32.totalorder %s9, 5
      %s17 = sphi 0, %s17
      %s19 = sphi 0, %s17
      %s20 = sphi 0, %s19
      %s34 = sphi 0, %s20
      %s40 = sphi 0, %s42
      %s43 = sphi 0, %s40
      %s44 = sphi 0, %s43
      %s60 = sphi 0, %s44
      %s64 = sphi 0, %s64
      %s66 = sphi 0, %s64
      %s67 = sphi 0, %s66
      %s81 = sphi 0, %s67
      %s87 = sphi 0, %s89
      %s90 = sphi 0, %s87
      %s91 = sphi 0, %s90
      %s107 = sphi 0, %s91
    $region4: #{encoder_forward.12} parent=1 // loop_header_branch
      %12 = sbr.rel (%p10) target = $region8
    $region5: #{encoder_forward.12} parent=1 // loop_body
      %s14 = ssub.s32 %s9, 1
      %s15 = ssub.s32 %s9, 2
      %s16 = sadd.s32 %s9, 1
      %s18 = sadd.s32 %s17, 1
      %p21 = scmp.eq.s32.totalorder %s9, 2
      %p22 = scmp.ne.s32.totalorder %s17, %s19
      %p23 = scmp.eq.s32.totalorder %s9, 0
      %p24 = por %p22, %p23
      %p25 = scmp.ne.s32.totalorder %s17, %s19
      %p26 = scmp.eq.s32.totalorder %s14, 2
      %p27 = por %p25, %p26
      %p28 = scmp.ne.s32.totalorder %s19, %s20
      %p29 = scmp.eq.s32.totalorder %s14, 0
      %p30 = por %p28, %p29
      %p31 = scmp.ne.s32.totalorder %s19, %s20
      %p32 = scmp.eq.s32.totalorder %s15, 2
      %p33 = por %p31, %p32
      %p35 = scmp.ne.s32.totalorder %s20, %s34
      %p36 = scmp.eq.s32.totalorder %s15, 0
      %p37 = por %p35, %p36
      %s38 = ssub.s32 %s9, %s16
      %p39 = scmp.eq.s32.totalorder %s38, 0
      %s41 = sadd.s32 %s40, 1
      %s42 = scalar_select %p39, %s40, %s41
      %p45 = pneg %p39
      %p46 = scmp.eq.s32.totalorder %s9, 2
      %p47 = por %p45, %p46
      %p48 = scmp.ne.s32.totalorder %s40, %s43
      %p49 = scmp.eq.s32.totalorder %s9, 0
      %p50 = por %p48, %p49
      %p51 = scmp.ne.s32.totalorder %s40, %s43
      %p52 = scmp.eq.s32.totalorder %s14, 2
      %p53 = por %p51, %p52
      %p54 = scmp.ne.s32.totalorder %s43, %s44
      %p55 = scmp.eq.s32.totalorder %s14, 0
      %p56 = por %p54, %p55
      %p57 = scmp.ne.s32.totalorder %s43, %s44
      %p58 = scmp.eq.s32.totalorder %s15, 2
      %p59 = por %p57, %p58
      %p61 = scmp.ne.s32.totalorder %s44, %s60
      %p62 = scmp.eq.s32.totalorder %s15, 0
      %p63 = por %p61, %p62
      %s65 = sadd.s32 %s64, 1
      %p68 = scmp.eq.s32.totalorder %s9, 2
      %p69 = scmp.ne.s32.totalorder %s64, %s66
      %p70 = scmp.eq.s32.totalorder %s9, 0
      %p71 = por %p69, %p70
      %p72 = scmp.ne.s32.totalorder %s64, %s66
      %p73 = scmp.eq.s32.totalorder %s14, 2
      %p74 = por %p72, %p73
      %p75 = scmp.ne.s32.totalorder %s66, %s67
      %p76 = scmp.eq.s32.totalorder %s14, 0
      %p77 = por %p75, %p76
      %p78 = scmp.ne.s32.totalorder %s66, %s67
      %p79 = scmp.eq.s32.totalorder %s15, 2
      %p80 = por %p78, %p79
      %p82 = scmp.ne.s32.totalorder %s67, %s81
      %p83 = scmp.eq.s32.totalorder %s15, 0
      %p84 = por %p82, %p83
      %s85 = ssub.s32 %s9, %s16
      %p86 = scmp.eq.s32.totalorder %s85, 0
      %s88 = sadd.s32 %s87, 1
      %s89 = scalar_select %p86, %s87, %s88
      %p92 = pneg %p86
      %p93 = scmp.eq.s32.totalorder %s9, 2
      %p94 = por %p92, %p93
      %p95 = scmp.ne.s32.totalorder %s87, %s90
      %p96 = scmp.eq.s32.totalorder %s9, 0
      %p97 = por %p95, %p96
      %p98 = scmp.ne.s32.totalorder %s87, %s90
      %p99 = scmp.eq.s32.totalorder %s14, 2
      %p100 = por %p98, %p99
      %p101 = scmp.ne.s32.totalorder %s90, %s91
      %p102 = scmp.eq.s32.totalorder %s14, 0
      %p103 = por %p101, %p102
      %p104 = scmp.ne.s32.totalorder %s90, %s91
      %p105 = scmp.eq.s32.totalorder %s15, 2
      %p106 = por %p104, %p105
      %p108 = scmp.ne.s32.totalorder %s91, %s107
      %p109 = scmp.eq.s32.totalorder %s15, 0
      %p110 = por %p108, %p109
      %p111 = scmp.le.s32.totalorder 1, %s9
      %p112 = scmp.lt.s32.totalorder %s9, 4
      %p113 = pnand %p111, %p112
      %p114 = pneg %p113
      // Predicated region
      $region9: #{encoder_forward.12} parent=5 // pred_check
        _
      $region10: #{encoder_forward.12} parent=5 // pred_check_branch
        %116 = sbr.rel (%p113) target = $region12
      $region11: #{encoder_forward.12} parent=5 // pred_region
        %s117 = ssub.s32 %s9, 1
        // Predicated region
        $region13: #{encoder_forward.12} parent=11 // pred_check
          %p118 = pneg %p30
        $region14: #{encoder_forward.12} parent=11 // pred_check_branch
          %120 = sbr.rel (%p118) target = $region16
        $region15: #{encoder_forward.12} parent=11 // pred_region
          _
        $region16: #{encoder_forward.12} parent=11 // pred_fallthru
          _
        // Predicated region
        $region17: #{encoder_forward.12} parent=11 // pred_check
          %p121 = pneg %p77
        $region18: #{encoder_forward.12} parent=11 // pred_check_branch
          %123 = sbr.rel (%p121) target = $region20
        $region19: #{encoder_forward.12} parent=11 // pred_region
          _
        $region20: #{encoder_forward.12} parent=11 // pred_fallthru
          _
      $region12: #{encoder_forward.12} parent=5 // pred_fallthru
        _
      %p124 = scmp.lt.s32.totalorder %s9, 3
      // Predicated region
      $region21: #{encoder_forward.12} parent=5 // pred_check
        %p125 = pneg %p124
      $region22: #{encoder_forward.12} parent=5 // pred_check_branch
        %127 = sbr.rel (%p125) target = $region24
      $region23: #{encoder_forward.12} parent=5 // pred_region
        // Predicated region
        $region25: #{encoder_forward.12} parent=23 // pred_check
          %p128 = pneg %p50
        $region26: #{encoder_forward.12} parent=23 // pred_check_branch
          %130 = sbr.rel (%p128) target = $region28
        $region27: #{encoder_forward.12} parent=23 // pred_region
          %s131 = sand.u32 %s40, 1
          %s132 = sand.u32 %s40, 1
          %s133 = smul.addr %s132, 1152
          %s134 = scalar_lea.vmem [#allocation2], %s133
          %s135 = smul.u32 4, %s9
          %s136 = smul.addr %s135, 8
          %s137 = scalar_lea.vmem %s1, %s136
          // Predicated region
          $region29: #{encoder_forward.12} parent=27 // pred_check
            _
          $region30: #{encoder_forward.12} parent=27 // pred_check_branch
            %139 = sbr.rel (0) target = $region32
          $region31: #{encoder_forward.12} parent=27 // pred_region
            // Predicated region
            $region33: #{encoder_forward.12} parent=31 // pred_check
              _
            $region34: #{encoder_forward.12} parent=31 // pred_check_branch
              %141 = sbr.rel (0) target = $region36
            $region35: #{encoder_forward.12} parent=31 // pred_region
              loop: start=0, step=1, limit=1
              $region37: #{encoder_forward.12} parent=35 // loop_pre_header
                _
              $region38: #{encoder_forward.12} parent=35 // loop_header
                %s143 = sphi 0, %s147
                %p144 = scmp.ge.s32.totalorder %s143, 1
                %s148 = sphi %s137, %s137
                %s149 = sphi %s134, %s134
              $region39: #{encoder_forward.12} parent=35 // loop_header_branch
                %146 = sbr.rel (%p144) target = $region43
              $region40: #{encoder_forward.12} parent=35 // loop_body
                %v150 = vld [vmem:[%s148] sm:$0xff]
                %151 = vst [vmem:[%s149] sm:$0xff] %v150
                %v152 = vld [vmem:[%s148 + $0x8] sm:$0xff]
                %153 = vst [vmem:[%s149 + $0x8] sm:$0xff] %v152
                %v154 = vld [vmem:[%s148 + $0x10] sm:$0xff]
                %155 = vst [vmem:[%s149 + $0x10] sm:$0xff] %v154
                %v156 = vld [vmem:[%s148 + $0x18] sm:$0xff]
                %157 = vst [vmem:[%s149 + $0x18] sm:$0xff] %v156
                %v158 = vld [vmem:[%s148 + $0x60] sm:$0xff]
                %159 = vst [vmem:[%s149 + $0x20] sm:$0xff] %v158
                %v160 = vld [vmem:[%s148 + $0x68] sm:$0xff]
                %161 = vst [vmem:[%s149 + $0x28] sm:$0xff] %v160
                %v162 = vld [vmem:[%s148 + $0x70] sm:$0xff]
                %163 = vst [vmem:[%s149 + $0x30] sm:$0xff] %v162
                %v164 = vld [vmem:[%s148 + $0x78] sm:$0xff]
                %165 = vst [vmem:[%s149 + $0x38] sm:$0xff] %v164
                %v166 = vld [vmem:[%s148 + $0xc0] sm:$0xff]
                %167 = vst [vmem:[%s149 + $0x40] sm:$0xff] %v166
                %v168 = vld [vmem:[%s148 + $0xc8] sm:$0xff]
                %169 = vst [vmem:[%s149 + $0x48] sm:$0xff] %v168
                %v170 = vld [vmem:[%s148 + $0xd0] sm:$0xff]
                %171 = vst [vmem:[%s149 + $0x50] sm:$0xff] %v170
                %v172 = vld [vmem:[%s148 + $0xd8] sm:$0xff]
                %173 = vst [vmem:[%s149 + $0x58] sm:$0xff] %v172
                %v174 = vld [vmem:[%s148 + $0x120] sm:$0xff]
                %175 = vst [vmem:[%s149 + $0x60] sm:$0xff] %v174
                %v176 = vld [vmem:[%s148 + $0x128] sm:$0xff]
                %177 = vst [vmem:[%s149 + $0x68] sm:$0xff] %v176
                %v178 = vld [vmem:[%s148 + $0x130] sm:$0xff]
                %179 = vst [vmem:[%s149 + $0x70] sm:$0xff] %v178
                %v180 = vld [vmem:[%s148 + $0x138] sm:$0xff]
                %181 = vst [vmem:[%s149 + $0x78] sm:$0xff] %v180
                %v182 = vld [vmem:[%s148 + $0x180] sm:$0xff]
                %183 = vst [vmem:[%s149 + $0x80] sm:$0xff] %v182
                %v184 = vld [vmem:[%s148 + $0x188] sm:$0xff]
                %185 = vst [vmem:[%s149 + $0x88] sm:$0xff] %v184
                %v186 = vld [vmem:[%s148 + $0x190] sm:$0xff]
                %187 = vst [vmem:[%s149 + $0x90] sm:$0xff] %v186
                %v188 = vld [vmem:[%s148 + $0x198] sm:$0xff]
                %189 = vst [vmem:[%s149 + $0x98] sm:$0xff] %v188
                %v190 = vld [vmem:[%s148 + $0x1e0] sm:$0xff]
                %191 = vst [vmem:[%s149 + $0xa0] sm:$0xff] %v190
                %v192 = vld [vmem:[%s148 + $0x1e8] sm:$0xff]
                %193 = vst [vmem:[%s149 + $0xa8] sm:$0xff] %v192
                %v194 = vld [vmem:[%s148 + $0x1f0] sm:$0xff]
                %195 = vst [vmem:[%s149 + $0xb0] sm:$0xff] %v194
                %v196 = vld [vmem:[%s148 + $0x1f8] sm:$0xff]
                %197 = vst [vmem:[%s149 + $0xb8] sm:$0xff] %v196
                %v198 = vld [vmem:[%s148 + $0x240] sm:$0xff]
                %199 = vst [vmem:[%s149 + $0xc0] sm:$0xff] %v198
                %v200 = vld [vmem:[%s148 + $0x248] sm:$0xff]
                %201 = vst [vmem:[%s149 + $0xc8] sm:$0xff] %v200
                %v202 = vld [vmem:[%s148 + $0x250] sm:$0xff]
                %203 = vst [vmem:[%s149 + $0xd0] sm:$0xff] %v202
                %v204 = vld [vmem:[%s148 + $0x258] sm:$0xff]
                %205 = vst [vmem:[%s149 + $0xd8] sm:$0xff] %v204
                %v206 = vld [vmem:[%s148 + $0x2a0] sm:$0xff]
                %207 = vst [vmem:[%s149 + $0xe0] sm:$0xff] %v206
                %v208 = vld [vmem:[%s148 + $0x2a8] sm:$0xff]
                %209 = vst [vmem:[%s149 + $0xe8] sm:$0xff] %v208
                %v210 = vld [vmem:[%s148 + $0x2b0] sm:$0xff]
                %211 = vst [vmem:[%s149 + $0xf0] sm:$0xff] %v210
                %v212 = vld [vmem:[%s148 + $0x2b8] sm:$0xff]
                %213 = vst [vmem:[%s149 + $0xf8] sm:$0xff] %v212
                %v214 = vld [vmem:[%s148 + $0x300] sm:$0xff]
                %215 = vst [vmem:[%s149 + $0x100] sm:$0xff] %v214
                %v216 = vld [vmem:[%s148 + $0x308] sm:$0xff]
                %217 = vst [vmem:[%s149 + $0x108] sm:$0xff] %v216
                %v218 = vld [vmem:[%s148 + $0x310] sm:$0xff]
                %219 = vst [vmem:[%s149 + $0x110] sm:$0xff] %v218
                %v220 = vld [vmem:[%s148 + $0x318] sm:$0xff]
                %221 = vst [vmem:[%s149 + $0x118] sm:$0xff] %v220
                %v222 = vld [vmem:[%s148 + $0x360] sm:$0xff]
                %223 = vst [vmem:[%s149 + $0x120] sm:$0xff] %v222
                %v224 = vld [vmem:[%s148 + $0x368] sm:$0xff]
                %225 = vst [vmem:[%s149 + $0x128] sm:$0xff] %v224
                %v226 = vld [vmem:[%s148 + $0x370] sm:$0xff]
                %227 = vst [vmem:[%s149 + $0x130] sm:$0xff] %v226
                %v228 = vld [vmem:[%s148 + $0x378] sm:$0xff]
                %229 = vst [vmem:[%s149 + $0x138] sm:$0xff] %v228
                %v230 = vld [vmem:[%s148 + $0x3c0] sm:$0xff]
                %231 = vst [vmem:[%s149 + $0x140] sm:$0xff] %v230
                %v232 = vld [vmem:[%s148 + $0x3c8] sm:$0xff]
                %233 = vst [vmem:[%s149 + $0x148] sm:$0xff] %v232
                %v234 = vld [vmem:[%s148 + $0x3d0] sm:$0xff]
                %235 = vst [vmem:[%s149 + $0x150] sm:$0xff] %v234
                %v236 = vld [vmem:[%s148 + $0x3d8] sm:$0xff]
                %237 = vst [vmem:[%s149 + $0x158] sm:$0xff] %v236
                %v238 = vld [vmem:[%s148 + $0x420] sm:$0xff]
                %239 = vst [vmem:[%s149 + $0x160] sm:$0xff] %v238
                %v240 = vld [vmem:[%s148 + $0x428] sm:$0xff]
                %241 = vst [vmem:[%s149 + $0x168] sm:$0xff] %v240
                %v242 = vld [vmem:[%s148 + $0x430] sm:$0xff]
                %243 = vst [vmem:[%s149 + $0x170] sm:$0xff] %v242
                %v244 = vld [vmem:[%s148 + $0x438] sm:$0xff]
                %245 = vst [vmem:[%s149 + $0x178] sm:$0xff] %v244
                %v246 = vld [vmem:[%s148 + $0x480] sm:$0xff]
                %247 = vst [vmem:[%s149 + $0x180] sm:$0xff] %v246
                %v248 = vld [vmem:[%s148 + $0x488] sm:$0xff]
                %249 = vst [vmem:[%s149 + $0x188] sm:$0xff] %v248
                %v250 = vld [vmem:[%s148 + $0x490] sm:$0xff]
                %251 = vst [vmem:[%s149 + $0x190] sm:$0xff] %v250
                %v252 = vld [vmem:[%s148 + $0x498] sm:$0xff]
                %253 = vst [vmem:[%s149 + $0x198] sm:$0xff] %v252
                %v254 = vld [vmem:[%s148 + $0x4e0] sm:$0xff]
                %255 = vst [vmem:[%s149 + $0x1a0] sm:$0xff] %v254
                %v256 = vld [vmem:[%s148 + $0x4e8] sm:$0xff]
                %257 = vst [vmem:[%s149 + $0x1a8] sm:$0xff] %v256
                %v258 = vld [vmem:[%s148 + $0x4f0] sm:$0xff]
                %259 = vst [vmem:[%s149 + $0x1b0] sm:$0xff] %v258
                %v260 = vld [vmem:[%s148 + $0x4f8] sm:$0xff]
                %261 = vst [vmem:[%s149 + $0x1b8] sm:$0xff] %v260
                %v262 = vld [vmem:[%s148 + $0x540] sm:$0xff]
                %263 = vst [vmem:[%s149 + $0x1c0] sm:$0xff] %v262
                %v264 = vld [vmem:[%s148 + $0x548] sm:$0xff]
                %265 = vst [vmem:[%s149 + $0x1c8] sm:$0xff] %v264
                %v266 = vld [vmem:[%s148 + $0x550] sm:$0xff]
                %267 = vst [vmem:[%s149 + $0x1d0] sm:$0xff] %v266
                %v268 = vld [vmem:[%s148 + $0x558] sm:$0xff]
                %269 = vst [vmem:[%s149 + $0x1d8] sm:$0xff] %v268
                %v270 = vld [vmem:[%s148 + $0x5a0] sm:$0xff]
                %271 = vst [vmem:[%s149 + $0x1e0] sm:$0xff] %v270
                %v272 = vld [vmem:[%s148 + $0x5a8] sm:$0xff]
                %273 = vst [vmem:[%s149 + $0x1e8] sm:$0xff] %v272
                %v274 = vld [vmem:[%s148 + $0x5b0] sm:$0xff]
                %275 = vst [vmem:[%s149 + $0x1f0] sm:$0xff] %v274
                %v276 = vld [vmem:[%s148 + $0x5b8] sm:$0xff]
                %277 = vst [vmem:[%s149 + $0x1f8] sm:$0xff] %v276
                %v278 = vld [vmem:[%s148 + $0x600] sm:$0xff]
                %279 = vst [vmem:[%s149 + $0x200] sm:$0xff] %v278
                %v280 = vld [vmem:[%s148 + $0x608] sm:$0xff]
                %281 = vst [vmem:[%s149 + $0x208] sm:$0xff] %v280
                %v282 = vld [vmem:[%s148 + $0x610] sm:$0xff]
                %283 = vst [vmem:[%s149 + $0x210] sm:$0xff] %v282
                %v284 = vld [vmem:[%s148 + $0x618] sm:$0xff]
                %285 = vst [vmem:[%s149 + $0x218] sm:$0xff] %v284
                %v286 = vld [vmem:[%s148 + $0x660] sm:$0xff]
                %287 = vst [vmem:[%s149 + $0x220] sm:$0xff] %v286
                %v288 = vld [vmem:[%s148 + $0x668] sm:$0xff]
                %289 = vst [vmem:[%s149 + $0x228] sm:$0xff] %v288
                %v290 = vld [vmem:[%s148 + $0x670] sm:$0xff]
                %291 = vst [vmem:[%s149 + $0x230] sm:$0xff] %v290
                %v292 = vld [vmem:[%s148 + $0x678] sm:$0xff]
                %293 = vst [vmem:[%s149 + $0x238] sm:$0xff] %v292
                %v294 = vld [vmem:[%s148 + $0x6c0] sm:$0xff]
                %295 = vst [vmem:[%s149 + $0x240] sm:$0xff] %v294
                %v296 = vld [vmem:[%s148 + $0x6c8] sm:$0xff]
                %297 = vst [vmem:[%s149 + $0x248] sm:$0xff] %v296
                %v298 = vld [vmem:[%s148 + $0x6d0] sm:$0xff]
                %299 = vst [vmem:[%s149 + $0x250] sm:$0xff] %v298
                %v300 = vld [vmem:[%s148 + $0x6d8] sm:$0xff]
                %301 = vst [vmem:[%s149 + $0x258] sm:$0xff] %v300
                %v302 = vld [vmem:[%s148 + $0x720] sm:$0xff]
                %303 = vst [vmem:[%s149 + $0x260] sm:$0xff] %v302
                %v304 = vld [vmem:[%s148 + $0x728] sm:$0xff]
                %305 = vst [vmem:[%s149 + $0x268] sm:$0xff] %v304
                %v306 = vld [vmem:[%s148 + $0x730] sm:$0xff]
                %307 = vst [vmem:[%s149 + $0x270] sm:$0xff] %v306
                %v308 = vld [vmem:[%s148 + $0x738] sm:$0xff]
                %309 = vst [vmem:[%s149 + $0x278] sm:$0xff] %v308
                %v310 = vld [vmem:[%s148 + $0x780] sm:$0xff]
                %311 = vst [vmem:[%s149 + $0x280] sm:$0xff] %v310
                %v312 = vld [vmem:[%s148 + $0x788] sm:$0xff]
                %313 = vst [vmem:[%s149 + $0x288] sm:$0xff] %v312
                %v314 = vld [vmem:[%s148 + $0x790] sm:$0xff]
                %315 = vst [vmem:[%s149 + $0x290] sm:$0xff] %v314
                %v316 = vld [vmem:[%s148 + $0x798] sm:$0xff]
                %317 = vst [vmem:[%s149 + $0x298] sm:$0xff] %v316
                %v318 = vld [vmem:[%s148 + $0x7e0] sm:$0xff]
                %319 = vst [vmem:[%s149 + $0x2a0] sm:$0xff] %v318
                %v320 = vld [vmem:[%s148 + $0x7e8] sm:$0xff]
                %321 = vst [vmem:[%s149 + $0x2a8] sm:$0xff] %v320
                %v322 = vld [vmem:[%s148 + $0x7f0] sm:$0xff]
                %323 = vst [vmem:[%s149 + $0x2b0] sm:$0xff] %v322
                %v324 = vld [vmem:[%s148 + $0x7f8] sm:$0xff]
                %325 = vst [vmem:[%s149 + $0x2b8] sm:$0xff] %v324
                %v326 = vld [vmem:[%s148 + $0x840] sm:$0xff]
                %327 = vst [vmem:[%s149 + $0x2c0] sm:$0xff] %v326
                %v328 = vld [vmem:[%s148 + $0x848] sm:$0xff]
                %329 = vst [vmem:[%s149 + $0x2c8] sm:$0xff] %v328
                %v330 = vld [vmem:[%s148 + $0x850] sm:$0xff]
                %331 = vst [vmem:[%s149 + $0x2d0] sm:$0xff] %v330
                %v332 = vld [vmem:[%s148 + $0x858] sm:$0xff]
                %333 = vst [vmem:[%s149 + $0x2d8] sm:$0xff] %v332
                %v334 = vld [vmem:[%s148 + $0x8a0] sm:$0xff]
                %335 = vst [vmem:[%s149 + $0x2e0] sm:$0xff] %v334
                %v336 = vld [vmem:[%s148 + $0x8a8] sm:$0xff]
                %337 = vst [vmem:[%s149 + $0x2e8] sm:$0xff] %v336
                %v338 = vld [vmem:[%s148 + $0x8b0] sm:$0xff]
                %339 = vst [vmem:[%s149 + $0x2f0] sm:$0xff] %v338
                %v340 = vld [vmem:[%s148 + $0x8b8] sm:$0xff]
                %341 = vst [vmem:[%s149 + $0x2f8] sm:$0xff] %v340
                %v342 = vld [vmem:[%s148 + $0x900] sm:$0xff]
                %343 = vst [vmem:[%s149 + $0x300] sm:$0xff] %v342
                %v344 = vld [vmem:[%s148 + $0x908] sm:$0xff]
                %345 = vst [vmem:[%s149 + $0x308] sm:$0xff] %v344
                %v346 = vld [vmem:[%s148 + $0x910] sm:$0xff]
                %347 = vst [vmem:[%s149 + $0x310] sm:$0xff] %v346
                %v348 = vld [vmem:[%s148 + $0x918] sm:$0xff]
                %349 = vst [vmem:[%s149 + $0x318] sm:$0xff] %v348
                %v350 = vld [vmem:[%s148 + $0x960] sm:$0xff]
                %351 = vst [vmem:[%s149 + $0x320] sm:$0xff] %v350
                %v352 = vld [vmem:[%s148 + $0x968] sm:$0xff]
                %353 = vst [vmem:[%s149 + $0x328] sm:$0xff] %v352
                %v354 = vld [vmem:[%s148 + $0x970] sm:$0xff]
                %355 = vst [vmem:[%s149 + $0x330] sm:$0xff] %v354
                %v356 = vld [vmem:[%s148 + $0x978] sm:$0xff]
                %357 = vst [vmem:[%s149 + $0x338] sm:$0xff] %v356
                %v358 = vld [vmem:[%s148 + $0x9c0] sm:$0xff]
                %359 = vst [vmem:[%s149 + $0x340] sm:$0xff] %v358
                %v360 = vld [vmem:[%s148 + $0x9c8] sm:$0xff]
                %361 = vst [vmem:[%s149 + $0x348] sm:$0xff] %v360
                %v362 = vld [vmem:[%s148 + $0x9d0] sm:$0xff]
                %363 = vst [vmem:[%s149 + $0x350] sm:$0xff] %v362
                %v364 = vld [vmem:[%s148 + $0x9d8] sm:$0xff]
                %365 = vst [vmem:[%s149 + $0x358] sm:$0xff] %v364
                %v366 = vld [vmem:[%s148 + $0xa20] sm:$0xff]
                %367 = vst [vmem:[%s149 + $0x360] sm:$0xff] %v366
                %v368 = vld [vmem:[%s148 + $0xa28] sm:$0xff]
                %369 = vst [vmem:[%s149 + $0x368] sm:$0xff] %v368
                %v370 = vld [vmem:[%s148 + $0xa30] sm:$0xff]
                %371 = vst [vmem:[%s149 + $0x370] sm:$0xff] %v370
                %v372 = vld [vmem:[%s148 + $0xa38] sm:$0xff]
                %373 = vst [vmem:[%s149 + $0x378] sm:$0xff] %v372
                %v374 = vld [vmem:[%s148 + $0xa80] sm:$0xff]
                %375 = vst [vmem:[%s149 + $0x380] sm:$0xff] %v374
                %v376 = vld [vmem:[%s148 + $0xa88] sm:$0xff]
                %377 = vst [vmem:[%s149 + $0x388] sm:$0xff] %v376
                %v378 = vld [vmem:[%s148 + $0xa90] sm:$0xff]
                %379 = vst [vmem:[%s149 + $0x390] sm:$0xff] %v378
                %v380 = vld [vmem:[%s148 + $0xa98] sm:$0xff]
                %381 = vst [vmem:[%s149 + $0x398] sm:$0xff] %v380
                %v382 = vld [vmem:[%s148 + $0xae0] sm:$0xff]
                %383 = vst [vmem:[%s149 + $0x3a0] sm:$0xff] %v382
                %v384 = vld [vmem:[%s148 + $0xae8] sm:$0xff]
                %385 = vst [vmem:[%s149 + $0x3a8] sm:$0xff] %v384
                %v386 = vld [vmem:[%s148 + $0xaf0] sm:$0xff]
                %387 = vst [vmem:[%s149 + $0x3b0] sm:$0xff] %v386
                %v388 = vld [vmem:[%s148 + $0xaf8] sm:$0xff]
                %389 = vst [vmem:[%s149 + $0x3b8] sm:$0xff] %v388
                %v390 = vld [vmem:[%s148 + $0xb40] sm:$0xff]
                %391 = vst [vmem:[%s149 + $0x3c0] sm:$0xff] %v390
                %v392 = vld [vmem:[%s148 + $0xb48] sm:$0xff]
                %393 = vst [vmem:[%s149 + $0x3c8] sm:$0xff] %v392
                %v394 = vld [vmem:[%s148 + $0xb50] sm:$0xff]
                %395 = vst [vmem:[%s149 + $0x3d0] sm:$0xff] %v394
                %v396 = vld [vmem:[%s148 + $0xb58] sm:$0xff]
                %397 = vst [vmem:[%s149 + $0x3d8] sm:$0xff] %v396
                %v398 = vld [vmem:[%s148 + $0xba0] sm:$0xff]
                %399 = vst [vmem:[%s149 + $0x3e0] sm:$0xff] %v398
                %v400 = vld [vmem:[%s148 + $0xba8] sm:$0xff]
                %401 = vst [vmem:[%s149 + $0x3e8] sm:$0xff] %v400
                %v402 = vld [vmem:[%s148 + $0xbb0] sm:$0xff]
                %403 = vst [vmem:[%s149 + $0x3f0] sm:$0xff] %v402
                %v404 = vld [vmem:[%s148 + $0xbb8] sm:$0xff]
                %405 = vst [vmem:[%s149 + $0x3f8] sm:$0xff] %v404
                %v406 = vld [vmem:[%s148 + $0xc00] sm:$0xff]
                %407 = vst [vmem:[%s149 + $0x400] sm:$0xff] %v406
                %v408 = vld [vmem:[%s148 + $0xc08] sm:$0xff]
                %409 = vst [vmem:[%s149 + $0x408] sm:$0xff] %v408
                %v410 = vld [vmem:[%s148 + $0xc10] sm:$0xff]
                %411 = vst [vmem:[%s149 + $0x410] sm:$0xff] %v410
                %v412 = vld [vmem:[%s148 + $0xc18] sm:$0xff]
                %413 = vst [vmem:[%s149 + $0x418] sm:$0xff] %v412
                %v414 = vld [vmem:[%s148 + $0xc60] sm:$0xff]
                %415 = vst [vmem:[%s149 + $0x420] sm:$0xff] %v414
                %v416 = vld [vmem:[%s148 + $0xc68] sm:$0xff]
                %417 = vst [vmem:[%s149 + $0x428] sm:$0xff] %v416
                %v418 = vld [vmem:[%s148 + $0xc70] sm:$0xff]
                %419 = vst [vmem:[%s149 + $0x430] sm:$0xff] %v418
                %v420 = vld [vmem:[%s148 + $0xc78] sm:$0xff]
                %421 = vst [vmem:[%s149 + $0x438] sm:$0xff] %v420
                %v422 = vld [vmem:[%s148 + $0xcc0] sm:$0xff]
                %423 = vst [vmem:[%s149 + $0x440] sm:$0xff] %v422
                %v424 = vld [vmem:[%s148 + $0xcc8] sm:$0xff]
                %425 = vst [vmem:[%s149 + $0x448] sm:$0xff] %v424
                %v426 = vld [vmem:[%s148 + $0xcd0] sm:$0xff]
                %427 = vst [vmem:[%s149 + $0x450] sm:$0xff] %v426
                %v428 = vld [vmem:[%s148 + $0xcd8] sm:$0xff]
                %429 = vst [vmem:[%s149 + $0x458] sm:$0xff] %v428
                %v430 = vld [vmem:[%s148 + $0xd20] sm:$0xff]
                %431 = vst [vmem:[%s149 + $0x460] sm:$0xff] %v430
                %v432 = vld [vmem:[%s148 + $0xd28] sm:$0xff]
                %433 = vst [vmem:[%s149 + $0x468] sm:$0xff] %v432
                %v434 = vld [vmem:[%s148 + $0xd30] sm:$0xff]
                %435 = vst [vmem:[%s149 + $0x470] sm:$0xff] %v434
                %v436 = vld [vmem:[%s148 + $0xd38] sm:$0xff]
                %437 = vst [vmem:[%s149 + $0x478] sm:$0xff] %v436
              $region41: #{encoder_forward.12} parent=35 // loop_footer
                %s147 = sadd.s32 1, %s143
              $region42: #{encoder_forward.12} parent=35 // loop_footer_branch
                %142 = sbr.rel target = $region38
              $region43: #{encoder_forward.12} parent=35 // loop_exit
                _
            $region36: #{encoder_forward.12} parent=31 // pred_fallthru
              _
            // Predicated region
            $region44: #{encoder_forward.12} parent=31 // pred_check
              _
            $region45: #{encoder_forward.12} parent=31 // pred_check_branch
              %439 = sbr.rel target = $region47
            $region46: #{encoder_forward.12} parent=31 // pred_region
              _
            $region47: #{encoder_forward.12} parent=31 // pred_fallthru
              _
          $region32: #{encoder_forward.12} parent=27 // pred_fallthru
            _
          %440 = vnop
        $region28: #{encoder_forward.12} parent=23 // pred_fallthru
          _
      $region24: #{encoder_forward.12} parent=5 // pred_fallthru
        _
      %p441 = scmp.le.s32.totalorder 1, %s9
      %p442 = scmp.lt.s32.totalorder %s9, 4
      %p443 = pnand %p441, %p442
      %p444 = pneg %p443
      // Predicated region
      $region48: #{encoder_forward.12} parent=5 // pred_check
        _
      $region49: #{encoder_forward.12} parent=5 // pred_check_branch
        %446 = sbr.rel (%p443) target = $region51
      $region50: #{encoder_forward.12} parent=5 // pred_region
        %s447 = ssub.s32 %s9, 1
        %s448 = sand.u32 %s43, 1
        %s449 = sand.u32 %s43, 1
        %s450 = smul.addr %s449, 1152
        %s451 = scalar_lea.vmem [#allocation2], %s450
        // Predicated region
        $region52: #{encoder_forward.12} parent=50 // pred_check
          %p452 = pneg %p56
        $region53: #{encoder_forward.12} parent=50 // pred_check_branch
          %454 = sbr.rel (%p452) target = $region55
        $region54: #{encoder_forward.12} parent=50 // pred_region
          _
        $region55: #{encoder_forward.12} parent=50 // pred_fallthru
          _
        %p455 = pneg %p30
        %p456 = pneg %p27
        %s457 = sand.u32 %s43, 1
        %s458 = sand.u32 %s43, 1
        %s459 = smul.addr %s458, 1152
        %s460 = scalar_lea.vmem [#allocation2], %s459
        %p461 = pneg %p56
        %p462 = pneg %p53
        %p463 = pneg %p77
        %p464 = pneg %p74
        %p465 = pneg %p103
        %p466 = pneg %p100
        %s467 = sand.u32 %s90, 1
        %s468 = sand.u32 %s90, 1
        %s469 = smul.addr %s468, 128
        %s470 = scalar_lea.vmem [#allocation3], %s469
        %s471 = smul.u32 4, %s14
        %s472 = smul.u32 4, %s14
        %v473 = vld [vmem:[%s0] sm:$0xff]
        %v474 = vld [vmem:[%s0 + $0x8] sm:$0xff]
        %v475 = vld [vmem:[%s0 + $0x10] sm:$0xff]
        %v476 = vld [vmem:[%s0 + $0x18] sm:$0xff]
        %v477 = vld [vmem:[%s0 + $0x20] sm:$0xff]
        %v478 = vld [vmem:[%s0 + $0x28] sm:$0xff]
        %v479 = vld [vmem:[%s0 + $0x30] sm:$0xff]
        %v480 = vld [vmem:[%s0 + $0x38] sm:$0xff]
        %v481 = vld [vmem:[%s0 + $0x40] sm:$0xff]
        %v482 = vld [vmem:[%s0 + $0x48] sm:$0xff]
        %v483 = vld [vmem:[%s0 + $0x50] sm:$0xff]
        %v484 = vld [vmem:[%s0 + $0x58] sm:$0xff]
        %v485 = vld [vmem:[%s451] sm:$0xff]
        %v486 = vld [vmem:[%s451 + $0x8] sm:$0xff]
        %v487 = vld [vmem:[%s451 + $0x10] sm:$0xff]
        %v488 = vld [vmem:[%s451 + $0x18] sm:$0xff]
        %v489 = vld [vmem:[%s451 + $0x20] sm:$0xff]
        %v490 = vld [vmem:[%s451 + $0x28] sm:$0xff]
        %v491 = vld [vmem:[%s451 + $0x30] sm:$0xff]
        %v492 = vld [vmem:[%s451 + $0x38] sm:$0xff]
        %v493 = vld [vmem:[%s451 + $0x40] sm:$0xff]
        %v494 = vld [vmem:[%s451 + $0x48] sm:$0xff]
        %v495 = vld [vmem:[%s451 + $0x50] sm:$0xff]
        %v496 = vld [vmem:[%s451 + $0x58] sm:$0xff]
        %v497 = vld [vmem:[%s451 + $0x60] sm:$0xff]
        %v498 = vld [vmem:[%s451 + $0x68] sm:$0xff]
        %v499 = vld [vmem:[%s451 + $0x70] sm:$0xff]
        %v500 = vld [vmem:[%s451 + $0x78] sm:$0xff]
        %v501 = vld [vmem:[%s451 + $0x80] sm:$0xff]
        %v502 = vld [vmem:[%s451 + $0x88] sm:$0xff]
        %v503 = vld [vmem:[%s451 + $0x90] sm:$0xff]
        %v504 = vld [vmem:[%s451 + $0x98] sm:$0xff]
        %v505 = vld [vmem:[%s451 + $0xa0] sm:$0xff]
        %v506 = vld [vmem:[%s451 + $0xa8] sm:$0xff]
        %v507 = vld [vmem:[%s451 + $0xb0] sm:$0xff]
        %v508 = vld [vmem:[%s451 + $0xb8] sm:$0xff]
        %v509 = vld [vmem:[%s451 + $0xc0] sm:$0xff]
        %v510 = vld [vmem:[%s451 + $0xc8] sm:$0xff]
        %v511 = vld [vmem:[%s451 + $0xd0] sm:$0xff]
        %v512 = vld [vmem:[%s451 + $0xd8] sm:$0xff]
        %v513 = vld [vmem:[%s451 + $0xe0] sm:$0xff]
        %v514 = vld [vmem:[%s451 + $0xe8] sm:$0xff]
        %v515 = vld [vmem:[%s451 + $0xf0] sm:$0xff]
        %v516 = vld [vmem:[%s451 + $0xf8] sm:$0xff]
        %v517 = vld [vmem:[%s451 + $0x100] sm:$0xff]
        %v518 = vld [vmem:[%s451 + $0x108] sm:$0xff]
        %v519 = vld [vmem:[%s451 + $0x110] sm:$0xff]
        %v520 = vld [vmem:[%s451 + $0x118] sm:$0xff]
        %v521 = vld [vmem:[%s451 + $0x120] sm:$0xff]
        %v522 = vld [vmem:[%s451 + $0x128] sm:$0xff]
        %v523 = vld [vmem:[%s451 + $0x130] sm:$0xff]
        %v524 = vld [vmem:[%s451 + $0x138] sm:$0xff]
        %v525 = vld [vmem:[%s451 + $0x140] sm:$0xff]
        %v526 = vld [vmem:[%s451 + $0x148] sm:$0xff]
        %v527 = vld [vmem:[%s451 + $0x150] sm:$0xff]
        %v528 = vld [vmem:[%s451 + $0x158] sm:$0xff]
        %v529 = vld [vmem:[%s451 + $0x160] sm:$0xff]
        %v530 = vld [vmem:[%s451 + $0x168] sm:$0xff]
        %v531 = vld [vmem:[%s451 + $0x170] sm:$0xff]
        %v532 = vld [vmem:[%s451 + $0x178] sm:$0xff]
        %v533 = vld [vmem:[%s451 + $0x180] sm:$0xff]
        %v534 = vld [vmem:[%s451 + $0x188] sm:$0xff]
        %v535 = vld [vmem:[%s451 + $0x190] sm:$0xff]
        %v536 = vld [vmem:[%s451 + $0x198] sm:$0xff]
        %v537 = vld [vmem:[%s451 + $0x1a0] sm:$0xff]
        %v538 = vld [vmem:[%s451 + $0x1a8] sm:$0xff]
        %v539 = vld [vmem:[%s451 + $0x1b0] sm:$0xff]
        %v540 = vld [vmem:[%s451 + $0x1b8] sm:$0xff]
        %v541 = vld [vmem:[%s451 + $0x1c0] sm:$0xff]
        %v542 = vld [vmem:[%s451 + $0x1c8] sm:$0xff]
        %v543 = vld [vmem:[%s451 + $0x1d0] sm:$0xff]
        %v544 = vld [vmem:[%s451 + $0x1d8] sm:$0xff]
        %v545 = vld [vmem:[%s451 + $0x1e0] sm:$0xff]
        %v546 = vld [vmem:[%s451 + $0x1e8] sm:$0xff]
        %v547 = vld [vmem:[%s451 + $0x1f0] sm:$0xff]
        %v548 = vld [vmem:[%s451 + $0x1f8] sm:$0xff]
        %v549 = vld [vmem:[%s451 + $0x200] sm:$0xff]
        %v550 = vld [vmem:[%s451 + $0x208] sm:$0xff]
        %v551 = vld [vmem:[%s451 + $0x210] sm:$0xff]
        %v552 = vld [vmem:[%s451 + $0x218] sm:$0xff]
        %v553 = vld [vmem:[%s451 + $0x220] sm:$0xff]
        %v554 = vld [vmem:[%s451 + $0x228] sm:$0xff]
        %v555 = vld [vmem:[%s451 + $0x230] sm:$0xff]
        %v556 = vld [vmem:[%s451 + $0x238] sm:$0xff]
        %v557 = vld [vmem:[%s451 + $0x240] sm:$0xff]
        %v558 = vld [vmem:[%s451 + $0x248] sm:$0xff]
        %v559 = vld [vmem:[%s451 + $0x250] sm:$0xff]
        %v560 = vld [vmem:[%s451 + $0x258] sm:$0xff]
        %v561 = vld [vmem:[%s451 + $0x260] sm:$0xff]
        %v562 = vld [vmem:[%s451 + $0x268] sm:$0xff]
        %v563 = vld [vmem:[%s451 + $0x270] sm:$0xff]
        %v564 = vld [vmem:[%s451 + $0x278] sm:$0xff]
        %v565 = vld [vmem:[%s451 + $0x280] sm:$0xff]
        %v566 = vld [vmem:[%s451 + $0x288] sm:$0xff]
        %v567 = vld [vmem:[%s451 + $0x290] sm:$0xff]
        %v568 = vld [vmem:[%s451 + $0x298] sm:$0xff]
        %v569 = vld [vmem:[%s451 + $0x2a0] sm:$0xff]
        %v570 = vld [vmem:[%s451 + $0x2a8] sm:$0xff]
        %v571 = vld [vmem:[%s451 + $0x2b0] sm:$0xff]
        %v572 = vld [vmem:[%s451 + $0x2b8] sm:$0xff]
        %v573 = vld [vmem:[%s451 + $0x2c0] sm:$0xff]
        %v574 = vld [vmem:[%s451 + $0x2c8] sm:$0xff]
        %v575 = vld [vmem:[%s451 + $0x2d0] sm:$0xff]
        %v576 = vld [vmem:[%s451 + $0x2d8] sm:$0xff]
        %v577 = vld [vmem:[%s451 + $0x2e0] sm:$0xff]
        %v578 = vld [vmem:[%s451 + $0x2e8] sm:$0xff]
        %v579 = vld [vmem:[%s451 + $0x2f0] sm:$0xff]
        %v580 = vld [vmem:[%s451 + $0x2f8] sm:$0xff]
        %v581 = vld [vmem:[%s451 + $0x300] sm:$0xff]
        %v582 = vld [vmem:[%s451 + $0x308] sm:$0xff]
        %v583 = vld [vmem:[%s451 + $0x310] sm:$0xff]
        %v584 = vld [vmem:[%s451 + $0x318] sm:$0xff]
        %v585 = vld [vmem:[%s451 + $0x320] sm:$0xff]
        %v586 = vld [vmem:[%s451 + $0x328] sm:$0xff]
        %v587 = vld [vmem:[%s451 + $0x330] sm:$0xff]
        %v588 = vld [vmem:[%s451 + $0x338] sm:$0xff]
        %v589 = vld [vmem:[%s451 + $0x340] sm:$0xff]
        %v590 = vld [vmem:[%s451 + $0x348] sm:$0xff]
        %v591 = vld [vmem:[%s451 + $0x350] sm:$0xff]
        %v592 = vld [vmem:[%s451 + $0x358] sm:$0xff]
        %v593 = vld [vmem:[%s451 + $0x360] sm:$0xff]
        %v594 = vld [vmem:[%s451 + $0x368] sm:$0xff]
        %v595 = vld [vmem:[%s451 + $0x370] sm:$0xff]
        %v596 = vld [vmem:[%s451 + $0x378] sm:$0xff]
        %v597 = vld [vmem:[%s451 + $0x380] sm:$0xff]
        %v598 = vld [vmem:[%s451 + $0x388] sm:$0xff]
        %v599 = vld [vmem:[%s451 + $0x390] sm:$0xff]
        %v600 = vld [vmem:[%s451 + $0x398] sm:$0xff]
        %v601 = vld [vmem:[%s451 + $0x3a0] sm:$0xff]
        %v602 = vld [vmem:[%s451 + $0x3a8] sm:$0xff]
        %v603 = vld [vmem:[%s451 + $0x3b0] sm:$0xff]
        %v604 = vld [vmem:[%s451 + $0x3b8] sm:$0xff]
        %v605 = vld [vmem:[%s451 + $0x3c0] sm:$0xff]
        %v606 = vld [vmem:[%s451 + $0x3c8] sm:$0xff]
        %v607 = vld [vmem:[%s451 + $0x3d0] sm:$0xff]
        %v608 = vld [vmem:[%s451 + $0x3d8] sm:$0xff]
        %v609 = vld [vmem:[%s451 + $0x3e0] sm:$0xff]
        %v610 = vld [vmem:[%s451 + $0x3e8] sm:$0xff]
        %v611 = vld [vmem:[%s451 + $0x3f0] sm:$0xff]
        %v612 = vld [vmem:[%s451 + $0x3f8] sm:$0xff]
        %v613 = vld [vmem:[%s451 + $0x400] sm:$0xff]
        %v614 = vld [vmem:[%s451 + $0x408] sm:$0xff]
        %v615 = vld [vmem:[%s451 + $0x410] sm:$0xff]
        %v616 = vld [vmem:[%s451 + $0x418] sm:$0xff]
        %v617 = vld [vmem:[%s451 + $0x420] sm:$0xff]
        %v618 = vld [vmem:[%s451 + $0x428] sm:$0xff]
        %v619 = vld [vmem:[%s451 + $0x430] sm:$0xff]
        %v620 = vld [vmem:[%s451 + $0x438] sm:$0xff]
        %v621 = vld [vmem:[%s451 + $0x440] sm:$0xff]
        %v622 = vld [vmem:[%s451 + $0x448] sm:$0xff]
        %v623 = vld [vmem:[%s451 + $0x450] sm:$0xff]
        %v624 = vld [vmem:[%s451 + $0x458] sm:$0xff]
        %v625 = vld [vmem:[%s451 + $0x460] sm:$0xff]
        %v626 = vld [vmem:[%s451 + $0x468] sm:$0xff]
        %v627 = vld [vmem:[%s451 + $0x470] sm:$0xff]
        %v628 = vld [vmem:[%s451 + $0x478] sm:$0xff]
        %v629 = vld [vmem:[%s2] sm:$0xff]
        %v630 = vld [vmem:[%s2 + $0x8] sm:$0xff]
        %v631 = vld [vmem:[%s2 + $0x10] sm:$0xff]
        %v632 = vld [vmem:[%s2 + $0x18] sm:$0xff]
        %634 = vset.pattern.permute.xlu0 0
        %635 = vperm.xlu0 %634, %v629
        %v636 = vpop.permute.xlu0 %635
        %639 = vset.pattern.permute.xlu0 0
        %640 = vperm.xlu0 %639, %v630
        %v641 = vpop.permute.xlu0 %640
        %644 = vset.pattern.permute.xlu0 0
        %645 = vperm.xlu0 %644, %v631
        %v646 = vpop.permute.xlu0 %645
        %649 = vset.pattern.permute.xlu0 0
        %650 = vperm.xlu0 %649, %v632
        %v651 = vpop.permute.xlu0 %650
        %vm653 = vcmask 261120
        %v655 = vsel %vm653, %v475, 0
        %v658 = vsel %vm653, %v478, 0
        %v661 = vsel %vm653, %v481, 0
        %v664 = vsel %vm653, %v484, 0
        %666 = vmatpush.msra.mxu0 %v545
        %667 = vmatpush.msra.mxu0 %v541
        %668 = vmatpush.msra.mxu0 %v537
        %669 = vmatpush.msra.mxu0 %v533
        %670 = vmatpush.msra.mxu0 %v529
        %671 = vmatpush.msra.mxu0 %v525
        %672 = vmatpush.msra.mxu0 %v521
        %673 = vmatpush.msra.mxu0 %v517
        %674 = vmatpush.msra.mxu0 %v513
        %675 = vmatpush.msra.mxu0 %v509
        %676 = vmatpush.msra.mxu0 %v505
        %677 = vmatpush.msra.mxu0 %v501
        %678 = vmatpush.msra.mxu0 %v497
        %679 = vmatpush.msra.mxu0 %v493
        %680 = vmatpush.msra.mxu0 %v489
        %681 = vmatpush.msra.mxu0 %v485
        %682 = vmatmul.f32.gmra.mxu0 %v473
        %v683 = vpop.f32.mrf.mxu0
        %v684 = vadd.f32 %v636, %v683
        %685 = vmatmul.f32.gmra.mxu0 %v476
        %v686 = vpop.f32.mrf.mxu0
        %v687 = vadd.f32 %v641, %v686
        %688 = vmatmul.f32.gmra.mxu0 %v479
        %v689 = vpop.f32.mrf.mxu0
        %v690 = vadd.f32 %v646, %v689
        %691 = vmatmul.f32.gmra.mxu0 %v482
        %v692 = vpop.f32.mrf.mxu0
        %v693 = vadd.f32 %v651, %v692
        %694 = vdwg.mxu0
        %695 = vmatpush.msra.mxu0 %v609
        %696 = vmatpush.msra.mxu0 %v605
        %697 = vmatpush.msra.mxu0 %v601
        %698 = vmatpush.msra.mxu0 %v597
        %699 = vmatpush.msra.mxu0 %v593
        %700 = vmatpush.msra.mxu0 %v589
        %701 = vmatpush.msra.mxu0 %v585
        %702 = vmatpush.msra.mxu0 %v581
        %703 = vmatpush.msra.mxu0 %v577
        %704 = vmatpush.msra.mxu0 %v573
        %705 = vmatpush.msra.mxu0 %v569
        %706 = vmatpush.msra.mxu0 %v565
        %707 = vmatpush.msra.mxu0 %v561
        %708 = vmatpush.msra.mxu0 %v557
        %709 = vmatpush.msra.mxu0 %v553
        %710 = vmatpush.msra.mxu0 %v549
        %711 = vmatmul.f32.gmra.mxu0 %v474
        %v712 = vpop.f32.mrf.mxu0
        %v713 = vadd.f32 %v684, %v712
        %714 = vmatmul.f32.gmra.mxu0 %v477
        %v715 = vpop.f32.mrf.mxu0
        %v716 = vadd.f32 %v687, %v715
        %717 = vmatmul.f32.gmra.mxu0 %v480
        %v718 = vpop.f32.mrf.mxu0
        %v719 = vadd.f32 %v690, %v718
        %720 = vmatmul.f32.gmra.mxu0 %v483
        %v721 = vpop.f32.mrf.mxu0
        %v722 = vadd.f32 %v693, %v721
        %723 = vdwg.mxu0
        %724 = vmatpush.msra.mxu0 0.0
        %725 = vmatpush.msra.mxu0 0.0
        %726 = vmatpush.msra.mxu0 0.0
        %727 = vmatpush.msra.mxu0 0.0
        %728 = vmatpush.msra.mxu0 0.0
        %729 = vmatpush.msra.mxu0 0.0
        %730 = vmatpush.msra.mxu0 0.0
        %731 = vmatpush.msra.mxu0 0.0
        %732 = vmatpush.msra.mxu0 0.0
        %733 = vmatpush.msra.mxu0 0.0
        %734 = vmatpush.msra.mxu0 0.0
        %735 = vmatpush.msra.mxu0 0.0
        %736 = vmatpush.msra.mxu0 %v625
        %737 = vmatpush.msra.mxu0 %v621
        %738 = vmatpush.msra.mxu0 %v617
        %739 = vmatpush.msra.mxu0 %v613
        %740 = vmatmul.f32.gmra.mxu0 %v655
        %v741 = vpop.f32.mrf.mxu0
        %v742 = vadd.f32 %v713, %v741
        %743 = vmatmul.f32.gmra.mxu0 %v658
        %v744 = vpop.f32.mrf.mxu0
        %v745 = vadd.f32 %v716, %v744
        %746 = vmatmul.f32.gmra.mxu0 %v661
        %v747 = vpop.f32.mrf.mxu0
        %v748 = vadd.f32 %v719, %v747
        %749 = vmatmul.f32.gmra.mxu0 %v664
        %v750 = vpop.f32.mrf.mxu0
        %v751 = vadd.f32 %v722, %v750
        %752 = vdwg.mxu0
        %753 = vmatpush.msra.mxu0 %v546
        %754 = vmatpush.msra.mxu0 %v542
        %755 = vmatpush.msra.mxu0 %v538
        %756 = vmatpush.msra.mxu0 %v534
        %757 = vmatpush.msra.mxu0 %v530
        %758 = vmatpush.msra.mxu0 %v526
        %759 = vmatpush.msra.mxu0 %v522
        %760 = vmatpush.msra.mxu0 %v518
        %761 = vmatpush.msra.mxu0 %v514
        %762 = vmatpush.msra.mxu0 %v510
        %763 = vmatpush.msra.mxu0 %v506
        %764 = vmatpush.msra.mxu0 %v502
        %765 = vmatpush.msra.mxu0 %v498
        %766 = vmatpush.msra.mxu0 %v494
        %767 = vmatpush.msra.mxu0 %v490
        %768 = vmatpush.msra.mxu0 %v486
        %769 = vmatmul.f32.gmra.mxu0 %v473
        %v770 = vpop.f32.mrf.mxu0
        %v771 = vadd.f32 %v636, %v770
        %772 = vmatmul.f32.gmra.mxu0 %v476
        %v773 = vpop.f32.mrf.mxu0
        %v774 = vadd.f32 %v641, %v773
        %775 = vmatmul.f32.gmra.mxu0 %v479
        %v776 = vpop.f32.mrf.mxu0
        %v777 = vadd.f32 %v646, %v776
        %778 = vmatmul.f32.gmra.mxu0 %v482
        %v779 = vpop.f32.mrf.mxu0
        %v780 = vadd.f32 %v651, %v779
        %781 = vdwg.mxu0
        %782 = vmatpush.msra.mxu0 %v610
        %783 = vmatpush.msra.mxu0 %v606
        %784 = vmatpush.msra.mxu0 %v602
        %785 = vmatpush.msra.mxu0 %v598
        %786 = vmatpush.msra.mxu0 %v594
        %787 = vmatpush.msra.mxu0 %v590
        %788 = vmatpush.msra.mxu0 %v586
        %789 = vmatpush.msra.mxu0 %v582
        %790 = vmatpush.msra.mxu0 %v578
        %791 = vmatpush.msra.mxu0 %v574
        %792 = vmatpush.msra.mxu0 %v570
        %793 = vmatpush.msra.mxu0 %v566
        %794 = vmatpush.msra.mxu0 %v562
        %795 = vmatpush.msra.mxu0 %v558
        %796 = vmatpush.msra.mxu0 %v554
        %797 = vmatpush.msra.mxu0 %v550
        %798 = vmatmul.f32.gmra.mxu0 %v474
        %v799 = vpop.f32.mrf.mxu0
        %v800 = vadd.f32 %v771, %v799
        %801 = vmatmul.f32.gmra.mxu0 %v477
        %v802 = vpop.f32.mrf.mxu0
        %v803 = vadd.f32 %v774, %v802
        %804 = vmatmul.f32.gmra.mxu0 %v480
        %v805 = vpop.f32.mrf.mxu0
        %v806 = vadd.f32 %v777, %v805
        %807 = vmatmul.f32.gmra.mxu0 %v483
        %v808 = vpop.f32.mrf.mxu0
        %v809 = vadd.f32 %v780, %v808
        %810 = vdwg.mxu0
        %811 = vmatpush.msra.mxu0 0.0
        %812 = vmatpush.msra.mxu0 0.0
        %813 = vmatpush.msra.mxu0 0.0
        %814 = vmatpush.msra.mxu0 0.0
        %815 = vmatpush.msra.mxu0 0.0
        %816 = vmatpush.msra.mxu0 0.0
        %817 = vmatpush.msra.mxu0 0.0
        %818 = vmatpush.msra.mxu0 0.0
        %819 = vmatpush.msra.mxu0 0.0
        %820 = vmatpush.msra.mxu0 0.0
        %821 = vmatpush.msra.mxu0 0.0
        %822 = vmatpush.msra.mxu0 0.0
        %823 = vmatpush.msra.mxu0 %v626
        %824 = vmatpush.msra.mxu0 %v622
        %825 = vmatpush.msra.mxu0 %v618
        %826 = vmatpush.msra.mxu0 %v614
        %827 = vmatmul.f32.gmra.mxu0 %v655
        %v828 = vpop.f32.mrf.mxu0
        %v829 = vadd.f32 %v800, %v828
        %830 = vmatmul.f32.gmra.mxu0 %v658
        %v831 = vpop.f32.mrf.mxu0
        %v832 = vadd.f32 %v803, %v831
        %833 = vmatmul.f32.gmra.mxu0 %v661
        %v834 = vpop.f32.mrf.mxu0
        %v835 = vadd.f32 %v806, %v834
        %836 = vmatmul.f32.gmra.mxu0 %v664
        %v837 = vpop.f32.mrf.mxu0
        %v838 = vadd.f32 %v809, %v837
        %839 = vdwg.mxu0
        %840 = vmatpush.msra.mxu0 %v547
        %841 = vmatpush.msra.mxu0 %v543
        %842 = vmatpush.msra.mxu0 %v539
        %843 = vmatpush.msra.mxu0 %v535
        %844 = vmatpush.msra.mxu0 %v531
        %845 = vmatpush.msra.mxu0 %v527
        %846 = vmatpush.msra.mxu0 %v523
        %847 = vmatpush.msra.mxu0 %v519
        %848 = vmatpush.msra.mxu0 %v515
        %849 = vmatpush.msra.mxu0 %v511
        %850 = vmatpush.msra.mxu0 %v507
        %851 = vmatpush.msra.mxu0 %v503
        %852 = vmatpush.msra.mxu0 %v499
        %853 = vmatpush.msra.mxu0 %v495
        %854 = vmatpush.msra.mxu0 %v491
        %855 = vmatpush.msra.mxu0 %v487
        %856 = vmatmul.f32.gmra.mxu0 %v473
        %v857 = vpop.f32.mrf.mxu0
        %v858 = vadd.f32 %v636, %v857
        %859 = vmatmul.f32.gmra.mxu0 %v476
        %v860 = vpop.f32.mrf.mxu0
        %v861 = vadd.f32 %v641, %v860
        %862 = vmatmul.f32.gmra.mxu0 %v479
        %v863 = vpop.f32.mrf.mxu0
        %v864 = vadd.f32 %v646, %v863
        %865 = vmatmul.f32.gmra.mxu0 %v482
        %v866 = vpop.f32.mrf.mxu0
        %v867 = vadd.f32 %v651, %v866
        %868 = vdwg.mxu0
        %869 = vmatpush.msra.mxu0 %v611
        %870 = vmatpush.msra.mxu0 %v607
        %871 = vmatpush.msra.mxu0 %v603
        %872 = vmatpush.msra.mxu0 %v599
        %873 = vmatpush.msra.mxu0 %v595
        %874 = vmatpush.msra.mxu0 %v591
        %875 = vmatpush.msra.mxu0 %v587
        %876 = vmatpush.msra.mxu0 %v583
        %877 = vmatpush.msra.mxu0 %v579
        %878 = vmatpush.msra.mxu0 %v575
        %879 = vmatpush.msra.mxu0 %v571
        %880 = vmatpush.msra.mxu0 %v567
        %881 = vmatpush.msra.mxu0 %v563
        %882 = vmatpush.msra.mxu0 %v559
        %883 = vmatpush.msra.mxu0 %v555
        %884 = vmatpush.msra.mxu0 %v551
        %885 = vmatmul.f32.gmra.mxu0 %v474
        %v886 = vpop.f32.mrf.mxu0
        %v887 = vadd.f32 %v858, %v886
        %888 = vmatmul.f32.gmra.mxu0 %v477
        %v889 = vpop.f32.mrf.mxu0
        %v890 = vadd.f32 %v861, %v889
        %891 = vmatmul.f32.gmra.mxu0 %v480
        %v892 = vpop.f32.mrf.mxu0
        %v893 = vadd.f32 %v864, %v892
        %894 = vmatmul.f32.gmra.mxu0 %v483
        %v895 = vpop.f32.mrf.mxu0
        %v896 = vadd.f32 %v867, %v895
        %897 = vdwg.mxu0
        %898 = vmatpush.msra.mxu0 0.0
        %899 = vmatpush.msra.mxu0 0.0
        %900 = vmatpush.msra.mxu0 0.0
        %901 = vmatpush.msra.mxu0 0.0
        %902 = vmatpush.msra.mxu0 0.0
        %903 = vmatpush.msra.mxu0 0.0
        %904 = vmatpush.msra.mxu0 0.0
        %905 = vmatpush.msra.mxu0 0.0
        %906 = vmatpush.msra.mxu0 0.0
        %907 = vmatpush.msra.mxu0 0.0
        %908 = vmatpush.msra.mxu0 0.0
        %909 = vmatpush.msra.mxu0 0.0
        %910 = vmatpush.msra.mxu0 %v627
        %911 = vmatpush.msra.mxu0 %v623
        %912 = vmatpush.msra.mxu0 %v619
        %913 = vmatpush.msra.mxu0 %v615
        %914 = vmatmul.f32.gmra.mxu0 %v655
        %v915 = vpop.f32.mrf.mxu0
        %v916 = vadd.f32 %v887, %v915
        %917 = vmatmul.f32.gmra.mxu0 %v658
        %v918 = vpop.f32.mrf.mxu0
        %v919 = vadd.f32 %v890, %v918
        %920 = vmatmul.f32.gmra.mxu0 %v661
        %v921 = vpop.f32.mrf.mxu0
        %v922 = vadd.f32 %v893, %v921
        %923 = vmatmul.f32.gmra.mxu0 %v664
        %v924 = vpop.f32.mrf.mxu0
        %v925 = vadd.f32 %v896, %v924
        %926 = vdwg.mxu0
        %927 = vmatpush.msra.mxu0 %v548
        %928 = vmatpush.msra.mxu0 %v544
        %929 = vmatpush.msra.mxu0 %v540
        %930 = vmatpush.msra.mxu0 %v536
        %931 = vmatpush.msra.mxu0 %v532
        %932 = vmatpush.msra.mxu0 %v528
        %933 = vmatpush.msra.mxu0 %v524
        %934 = vmatpush.msra.mxu0 %v520
        %935 = vmatpush.msra.mxu0 %v516
        %936 = vmatpush.msra.mxu0 %v512
        %937 = vmatpush.msra.mxu0 %v508
        %938 = vmatpush.msra.mxu0 %v504
        %939 = vmatpush.msra.mxu0 %v500
        %940 = vmatpush.msra.mxu0 %v496
        %941 = vmatpush.msra.mxu0 %v492
        %942 = vmatpush.msra.mxu0 %v488
        %943 = vmatmul.f32.gmra.mxu0 %v473
        %v944 = vpop.f32.mrf.mxu0
        %v945 = vadd.f32 %v636, %v944
        %946 = vmatmul.f32.gmra.mxu0 %v476
        %v947 = vpop.f32.mrf.mxu0
        %v948 = vadd.f32 %v641, %v947
        %949 = vmatmul.f32.gmra.mxu0 %v479
        %v950 = vpop.f32.mrf.mxu0
        %v951 = vadd.f32 %v646, %v950
        %952 = vmatmul.f32.gmra.mxu0 %v482
        %v953 = vpop.f32.mrf.mxu0
        %v954 = vadd.f32 %v651, %v953
        %955 = vdwg.mxu0
        %956 = vmatpush.msra.mxu0 %v612
        %957 = vmatpush.msra.mxu0 %v608
        %958 = vmatpush.msra.mxu0 %v604
        %959 = vmatpush.msra.mxu0 %v600
        %960 = vmatpush.msra.mxu0 %v596
        %961 = vmatpush.msra.mxu0 %v592
        %962 = vmatpush.msra.mxu0 %v588
        %963 = vmatpush.msra.mxu0 %v584
        %964 = vmatpush.msra.mxu0 %v580
        %965 = vmatpush.msra.mxu0 %v576
        %966 = vmatpush.msra.mxu0 %v572
        %967 = vmatpush.msra.mxu0 %v568
        %968 = vmatpush.msra.mxu0 %v564
        %969 = vmatpush.msra.mxu0 %v560
        %970 = vmatpush.msra.mxu0 %v556
        %971 = vmatpush.msra.mxu0 %v552
        %972 = vmatmul.f32.gmra.mxu0 %v474
        %v973 = vpop.f32.mrf.mxu0
        %v974 = vadd.f32 %v945, %v973
        %975 = vmatmul.f32.gmra.mxu0 %v477
        %v976 = vpop.f32.mrf.mxu0
        %v977 = vadd.f32 %v948, %v976
        %978 = vmatmul.f32.gmra.mxu0 %v480
        %v979 = vpop.f32.mrf.mxu0
        %v980 = vadd.f32 %v951, %v979
        %981 = vmatmul.f32.gmra.mxu0 %v483
        %v982 = vpop.f32.mrf.mxu0
        %v983 = vadd.f32 %v954, %v982
        %984 = vdwg.mxu0
        %985 = vmatpush.msra.mxu0 0.0
        %986 = vmatpush.msra.mxu0 0.0
        %987 = vmatpush.msra.mxu0 0.0
        %988 = vmatpush.msra.mxu0 0.0
        %989 = vmatpush.msra.mxu0 0.0
        %990 = vmatpush.msra.mxu0 0.0
        %991 = vmatpush.msra.mxu0 0.0
        %992 = vmatpush.msra.mxu0 0.0
        %993 = vmatpush.msra.mxu0 0.0
        %994 = vmatpush.msra.mxu0 0.0
        %995 = vmatpush.msra.mxu0 0.0
        %996 = vmatpush.msra.mxu0 0.0
        %997 = vmatpush.msra.mxu0 %v628
        %998 = vmatpush.msra.mxu0 %v624
        %999 = vmatpush.msra.mxu0 %v620
        %1000 = vmatpush.msra.mxu0 %v616
        %1001 = vmatmul.f32.gmra.mxu0 %v655
        %v1002 = vpop.f32.mrf.mxu0
        %v1003 = vadd.f32 %v974, %v1002
        %1004 = vmatmul.f32.gmra.mxu0 %v658
        %v1005 = vpop.f32.mrf.mxu0
        %v1006 = vadd.f32 %v977, %v1005
        %1007 = vmatmul.f32.gmra.mxu0 %v661
        %v1008 = vpop.f32.mrf.mxu0
        %v1009 = vadd.f32 %v980, %v1008
        %1010 = vmatmul.f32.gmra.mxu0 %v664
        %v1011 = vpop.f32.mrf.mxu0
        %v1012 = vadd.f32 %v983, %v1011
        %1013 = vdwg.mxu0
        %1014 = vst [vmem:[%s470] sm:$0xff] %v742
        %1015 = vst [vmem:[%s470 + $0x8] sm:$0xff] %v829
        %1016 = vst [vmem:[%s470 + $0x10] sm:$0xff] %v916
        %1017 = vst [vmem:[%s470 + $0x18] sm:$0xff] %v1003
        %1018 = vst [vmem:[%s470 + $0x20] sm:$0xff] %v745
        %1019 = vst [vmem:[%s470 + $0x28] sm:$0xff] %v832
        %1020 = vst [vmem:[%s470 + $0x30] sm:$0xff] %v919
        %1021 = vst [vmem:[%s470 + $0x38] sm:$0xff] %v1006
        %1022 = vst [vmem:[%s470 + $0x40] sm:$0xff] %v748
        %1023 = vst [vmem:[%s470 + $0x48] sm:$0xff] %v835
        %1024 = vst [vmem:[%s470 + $0x50] sm:$0xff] %v922
        %1025 = vst [vmem:[%s470 + $0x58] sm:$0xff] %v1009
        %1026 = vst [vmem:[%s470 + $0x60] sm:$0xff] %v751
        %1027 = vst [vmem:[%s470 + $0x68] sm:$0xff] %v838
        %1028 = vst [vmem:[%s470 + $0x70] sm:$0xff] %v925
        %1029 = vst [vmem:[%s470 + $0x78] sm:$0xff] %v1012
        %s1030 = sand.u32 %s90, 1
        %s1031 = sand.u32 %s90, 1
        %s1032 = smul.addr %s1031, 128
        %s1033 = scalar_lea.vmem [#allocation3], %s1032
        // Predicated region
        $region56: #{encoder_forward.12} parent=50 // pred_check
          %p1034 = pneg %p100
        $region57: #{encoder_forward.12} parent=50 // pred_check_branch
          %1036 = sbr.rel (%p1034) target = $region59
        $region58: #{encoder_forward.12} parent=50 // pred_region
          %s1037 = smul.u32 4, %s14
          %s1038 = smul.addr %s1037, 8
          %s1039 = scalar_lea.vmem %s3, %s1038
          // Predicated region
          $region60: #{encoder_forward.12} parent=58 // pred_check
            _
          $region61: #{encoder_forward.12} parent=58 // pred_check_branch
            %1041 = sbr.rel (0) target = $region63
          $region62: #{encoder_forward.12} parent=58 // pred_region
            // Predicated region
            $region64: #{encoder_forward.12} parent=62 // pred_check
              _
            $region65: #{encoder_forward.12} parent=62 // pred_check_branch
              %1043 = sbr.rel (0) target = $region67
            $region66: #{encoder_forward.12} parent=62 // pred_region
              loop: start=0, step=1, limit=1
              $region68: #{encoder_forward.12} parent=66 // loop_pre_header
                _
              $region69: #{encoder_forward.12} parent=66 // loop_header
                %s1045 = sphi 0, %s1049
                %p1046 = scmp.ge.s32.totalorder %s1045, 1
                %s1050 = sphi %s1033, %s1033
                %s1051 = sphi %s1039, %s1039
              $region70: #{encoder_forward.12} parent=66 // loop_header_branch
                %1048 = sbr.rel (%p1046) target = $region74
              $region71: #{encoder_forward.12} parent=66 // loop_body
                %v1052 = vld [vmem:[%s1050] sm:$0xff]
                %1053 = vst [vmem:[%s1051] sm:$0xff] %v1052
                %v1054 = vld [vmem:[%s1050 + $0x8] sm:$0xff]
                %1055 = vst [vmem:[%s1051 + $0x8] sm:$0xff] %v1054
                %v1056 = vld [vmem:[%s1050 + $0x10] sm:$0xff]
                %1057 = vst [vmem:[%s1051 + $0x10] sm:$0xff] %v1056
                %v1058 = vld [vmem:[%s1050 + $0x18] sm:$0xff]
                %1059 = vst [vmem:[%s1051 + $0x18] sm:$0xff] %v1058
                %v1060 = vld [vmem:[%s1050 + $0x20] sm:$0xff]
                %1061 = vst [vmem:[%s1051 + $0x60] sm:$0xff] %v1060
                %v1062 = vld [vmem:[%s1050 + $0x28] sm:$0xff]
                %1063 = vst [vmem:[%s1051 + $0x68] sm:$0xff] %v1062
                %v1064 = vld [vmem:[%s1050 + $0x30] sm:$0xff]
                %1065 = vst [vmem:[%s1051 + $0x70] sm:$0xff] %v1064
                %v1066 = vld [vmem:[%s1050 + $0x38] sm:$0xff]
                %1067 = vst [vmem:[%s1051 + $0x78] sm:$0xff] %v1066
                %v1068 = vld [vmem:[%s1050 + $0x40] sm:$0xff]
                %1069 = vst [vmem:[%s1051 + $0xc0] sm:$0xff] %v1068
                %v1070 = vld [vmem:[%s1050 + $0x48] sm:$0xff]
                %1071 = vst [vmem:[%s1051 + $0xc8] sm:$0xff] %v1070
                %v1072 = vld [vmem:[%s1050 + $0x50] sm:$0xff]
                %1073 = vst [vmem:[%s1051 + $0xd0] sm:$0xff] %v1072
                %v1074 = vld [vmem:[%s1050 + $0x58] sm:$0xff]
                %1075 = vst [vmem:[%s1051 + $0xd8] sm:$0xff] %v1074
                %v1076 = vld [vmem:[%s1050 + $0x60] sm:$0xff]
                %1077 = vst [vmem:[%s1051 + $0x120] sm:$0xff] %v1076
                %v1078 = vld [vmem:[%s1050 + $0x68] sm:$0xff]
                %1079 = vst [vmem:[%s1051 + $0x128] sm:$0xff] %v1078
                %v1080 = vld [vmem:[%s1050 + $0x70] sm:$0xff]
                %1081 = vst [vmem:[%s1051 + $0x130] sm:$0xff] %v1080
                %v1082 = vld [vmem:[%s1050 + $0x78] sm:$0xff]
                %1083 = vst [vmem:[%s1051 + $0x138] sm:$0xff] %v1082
              $region72: #{encoder_forward.12} parent=66 // loop_footer
                %s1049 = sadd.s32 1, %s1045
              $region73: #{encoder_forward.12} parent=66 // loop_footer_branch
                %1044 = sbr.rel target = $region69
              $region74: #{encoder_forward.12} parent=66 // loop_exit
                _
            $region67: #{encoder_forward.12} parent=62 // pred_fallthru
              _
            // Predicated region
            $region75: #{encoder_forward.12} parent=62 // pred_check
              _
            $region76: #{encoder_forward.12} parent=62 // pred_check_branch
              %1085 = sbr.rel target = $region78
            $region77: #{encoder_forward.12} parent=62 // pred_region
              _
            $region78: #{encoder_forward.12} parent=62 // pred_fallthru
              _
          $region63: #{encoder_forward.12} parent=58 // pred_fallthru
            _
          %1086 = vnop
        $region59: #{encoder_forward.12} parent=50 // pred_fallthru
          _
      $region51: #{encoder_forward.12} parent=5 // pred_fallthru
        _
      %p1087 = scmp.le.s32.totalorder 2, %s9
      // Predicated region
      $region79: #{encoder_forward.12} parent=5 // pred_check
        %p1088 = pneg %p1087
      $region80: #{encoder_forward.12} parent=5 // pred_check_branch
        %1090 = sbr.rel (%p1088) target = $region82
      $region81: #{encoder_forward.12} parent=5 // pred_region
        %s1091 = ssub.s32 %s9, 2
        // Predicated region
        $region83: #{encoder_forward.12} parent=81 // pred_check
          %p1092 = pneg %p106
        $region84: #{encoder_forward.12} parent=81 // pred_check_branch
          %1094 = sbr.rel (%p1092) target = $region86
        $region85: #{encoder_forward.12} parent=81 // pred_region
          %s1095 = sand.u32 %s91, 1
          %s1096 = sand.u32 %s91, 1
          %s1097 = smul.addr %s1096, 128
          %s1098 = scalar_lea.vmem [#allocation3], %s1097
        $region86: #{encoder_forward.12} parent=81 // pred_fallthru
          _
      $region82: #{encoder_forward.12} parent=5 // pred_fallthru
        _
    $region6: #{encoder_forward.12} parent=1 // loop_footer
      %s13 = sadd.s32 1, %s9
    $region7: #{encoder_forward.12} parent=1 // loop_footer_branch
      %8 = sbr.rel target = $region3
    $region8: #{encoder_forward.12} parent=1 // loop_exit
      _

// kernel: encoder_forward.13
$region0: #{encoder_forward.13}
  #allocation0 [shape = 'u32[]', space=smem, size = 0x4, offset = 0x4, fixed_abs, tag = 'smem constant byte address 0x4 - core index']
  #allocation1 [shape = 'u32[72,128]{1,0:T(1,128)}', space=vmem, size = 0x9000, scoped, tag = 'internal scratch']
  %s0 = inlined_call_operand.vmem [shape: f32[88,128], index: 0, kind: input, shape index: {}]
  %s1 = inlined_call_operand.vmem [shape: f32[88,128], index: 1, kind: input, shape index: {}]
  %s2 = inlined_call_operand.vmem [shape: f32[88,128], index: 2, kind: input, shape index: {}]
  %s3 = inlined_call_operand.vmem [shape: f32[88,128], index: 3, kind: input, shape index: {}]
  %s4 = inlined_call_operand.vmem [shape: f32[88,128], index: 4, kind: output, shape index: {}]
  %s5 = sld [smem:[#allocation0]]
  $region26: #{encoder_forward.13} parent=0
    _
  %s7 = ssub.s32 1, %s5
  %s8 = scalar_select 0, %s7, %s5
  // Predicated region
  $region2: #{encoder_forward.13} parent=0 // pred_check
    _
  $region3: #{encoder_forward.13} parent=0 // pred_check_branch
    %10 = sbr.rel (0) target = $region5
  $region4: #{encoder_forward.13} parent=0 // pred_region
    _
  $region5: #{encoder_forward.13} parent=0 // pred_fallthru
    _
  // Predicated region
  $region6: #{encoder_forward.13} parent=0 // pred_check
    _
  $region7: #{encoder_forward.13} parent=0 // pred_check_branch
    %12 = sbr.rel (0) target = $region9
  $region8: #{encoder_forward.13} parent=0 // pred_region
    _
  $region9: #{encoder_forward.13} parent=0 // pred_fallthru
    _
  // Predicated region
  $region10: #{encoder_forward.13} parent=0 // pred_check
    _
  $region11: #{encoder_forward.13} parent=0 // pred_check_branch
    %14 = sbr.rel (0) target = $region13
  $region12: #{encoder_forward.13} parent=0 // pred_region
    _
  $region13: #{encoder_forward.13} parent=0 // pred_fallthru
    _
  // Predicated region
  $region14: #{encoder_forward.13} parent=0 // pred_check
    _
  $region15: #{encoder_forward.13} parent=0 // pred_check_branch
    %16 = sbr.rel (0) target = $region17
  $region16: #{encoder_forward.13} parent=0 // pred_region
    _
  $region17: #{encoder_forward.13} parent=0 // pred_fallthru
    _
  %v17 = vld [vmem:[%s0] sm:$0xff]
  %v18 = vld [vmem:[%s0 + $0x8] sm:$0xff]
  %v19 = vld [vmem:[%s0 + $0x10] sm:$0xff]
  %v20 = vld [vmem:[%s0 + $0x18] sm:$0xff]
  %v21 = vld [vmem:[%s0 + $0x20] sm:$0xff]
  %v22 = vld [vmem:[%s0 + $0x28] sm:$0xff]
  %v23 = vld [vmem:[%s0 + $0x30] sm:$0xff]
  %v24 = vld [vmem:[%s0 + $0x38] sm:$0xff]
  %v25 = vld [vmem:[%s0 + $0x40] sm:$0xff]
  %v26 = vld [vmem:[%s0 + $0x48] sm:$0xff]
  %v27 = vld [vmem:[%s0 + $0x50] sm:$0xff]
  %v28 = vld [vmem:[%s1] sm:$0xff]
  %v29 = vld [vmem:[%s1 + $0x8] sm:$0xff]
  %v30 = vld [vmem:[%s1 + $0x10] sm:$0xff]
  %v31 = vld [vmem:[%s1 + $0x18] sm:$0xff]
  %v32 = vld [vmem:[%s1 + $0x20] sm:$0xff]
  %v33 = vld [vmem:[%s1 + $0x28] sm:$0xff]
  %v34 = vld [vmem:[%s1 + $0x30] sm:$0xff]
  %v35 = vld [vmem:[%s1 + $0x38] sm:$0xff]
  %v36 = vld [vmem:[%s1 + $0x40] sm:$0xff]
  %v37 = vld [vmem:[%s1 + $0x48] sm:$0xff]
  %v38 = vld [vmem:[%s1 + $0x50] sm:$0xff]
  %v39 = vmax.f32 %v17, %v28
  %v40 = vmax.f32 %v18, %v29
  %v41 = vmax.f32 %v19, %v30
  %v42 = vmax.f32 %v20, %v31
  %v43 = vmax.f32 %v21, %v32
  %v44 = vmax.f32 %v22, %v33
  %v45 = vmax.f32 %v23, %v34
  %v46 = vmax.f32 %v24, %v35
  %v47 = vmax.f32 %v25, %v36
  %v48 = vmax.f32 %v26, %v37
  %v49 = vmax.f32 %v27, %v38
  %v50 = vld [vmem:[%s2] sm:$0xff]
  %v51 = vld [vmem:[%s2 + $0x8] sm:$0xff]
  %v52 = vld [vmem:[%s2 + $0x10] sm:$0xff]
  %v53 = vld [vmem:[%s2 + $0x18] sm:$0xff]
  %v54 = vld [vmem:[%s2 + $0x20] sm:$0xff]
  %v55 = vld [vmem:[%s2 + $0x28] sm:$0xff]
  %v56 = vld [vmem:[%s2 + $0x30] sm:$0xff]
  %v57 = vld [vmem:[%s2 + $0x38] sm:$0xff]
  %v58 = vld [vmem:[%s2 + $0x40] sm:$0xff]
  %v59 = vld [vmem:[%s2 + $0x48] sm:$0xff]
  %v60 = vld [vmem:[%s2 + $0x50] sm:$0xff]
  %v61 = vld [vmem:[%s3] sm:$0xff]
  %v62 = vld [vmem:[%s3 + $0x8] sm:$0xff]
  %v63 = vld [vmem:[%s3 + $0x10] sm:$0xff]
  %v64 = vld [vmem:[%s3 + $0x18] sm:$0xff]
  %v65 = vld [vmem:[%s3 + $0x20] sm:$0xff]
  %v66 = vld [vmem:[%s3 + $0x28] sm:$0xff]
  %v67 = vld [vmem:[%s3 + $0x30] sm:$0xff]
  %v68 = vld [vmem:[%s3 + $0x38] sm:$0xff]
  %v69 = vld [vmem:[%s3 + $0x40] sm:$0xff]
  %v70 = vld [vmem:[%s3 + $0x48] sm:$0xff]
  %v71 = vld [vmem:[%s3 + $0x50] sm:$0xff]
  %v72 = vmax.f32 %v50, %v61
  %v73 = vmax.f32 %v51, %v62
  %v74 = vmax.f32 %v52, %v63
  %v75 = vmax.f32 %v53, %v64
  %v76 = vmax.f32 %v54, %v65
  %v77 = vmax.f32 %v55, %v66
  %v78 = vmax.f32 %v56, %v67
  %v79 = vmax.f32 %v57, %v68
  %v80 = vmax.f32 %v58, %v69
  %v81 = vmax.f32 %v59, %v70
  %v82 = vmax.f32 %v60, %v71
  %v83 = vmax.f32 %v39, %v72
  %v84 = vmax.f32 %v40, %v73
  %v85 = vmax.f32 %v41, %v74
  %v86 = vmax.f32 %v42, %v75
  %v87 = vmax.f32 %v43, %v76
  %v88 = vmax.f32 %v44, %v77
  %v89 = vmax.f32 %v45, %v78
  %v90 = vmax.f32 %v46, %v79
  %v91 = vmax.f32 %v47, %v80
  %v92 = vmax.f32 %v48, %v81
  %v93 = vmax.f32 %v49, %v82
  %94 = vst [vmem:[%s4] sm:$0xff] %v83
  %95 = vst [vmem:[%s4 + $0x8] sm:$0xff] %v84
  %96 = vst [vmem:[%s4 + $0x10] sm:$0xff] %v85
  %97 = vst [vmem:[%s4 + $0x18] sm:$0xff] %v86
  %98 = vst [vmem:[%s4 + $0x20] sm:$0xff] %v87
  %99 = vst [vmem:[%s4 + $0x28] sm:$0xff] %v88
  %100 = vst [vmem:[%s4 + $0x30] sm:$0xff] %v89
  %101 = vst [vmem:[%s4 + $0x38] sm:$0xff] %v90
  %102 = vst [vmem:[%s4 + $0x40] sm:$0xff] %v91
  %103 = vst [vmem:[%s4 + $0x48] sm:$0xff] %v92
  %104 = vst [vmem:[%s4 + $0x50] sm:$0xff] %v93
  // Predicated region
  $region18: #{encoder_forward.13} parent=0 // pred_check
    _
  $region19: #{encoder_forward.13} parent=0 // pred_check_branch
    %106 = sbr.rel (0) target = $region21
  $region20: #{encoder_forward.13} parent=0 // pred_region
    _
  $region21: #{encoder_forward.13} parent=0 // pred_fallthru
    _
  // Predicated region
  $region22: #{encoder_forward.13} parent=0 // pred_check
    _
  $region23: #{encoder_forward.13} parent=0 // pred_check_branch
    %108 = sbr.rel (0) target = $region25
  $region24: #{encoder_forward.13} parent=0 // pred_region
    _
  $region25: #{encoder_forward.13} parent=0 // pred_fallthru
    _

// kernel: encoder_forward.14
$region0: #{encoder_forward.14}
  #allocation0 [shape = 'u32[]', space=smem, size = 0x4, offset = 0x4, fixed_abs, tag = 'smem constant byte address 0x4 - core index']
  #allocation1 [shape = 'u32[72,128]{1,0:T(1,128)}', space=vmem, size = 0x9000, scoped, tag = 'internal scratch']
  %s0 = inlined_call_operand.vmem [shape: f32[64,288], index: 0, kind: input, shape index: {}]
  %s1 = inlined_call_operand.vmem [shape: f32[288,256], index: 1, kind: input, shape index: {}]
  %s2 = inlined_call_operand.vmem [shape: f32[64,1], index: 2, kind: input, shape index: {}]
  %s3 = inlined_call_operand.vmem [shape: f32[64,256], index: 3, kind: output, shape index: {}]
  %s4 = sld [smem:[#allocation0]]
  $region22: #{encoder_forward.14} parent=0
    _
  %s6 = ssub.s32 1, %s4
  %s7 = scalar_select 0, %s6, %s4
  // Predicated region
  $region2: #{encoder_forward.14} parent=0 // pred_check
    _
  $region3: #{encoder_forward.14} parent=0 // pred_check_branch
    %9 = sbr.rel (0) target = $region5
  $region4: #{encoder_forward.14} parent=0 // pred_region
    _
  $region5: #{encoder_forward.14} parent=0 // pred_fallthru
    _
  // Predicated region
  $region6: #{encoder_forward.14} parent=0 // pred_check
    _
  $region7: #{encoder_forward.14} parent=0 // pred_check_branch
    %11 = sbr.rel (0) target = $region9
  $region8: #{encoder_forward.14} parent=0 // pred_region
    _
  $region9: #{encoder_forward.14} parent=0 // pred_fallthru
    _
  // Predicated region
  $region10: #{encoder_forward.14} parent=0 // pred_check
    _
  $region11: #{encoder_forward.14} parent=0 // pred_check_branch
    %13 = sbr.rel (0) target = $region13
  $region12: #{encoder_forward.14} parent=0 // pred_region
    _
  $region13: #{encoder_forward.14} parent=0 // pred_fallthru
    _
  %v14 = vld [vmem:[%s0] sm:$0xff]
  %v15 = vld [vmem:[%s0 + $0x8] sm:$0xff]
  %v16 = vld [vmem:[%s0 + $0x10] sm:$0xff]
  %v17 = vld [vmem:[%s0 + $0x18] sm:$0xff]
  %v18 = vld [vmem:[%s0 + $0x20] sm:$0xff]
  %v19 = vld [vmem:[%s0 + $0x28] sm:$0xff]
  %v20 = vld [vmem:[%s0 + $0x30] sm:$0xff]
  %v21 = vld [vmem:[%s0 + $0x38] sm:$0xff]
  %v22 = vld [vmem:[%s0 + $0x40] sm:$0xff]
  %v23 = vld [vmem:[%s0 + $0x48] sm:$0xff]
  %v24 = vld [vmem:[%s0 + $0x50] sm:$0xff]
  %v25 = vld [vmem:[%s0 + $0x58] sm:$0xff]
  %v26 = vld [vmem:[%s0 + $0x60] sm:$0xff]
  %v27 = vld [vmem:[%s0 + $0x68] sm:$0xff]
  %v28 = vld [vmem:[%s0 + $0x70] sm:$0xff]
  %v29 = vld [vmem:[%s0 + $0x78] sm:$0xff]
  %v30 = vld [vmem:[%s0 + $0x80] sm:$0xff]
  %v31 = vld [vmem:[%s0 + $0x88] sm:$0xff]
  %v32 = vld [vmem:[%s0 + $0x90] sm:$0xff]
  %v33 = vld [vmem:[%s0 + $0x98] sm:$0xff]
  %v34 = vld [vmem:[%s0 + $0xa0] sm:$0xff]
  %v35 = vld [vmem:[%s0 + $0xa8] sm:$0xff]
  %v36 = vld [vmem:[%s0 + $0xb0] sm:$0xff]
  %v37 = vld [vmem:[%s0 + $0xb8] sm:$0xff]
  %v38 = vld [vmem:[%s1] sm:$0xff]
  %v39 = vld [vmem:[%s1 + $0x8] sm:$0xff]
  %v40 = vld [vmem:[%s1 + $0x10] sm:$0xff]
  %v41 = vld [vmem:[%s1 + $0x18] sm:$0xff]
  %v42 = vld [vmem:[%s1 + $0x20] sm:$0xff]
  %v43 = vld [vmem:[%s1 + $0x28] sm:$0xff]
  %v44 = vld [vmem:[%s1 + $0x30] sm:$0xff]
  %v45 = vld [vmem:[%s1 + $0x38] sm:$0xff]
  %v46 = vld [vmem:[%s1 + $0x40] sm:$0xff]
  %v47 = vld [vmem:[%s1 + $0x48] sm:$0xff]
  %v48 = vld [vmem:[%s1 + $0x50] sm:$0xff]
  %v49 = vld [vmem:[%s1 + $0x58] sm:$0xff]
  %v50 = vld [vmem:[%s1 + $0x60] sm:$0xff]
  %v51 = vld [vmem:[%s1 + $0x68] sm:$0xff]
  %v52 = vld [vmem:[%s1 + $0x70] sm:$0xff]
  %v53 = vld [vmem:[%s1 + $0x78] sm:$0xff]
  %v54 = vld [vmem:[%s1 + $0x80] sm:$0xff]
  %v55 = vld [vmem:[%s1 + $0x88] sm:$0xff]
  %v56 = vld [vmem:[%s1 + $0x90] sm:$0xff]
  %v57 = vld [vmem:[%s1 + $0x98] sm:$0xff]
  %v58 = vld [vmem:[%s1 + $0xa0] sm:$0xff]
  %v59 = vld [vmem:[%s1 + $0xa8] sm:$0xff]
  %v60 = vld [vmem:[%s1 + $0xb0] sm:$0xff]
  %v61 = vld [vmem:[%s1 + $0xb8] sm:$0xff]
  %v62 = vld [vmem:[%s1 + $0xc0] sm:$0xff]
  %v63 = vld [vmem:[%s1 + $0xc8] sm:$0xff]
  %v64 = vld [vmem:[%s1 + $0xd0] sm:$0xff]
  %v65 = vld [vmem:[%s1 + $0xd8] sm:$0xff]
  %v66 = vld [vmem:[%s1 + $0xe0] sm:$0xff]
  %v67 = vld [vmem:[%s1 + $0xe8] sm:$0xff]
  %v68 = vld [vmem:[%s1 + $0xf0] sm:$0xff]
  %v69 = vld [vmem:[%s1 + $0xf8] sm:$0xff]
  %v70 = vld [vmem:[%s1 + $0x100] sm:$0xff]
  %v71 = vld [vmem:[%s1 + $0x108] sm:$0xff]
  %v72 = vld [vmem:[%s1 + $0x110] sm:$0xff]
  %v73 = vld [vmem:[%s1 + $0x118] sm:$0xff]
  %v74 = vld [vmem:[%s1 + $0x120] sm:$0xff]
  %v75 = vld [vmem:[%s1 + $0x128] sm:$0xff]
  %v76 = vld [vmem:[%s1 + $0x130] sm:$0xff]
  %v77 = vld [vmem:[%s1 + $0x138] sm:$0xff]
  %v78 = vld [vmem:[%s1 + $0x140] sm:$0xff]
  %v79 = vld [vmem:[%s1 + $0x148] sm:$0xff]
  %v80 = vld [vmem:[%s1 + $0x150] sm:$0xff]
  %v81 = vld [vmem:[%s1 + $0x158] sm:$0xff]
  %v82 = vld [vmem:[%s1 + $0x160] sm:$0xff]
  %v83 = vld [vmem:[%s1 + $0x168] sm:$0xff]
  %v84 = vld [vmem:[%s1 + $0x170] sm:$0xff]
  %v85 = vld [vmem:[%s1 + $0x178] sm:$0xff]
  %v86 = vld [vmem:[%s1 + $0x180] sm:$0xff]
  %v87 = vld [vmem:[%s1 + $0x188] sm:$0xff]
  %v88 = vld [vmem:[%s1 + $0x190] sm:$0xff]
  %v89 = vld [vmem:[%s1 + $0x198] sm:$0xff]
  %v90 = vld [vmem:[%s1 + $0x1a0] sm:$0xff]
  %v91 = vld [vmem:[%s1 + $0x1a8] sm:$0xff]
  %v92 = vld [vmem:[%s1 + $0x1b0] sm:$0xff]
  %v93 = vld [vmem:[%s1 + $0x1b8] sm:$0xff]
  %v94 = vld [vmem:[%s1 + $0x1c0] sm:$0xff]
  %v95 = vld [vmem:[%s1 + $0x1c8] sm:$0xff]
  %v96 = vld [vmem:[%s1 + $0x1d0] sm:$0xff]
  %v97 = vld [vmem:[%s1 + $0x1d8] sm:$0xff]
  %v98 = vld [vmem:[%s1 + $0x1e0] sm:$0xff]
  %v99 = vld [vmem:[%s1 + $0x1e8] sm:$0xff]
  %v100 = vld [vmem:[%s1 + $0x1f0] sm:$0xff]
  %v101 = vld [vmem:[%s1 + $0x1f8] sm:$0xff]
  %v102 = vld [vmem:[%s1 + $0x200] sm:$0xff]
  %v103 = vld [vmem:[%s1 + $0x208] sm:$0xff]
  %v104 = vld [vmem:[%s1 + $0x210] sm:$0xff]
  %v105 = vld [vmem:[%s1 + $0x218] sm:$0xff]
  %v106 = vld [vmem:[%s1 + $0x220] sm:$0xff]
  %v107 = vld [vmem:[%s1 + $0x228] sm:$0xff]
  %v108 = vld [vmem:[%s1 + $0x230] sm:$0xff]
  %v109 = vld [vmem:[%s1 + $0x238] sm:$0xff]
  %v110 = vld [vmem:[%s2] sm:$0xff]
  %v111 = vld [vmem:[%s2 + $0x8] sm:$0xff]
  %v112 = vld [vmem:[%s2 + $0x10] sm:$0xff]
  %v113 = vld [vmem:[%s2 + $0x18] sm:$0xff]
  %v114 = vld [vmem:[%s2 + $0x20] sm:$0xff]
  %v115 = vld [vmem:[%s2 + $0x28] sm:$0xff]
  %v116 = vld [vmem:[%s2 + $0x30] sm:$0xff]
  %v117 = vld [vmem:[%s2 + $0x38] sm:$0xff]
  %119 = vset.pattern.permute.xlu0 0
  %120 = vperm.xlu0 %119, %v110
  %v121 = vpop.permute.xlu0 %120
  %124 = vset.pattern.permute.xlu0 0
  %125 = vperm.xlu0 %124, %v111
  %v126 = vpop.permute.xlu0 %125
  %129 = vset.pattern.permute.xlu0 0
  %130 = vperm.xlu0 %129, %v112
  %v131 = vpop.permute.xlu0 %130
  %134 = vset.pattern.permute.xlu0 0
  %135 = vperm.xlu0 %134, %v113
  %v136 = vpop.permute.xlu0 %135
  %139 = vset.pattern.permute.xlu0 0
  %140 = vperm.xlu0 %139, %v114
  %v141 = vpop.permute.xlu0 %140
  %144 = vset.pattern.permute.xlu0 0
  %145 = vperm.xlu0 %144, %v115
  %v146 = vpop.permute.xlu0 %145
  %149 = vset.pattern.permute.xlu0 0
  %150 = vperm.xlu0 %149, %v116
  %v151 = vpop.permute.xlu0 %150
  %154 = vset.pattern.permute.xlu0 0
  %155 = vperm.xlu0 %154, %v117
  %v156 = vpop.permute.xlu0 %155
  %vm158 = vcmask 261120
  %v160 = vsel %vm158, %v16, 0
  %v163 = vsel %vm158, %v19, 0
  %v166 = vsel %vm158, %v22, 0
  %v169 = vsel %vm158, %v25, 0
  %v172 = vsel %vm158, %v28, 0
  %v175 = vsel %vm158, %v31, 0
  %v178 = vsel %vm158, %v34, 0
  %v181 = vsel %vm158, %v37, 0
  %183 = vmatpush.msra.mxu0 %v68
  %184 = vmatpush.msra.mxu0 %v66
  %185 = vmatpush.msra.mxu0 %v64
  %186 = vmatpush.msra.mxu0 %v62
  %187 = vmatpush.msra.mxu0 %v60
  %188 = vmatpush.msra.mxu0 %v58
  %189 = vmatpush.msra.mxu0 %v56
  %190 = vmatpush.msra.mxu0 %v54
  %191 = vmatpush.msra.mxu0 %v52
  %192 = vmatpush.msra.mxu0 %v50
  %193 = vmatpush.msra.mxu0 %v48
  %194 = vmatpush.msra.mxu0 %v46
  %195 = vmatpush.msra.mxu0 %v44
  %196 = vmatpush.msra.mxu0 %v42
  %197 = vmatpush.msra.mxu0 %v40
  %198 = vmatpush.msra.mxu0 %v38
  %199 = vmatmul.f32.gmra.mxu0 %v14
  %v200 = vpop.f32.mrf.mxu0
  %v201 = vadd.f32 %v121, %v200
  %202 = vmatmul.f32.gmra.mxu0 %v17
  %v203 = vpop.f32.mrf.mxu0
  %v204 = vadd.f32 %v126, %v203
  %205 = vmatmul.f32.gmra.mxu0 %v20
  %v206 = vpop.f32.mrf.mxu0
  %v207 = vadd.f32 %v131, %v206
  %208 = vmatmul.f32.gmra.mxu0 %v23
  %v209 = vpop.f32.mrf.mxu0
  %v210 = vadd.f32 %v136, %v209
  %211 = vmatmul.f32.gmra.mxu0 %v26
  %v212 = vpop.f32.mrf.mxu0
  %v213 = vadd.f32 %v141, %v212
  %214 = vmatmul.f32.gmra.mxu0 %v29
  %v215 = vpop.f32.mrf.mxu0
  %v216 = vadd.f32 %v146, %v215
  %217 = vmatmul.f32.gmra.mxu0 %v32
  %v218 = vpop.f32.mrf.mxu0
  %v219 = vadd.f32 %v151, %v218
  %220 = vmatmul.f32.gmra.mxu0 %v35
  %v221 = vpop.f32.mrf.mxu0
  %v222 = vadd.f32 %v156, %v221
  %223 = vdwg.mxu0
  %224 = vmatpush.msra.mxu0 %v100
  %225 = vmatpush.msra.mxu0 %v98
  %226 = vmatpush.msra.mxu0 %v96
  %227 = vmatpush.msra.mxu0 %v94
  %228 = vmatpush.msra.mxu0 %v92
  %229 = vmatpush.msra.mxu0 %v90
  %230 = vmatpush.msra.mxu0 %v88
  %231 = vmatpush.msra.mxu0 %v86
  %232 = vmatpush.msra.mxu0 %v84
  %233 = vmatpush.msra.mxu0 %v82
  %234 = vmatpush.msra.mxu0 %v80
  %235 = vmatpush.msra.mxu0 %v78
  %236 = vmatpush.msra.mxu0 %v76
  %237 = vmatpush.msra.mxu0 %v74
  %238 = vmatpush.msra.mxu0 %v72
  %239 = vmatpush.msra.mxu0 %v70
  %240 = vmatmul.f32.gmra.mxu0 %v15
  %v241 = vpop.f32.mrf.mxu0
  %v242 = vadd.f32 %v201, %v241
  %243 = vmatmul.f32.gmra.mxu0 %v18
  %v244 = vpop.f32.mrf.mxu0
  %v245 = vadd.f32 %v204, %v244
  %246 = vmatmul.f32.gmra.mxu0 %v21
  %v247 = vpop.f32.mrf.mxu0
  %v248 = vadd.f32 %v207, %v247
  %249 = vmatmul.f32.gmra.mxu0 %v24
  %v250 = vpop.f32.mrf.mxu0
  %v251 = vadd.f32 %v210, %v250
  %252 = vmatmul.f32.gmra.mxu0 %v27
  %v253 = vpop.f32.mrf.mxu0
  %v254 = vadd.f32 %v213, %v253
  %255 = vmatmul.f32.gmra.mxu0 %v30
  %v256 = vpop.f32.mrf.mxu0
  %v257 = vadd.f32 %v216, %v256
  %258 = vmatmul.f32.gmra.mxu0 %v33
  %v259 = vpop.f32.mrf.mxu0
  %v260 = vadd.f32 %v219, %v259
  %261 = vmatmul.f32.gmra.mxu0 %v36
  %v262 = vpop.f32.mrf.mxu0
  %v263 = vadd.f32 %v222, %v262
  %264 = vdwg.mxu0
  %265 = vmatpush.msra.mxu0 0.0
  %266 = vmatpush.msra.mxu0 0.0
  %267 = vmatpush.msra.mxu0 0.0
  %268 = vmatpush.msra.mxu0 0.0
  %269 = vmatpush.msra.mxu0 0.0
  %270 = vmatpush.msra.mxu0 0.0
  %271 = vmatpush.msra.mxu0 0.0
  %272 = vmatpush.msra.mxu0 0.0
  %273 = vmatpush.msra.mxu0 0.0
  %274 = vmatpush.msra.mxu0 0.0
  %275 = vmatpush.msra.mxu0 0.0
  %276 = vmatpush.msra.mxu0 0.0
  %277 = vmatpush.msra.mxu0 %v108
  %278 = vmatpush.msra.mxu0 %v106
  %279 = vmatpush.msra.mxu0 %v104
  %280 = vmatpush.msra.mxu0 %v102
  %281 = vmatmul.f32.gmra.mxu0 %v160
  %v282 = vpop.f32.mrf.mxu0
  %v283 = vadd.f32 %v242, %v282
  %284 = vmatmul.f32.gmra.mxu0 %v163
  %v285 = vpop.f32.mrf.mxu0
  %v286 = vadd.f32 %v245, %v285
  %287 = vmatmul.f32.gmra.mxu0 %v166
  %v288 = vpop.f32.mrf.mxu0
  %v289 = vadd.f32 %v248, %v288
  %290 = vmatmul.f32.gmra.mxu0 %v169
  %v291 = vpop.f32.mrf.mxu0
  %v292 = vadd.f32 %v251, %v291
  %293 = vmatmul.f32.gmra.mxu0 %v172
  %v294 = vpop.f32.mrf.mxu0
  %v295 = vadd.f32 %v254, %v294
  %296 = vmatmul.f32.gmra.mxu0 %v175
  %v297 = vpop.f32.mrf.mxu0
  %v298 = vadd.f32 %v257, %v297
  %299 = vmatmul.f32.gmra.mxu0 %v178
  %v300 = vpop.f32.mrf.mxu0
  %v301 = vadd.f32 %v260, %v300
  %302 = vmatmul.f32.gmra.mxu0 %v181
  %v303 = vpop.f32.mrf.mxu0
  %v304 = vadd.f32 %v263, %v303
  %305 = vdwg.mxu0
  %306 = vmatpush.msra.mxu0 %v69
  %307 = vmatpush.msra.mxu0 %v67
  %308 = vmatpush.msra.mxu0 %v65
  %309 = vmatpush.msra.mxu0 %v63
  %310 = vmatpush.msra.mxu0 %v61
  %311 = vmatpush.msra.mxu0 %v59
  %312 = vmatpush.msra.mxu0 %v57
  %313 = vmatpush.msra.mxu0 %v55
  %314 = vmatpush.msra.mxu0 %v53
  %315 = vmatpush.msra.mxu0 %v51
  %316 = vmatpush.msra.mxu0 %v49
  %317 = vmatpush.msra.mxu0 %v47
  %318 = vmatpush.msra.mxu0 %v45
  %319 = vmatpush.msra.mxu0 %v43
  %320 = vmatpush.msra.mxu0 %v41
  %321 = vmatpush.msra.mxu0 %v39
  %322 = vmatmul.f32.gmra.mxu0 %v14
  %v323 = vpop.f32.mrf.mxu0
  %v324 = vadd.f32 %v121, %v323
  %325 = vmatmul.f32.gmra.mxu0 %v17
  %v326 = vpop.f32.mrf.mxu0
  %v327 = vadd.f32 %v126, %v326
  %328 = vmatmul.f32.gmra.mxu0 %v20
  %v329 = vpop.f32.mrf.mxu0
  %v330 = vadd.f32 %v131, %v329
  %331 = vmatmul.f32.gmra.mxu0 %v23
  %v332 = vpop.f32.mrf.mxu0
  %v333 = vadd.f32 %v136, %v332
  %334 = vmatmul.f32.gmra.mxu0 %v26
  %v335 = vpop.f32.mrf.mxu0
  %v336 = vadd.f32 %v141, %v335
  %337 = vmatmul.f32.gmra.mxu0 %v29
  %v338 = vpop.f32.mrf.mxu0
  %v339 = vadd.f32 %v146, %v338
  %340 = vmatmul.f32.gmra.mxu0 %v32
  %v341 = vpop.f32.mrf.mxu0
  %v342 = vadd.f32 %v151, %v341
  %343 = vmatmul.f32.gmra.mxu0 %v35
  %v344 = vpop.f32.mrf.mxu0
  %v345 = vadd.f32 %v156, %v344
  %346 = vdwg.mxu0
  %347 = vmatpush.msra.mxu0 %v101
  %348 = vmatpush.msra.mxu0 %v99
  %349 = vmatpush.msra.mxu0 %v97
  %350 = vmatpush.msra.mxu0 %v95
  %351 = vmatpush.msra.mxu0 %v93
  %352 = vmatpush.msra.mxu0 %v91
  %353 = vmatpush.msra.mxu0 %v89
  %354 = vmatpush.msra.mxu0 %v87
  %355 = vmatpush.msra.mxu0 %v85
  %356 = vmatpush.msra.mxu0 %v83
  %357 = vmatpush.msra.mxu0 %v81
  %358 = vmatpush.msra.mxu0 %v79
  %359 = vmatpush.msra.mxu0 %v77
  %360 = vmatpush.msra.mxu0 %v75
  %361 = vmatpush.msra.mxu0 %v73
  %362 = vmatpush.msra.mxu0 %v71
  %363 = vmatmul.f32.gmra.mxu0 %v15
  %v364 = vpop.f32.mrf.mxu0
  %v365 = vadd.f32 %v324, %v364
  %366 = vmatmul.f32.gmra.mxu0 %v18
  %v367 = vpop.f32.mrf.mxu0
  %v368 = vadd.f32 %v327, %v367
  %369 = vmatmul.f32.gmra.mxu0 %v21
  %v370 = vpop.f32.mrf.mxu0
  %v371 = vadd.f32 %v330, %v370
  %372 = vmatmul.f32.gmra.mxu0 %v24
  %v373 = vpop.f32.mrf.mxu0
  %v374 = vadd.f32 %v333, %v373
  %375 = vmatmul.f32.gmra.mxu0 %v27
  %v376 = vpop.f32.mrf.mxu0
  %v377 = vadd.f32 %v336, %v376
  %378 = vmatmul.f32.gmra.mxu0 %v30
  %v379 = vpop.f32.mrf.mxu0
  %v380 = vadd.f32 %v339, %v379
  %381 = vmatmul.f32.gmra.mxu0 %v33
  %v382 = vpop.f32.mrf.mxu0
  %v383 = vadd.f32 %v342, %v382
  %384 = vmatmul.f32.gmra.mxu0 %v36
  %v385 = vpop.f32.mrf.mxu0
  %v386 = vadd.f32 %v345, %v385
  %387 = vdwg.mxu0
  %388 = vmatpush.msra.mxu0 0.0
  %389 = vmatpush.msra.mxu0 0.0
  %390 = vmatpush.msra.mxu0 0.0
  %391 = vmatpush.msra.mxu0 0.0
  %392 = vmatpush.msra.mxu0 0.0
  %393 = vmatpush.msra.mxu0 0.0
  %394 = vmatpush.msra.mxu0 0.0
  %395 = vmatpush.msra.mxu0 0.0
  %396 = vmatpush.msra.mxu0 0.0
  %397 = vmatpush.msra.mxu0 0.0
  %398 = vmatpush.msra.mxu0 0.0
  %399 = vmatpush.msra.mxu0 0.0
  %400 = vmatpush.msra.mxu0 %v109
  %401 = vmatpush.msra.mxu0 %v107
  %402 = vmatpush.msra.mxu0 %v105
  %403 = vmatpush.msra.mxu0 %v103
  %404 = vmatmul.f32.gmra.mxu0 %v160
  %v405 = vpop.f32.mrf.mxu0
  %v406 = vadd.f32 %v365, %v405
  %407 = vmatmul.f32.gmra.mxu0 %v163
  %v408 = vpop.f32.mrf.mxu0
  %v409 = vadd.f32 %v368, %v408
  %410 = vmatmul.f32.gmra.mxu0 %v166
  %v411 = vpop.f32.mrf.mxu0
  %v412 = vadd.f32 %v371, %v411
  %413 = vmatmul.f32.gmra.mxu0 %v169
  %v414 = vpop.f32.mrf.mxu0
  %v415 = vadd.f32 %v374, %v414
  %416 = vmatmul.f32.gmra.mxu0 %v172
  %v417 = vpop.f32.mrf.mxu0
  %v418 = vadd.f32 %v377, %v417
  %419 = vmatmul.f32.gmra.mxu0 %v175
  %v420 = vpop.f32.mrf.mxu0
  %v421 = vadd.f32 %v380, %v420
  %422 = vmatmul.f32.gmra.mxu0 %v178
  %v423 = vpop.f32.mrf.mxu0
  %v424 = vadd.f32 %v383, %v423
  %425 = vmatmul.f32.gmra.mxu0 %v181
  %v426 = vpop.f32.mrf.mxu0
  %v427 = vadd.f32 %v386, %v426
  %428 = vdwg.mxu0
  %v429 = vmax.f32 %v283, 0.0
  %v430 = vmax.f32 %v406, 0.0
  %v431 = vmax.f32 %v286, 0.0
  %v432 = vmax.f32 %v409, 0.0
  %v433 = vmax.f32 %v289, 0.0
  %v434 = vmax.f32 %v412, 0.0
  %v435 = vmax.f32 %v292, 0.0
  %v436 = vmax.f32 %v415, 0.0
  %v437 = vmax.f32 %v295, 0.0
  %v438 = vmax.f32 %v418, 0.0
  %v439 = vmax.f32 %v298, 0.0
  %v440 = vmax.f32 %v421, 0.0
  %v441 = vmax.f32 %v301, 0.0
  %v442 = vmax.f32 %v424, 0.0
  %v443 = vmax.f32 %v304, 0.0
  %v444 = vmax.f32 %v427, 0.0
  %445 = vst [vmem:[%s3] sm:$0xff] %v429
  %446 = vst [vmem:[%s3 + $0x8] sm:$0xff] %v430
  %447 = vst [vmem:[%s3 + $0x10] sm:$0xff] %v431
  %448 = vst [vmem:[%s3 + $0x18] sm:$0xff] %v432
  %449 = vst [vmem:[%s3 + $0x20] sm:$0xff] %v433
  %450 = vst [vmem:[%s3 + $0x28] sm:$0xff] %v434
  %451 = vst [vmem:[%s3 + $0x30] sm:$0xff] %v435
  %452 = vst [vmem:[%s3 + $0x38] sm:$0xff] %v436
  %453 = vst [vmem:[%s3 + $0x40] sm:$0xff] %v437
  %454 = vst [vmem:[%s3 + $0x48] sm:$0xff] %v438
  %455 = vst [vmem:[%s3 + $0x50] sm:$0xff] %v439
  %456 = vst [vmem:[%s3 + $0x58] sm:$0xff] %v440
  %457 = vst [vmem:[%s3 + $0x60] sm:$0xff] %v441
  %458 = vst [vmem:[%s3 + $0x68] sm:$0xff] %v442
  %459 = vst [vmem:[%s3 + $0x70] sm:$0xff] %v443
  %460 = vst [vmem:[%s3 + $0x78] sm:$0xff] %v444
  // Predicated region
  $region14: #{encoder_forward.14} parent=0 // pred_check
    _
  $region15: #{encoder_forward.14} parent=0 // pred_check_branch
    %462 = sbr.rel (0) target = $region17
  $region16: #{encoder_forward.14} parent=0 // pred_region
    _
  $region17: #{encoder_forward.14} parent=0 // pred_fallthru
    _
  // Predicated region
  $region18: #{encoder_forward.14} parent=0 // pred_check
    _
  $region19: #{encoder_forward.14} parent=0 // pred_check_branch
    %464 = sbr.rel (0) target = $region21
  $region20: #{encoder_forward.14} parent=0 // pred_region
    _
  $region21: #{encoder_forward.14} parent=0 // pred_fallthru
    _

// kernel: encoder_forward.15
$region0: #{encoder_forward.15}
  #allocation0 [shape = 'u32[]', space=smem, size = 0x4, offset = 0x4, fixed_abs, tag = 'smem constant byte address 0x4 - core index']
  #allocation1 [shape = 'u32[72,128]{1,0:T(1,128)}', space=vmem, size = 0x9000, scoped, tag = 'internal scratch']
  %s0 = inlined_call_operand.vmem [shape: f32[64,576], index: 0, kind: input, shape index: {}]
  %s1 = inlined_call_operand.vmem [shape: f32[576,256], index: 1, kind: input, shape index: {}]
  %s2 = inlined_call_operand.vmem [shape: f32[64,1], index: 2, kind: input, shape index: {}]
  %s3 = inlined_call_operand.vmem [shape: f32[64,256], index: 3, kind: output, shape index: {}]
  %s4 = sld [smem:[#allocation0]]
  $region22: #{encoder_forward.15} parent=0
    _
  %s6 = ssub.s32 1, %s4
  %s7 = scalar_select 0, %s6, %s4
  // Predicated region
  $region2: #{encoder_forward.15} parent=0 // pred_check
    _
  $region3: #{encoder_forward.15} parent=0 // pred_check_branch
    %9 = sbr.rel (0) target = $region5
  $region4: #{encoder_forward.15} parent=0 // pred_region
    _
  $region5: #{encoder_forward.15} parent=0 // pred_fallthru
    _
  // Predicated region
  $region6: #{encoder_forward.15} parent=0 // pred_check
    _
  $region7: #{encoder_forward.15} parent=0 // pred_check_branch
    %11 = sbr.rel (0) target = $region9
  $region8: #{encoder_forward.15} parent=0 // pred_region
    _
  $region9: #{encoder_forward.15} parent=0 // pred_fallthru
    _
  // Predicated region
  $region10: #{encoder_forward.15} parent=0 // pred_check
    _
  $region11: #{encoder_forward.15} parent=0 // pred_check_branch
    %13 = sbr.rel (0) target = $region13
  $region12: #{encoder_forward.15} parent=0 // pred_region
    _
  $region13: #{encoder_forward.15} parent=0 // pred_fallthru
    _
  %v14 = vld [vmem:[%s0] sm:$0xff]
  %v15 = vld [vmem:[%s0 + $0x8] sm:$0xff]
  %v16 = vld [vmem:[%s0 + $0x10] sm:$0xff]
  %v17 = vld [vmem:[%s0 + $0x18] sm:$0xff]
  %v18 = vld [vmem:[%s0 + $0x20] sm:$0xff]
  %v19 = vld [vmem:[%s0 + $0x28] sm:$0xff]
  %v20 = vld [vmem:[%s0 + $0x30] sm:$0xff]
  %v21 = vld [vmem:[%s0 + $0x38] sm:$0xff]
  %v22 = vld [vmem:[%s0 + $0x40] sm:$0xff]
  %v23 = vld [vmem:[%s0 + $0x48] sm:$0xff]
  %v24 = vld [vmem:[%s0 + $0x50] sm:$0xff]
  %v25 = vld [vmem:[%s0 + $0x58] sm:$0xff]
  %v26 = vld [vmem:[%s0 + $0x60] sm:$0xff]
  %v27 = vld [vmem:[%s0 + $0x68] sm:$0xff]
  %v28 = vld [vmem:[%s0 + $0x70] sm:$0xff]
  %v29 = vld [vmem:[%s0 + $0x78] sm:$0xff]
  %v30 = vld [vmem:[%s0 + $0x80] sm:$0xff]
  %v31 = vld [vmem:[%s0 + $0x88] sm:$0xff]
  %v32 = vld [vmem:[%s0 + $0x90] sm:$0xff]
  %v33 = vld [vmem:[%s0 + $0x98] sm:$0xff]
  %v34 = vld [vmem:[%s0 + $0xa0] sm:$0xff]
  %v35 = vld [vmem:[%s0 + $0xa8] sm:$0xff]
  %v36 = vld [vmem:[%s0 + $0xb0] sm:$0xff]
  %v37 = vld [vmem:[%s0 + $0xb8] sm:$0xff]
  %v38 = vld [vmem:[%s0 + $0xc0] sm:$0xff]
  %v39 = vld [vmem:[%s0 + $0xc8] sm:$0xff]
  %v40 = vld [vmem:[%s0 + $0xd0] sm:$0xff]
  %v41 = vld [vmem:[%s0 + $0xd8] sm:$0xff]
  %v42 = vld [vmem:[%s0 + $0xe0] sm:$0xff]
  %v43 = vld [vmem:[%s0 + $0xe8] sm:$0xff]
  %v44 = vld [vmem:[%s0 + $0xf0] sm:$0xff]
  %v45 = vld [vmem:[%s0 + $0xf8] sm:$0xff]
  %v46 = vld [vmem:[%s0 + $0x100] sm:$0xff]
  %v47 = vld [vmem:[%s0 + $0x108] sm:$0xff]
  %v48 = vld [vmem:[%s0 + $0x110] sm:$0xff]
  %v49 = vld [vmem:[%s0 + $0x118] sm:$0xff]
  %v50 = vld [vmem:[%s0 + $0x120] sm:$0xff]
  %v51 = vld [vmem:[%s0 + $0x128] sm:$0xff]
  %v52 = vld [vmem:[%s0 + $0x130] sm:$0xff]
  %v53 = vld [vmem:[%s0 + $0x138] sm:$0xff]
  %v54 = vld [vmem:[%s1] sm:$0xff]
  %v55 = vld [vmem:[%s1 + $0x8] sm:$0xff]
  %v56 = vld [vmem:[%s1 + $0x10] sm:$0xff]
  %v57 = vld [vmem:[%s1 + $0x18] sm:$0xff]
  %v58 = vld [vmem:[%s1 + $0x20] sm:$0xff]
  %v59 = vld [vmem:[%s1 + $0x28] sm:$0xff]
  %v60 = vld [vmem:[%s1 + $0x30] sm:$0xff]
  %v61 = vld [vmem:[%s1 + $0x38] sm:$0xff]
  %v62 = vld [vmem:[%s1 + $0x40] sm:$0xff]
  %v63 = vld [vmem:[%s1 + $0x48] sm:$0xff]
  %v64 = vld [vmem:[%s1 + $0x50] sm:$0xff]
  %v65 = vld [vmem:[%s1 + $0x58] sm:$0xff]
  %v66 = vld [vmem:[%s1 + $0x60] sm:$0xff]
  %v67 = vld [vmem:[%s1 + $0x68] sm:$0xff]
  %v68 = vld [vmem:[%s1 + $0x70] sm:$0xff]
  %v69 = vld [vmem:[%s1 + $0x78] sm:$0xff]
  %v70 = vld [vmem:[%s1 + $0x80] sm:$0xff]
  %v71 = vld [vmem:[%s1 + $0x88] sm:$0xff]
  %v72 = vld [vmem:[%s1 + $0x90] sm:$0xff]
  %v73 = vld [vmem:[%s1 + $0x98] sm:$0xff]
  %v74 = vld [vmem:[%s1 + $0xa0] sm:$0xff]
  %v75 = vld [vmem:[%s1 + $0xa8] sm:$0xff]
  %v76 = vld [vmem:[%s1 + $0xb0] sm:$0xff]
  %v77 = vld [vmem:[%s1 + $0xb8] sm:$0xff]
  %v78 = vld [vmem:[%s1 + $0xc0] sm:$0xff]
  %v79 = vld [vmem:[%s1 + $0xc8] sm:$0xff]
  %v80 = vld [vmem:[%s1 + $0xd0] sm:$0xff]
  %v81 = vld [vmem:[%s1 + $0xd8] sm:$0xff]
  %v82 = vld [vmem:[%s1 + $0xe0] sm:$0xff]
  %v83 = vld [vmem:[%s1 + $0xe8] sm:$0xff]
  %v84 = vld [vmem:[%s1 + $0xf0] sm:$0xff]
  %v85 = vld [vmem:[%s1 + $0xf8] sm:$0xff]
  %v86 = vld [vmem:[%s1 + $0x100] sm:$0xff]
  %v87 = vld [vmem:[%s1 + $0x108] sm:$0xff]
  %v88 = vld [vmem:[%s1 + $0x110] sm:$0xff]
  %v89 = vld [vmem:[%s1 + $0x118] sm:$0xff]
  %v90 = vld [vmem:[%s1 + $0x120] sm:$0xff]
  %v91 = vld [vmem:[%s1 + $0x128] sm:$0xff]
  %v92 = vld [vmem:[%s1 + $0x130] sm:$0xff]
  %v93 = vld [vmem:[%s1 + $0x138] sm:$0xff]
  %v94 = vld [vmem:[%s1 + $0x140] sm:$0xff]
  %v95 = vld [vmem:[%s1 + $0x148] sm:$0xff]
  %v96 = vld [vmem:[%s1 + $0x150] sm:$0xff]
  %v97 = vld [vmem:[%s1 + $0x158] sm:$0xff]
  %v98 = vld [vmem:[%s1 + $0x160] sm:$0xff]
  %v99 = vld [vmem:[%s1 + $0x168] sm:$0xff]
  %v100 = vld [vmem:[%s1 + $0x170] sm:$0xff]
  %v101 = vld [vmem:[%s1 + $0x178] sm:$0xff]
  %v102 = vld [vmem:[%s1 + $0x180] sm:$0xff]
  %v103 = vld [vmem:[%s1 + $0x188] sm:$0xff]
  %v104 = vld [vmem:[%s1 + $0x190] sm:$0xff]
  %v105 = vld [vmem:[%s1 + $0x198] sm:$0xff]
  %v106 = vld [vmem:[%s1 + $0x1a0] sm:$0xff]
  %v107 = vld [vmem:[%s1 + $0x1a8] sm:$0xff]
  %v108 = vld [vmem:[%s1 + $0x1b0] sm:$0xff]
  %v109 = vld [vmem:[%s1 + $0x1b8] sm:$0xff]
  %v110 = vld [vmem:[%s1 + $0x1c0] sm:$0xff]
  %v111 = vld [vmem:[%s1 + $0x1c8] sm:$0xff]
  %v112 = vld [vmem:[%s1 + $0x1d0] sm:$0xff]
  %v113 = vld [vmem:[%s1 + $0x1d8] sm:$0xff]
  %v114 = vld [vmem:[%s1 + $0x1e0] sm:$0xff]
  %v115 = vld [vmem:[%s1 + $0x1e8] sm:$0xff]
  %v116 = vld [vmem:[%s1 + $0x1f0] sm:$0xff]
  %v117 = vld [vmem:[%s1 + $0x1f8] sm:$0xff]
  %v118 = vld [vmem:[%s1 + $0x200] sm:$0xff]
  %v119 = vld [vmem:[%s1 + $0x208] sm:$0xff]
  %v120 = vld [vmem:[%s1 + $0x210] sm:$0xff]
  %v121 = vld [vmem:[%s1 + $0x218] sm:$0xff]
  %v122 = vld [vmem:[%s1 + $0x220] sm:$0xff]
  %v123 = vld [vmem:[%s1 + $0x228] sm:$0xff]
  %v124 = vld [vmem:[%s1 + $0x230] sm:$0xff]
  %v125 = vld [vmem:[%s1 + $0x238] sm:$0xff]
  %v126 = vld [vmem:[%s1 + $0x240] sm:$0xff]
  %v127 = vld [vmem:[%s1 + $0x248] sm:$0xff]
  %v128 = vld [vmem:[%s1 + $0x250] sm:$0xff]
  %v129 = vld [vmem:[%s1 + $0x258] sm:$0xff]
  %v130 = vld [vmem:[%s1 + $0x260] sm:$0xff]
  %v131 = vld [vmem:[%s1 + $0x268] sm:$0xff]
  %v132 = vld [vmem:[%s1 + $0x270] sm:$0xff]
  %v133 = vld [vmem:[%s1 + $0x278] sm:$0xff]
  %v134 = vld [vmem:[%s1 + $0x280] sm:$0xff]
  %v135 = vld [vmem:[%s1 + $0x288] sm:$0xff]
  %v136 = vld [vmem:[%s1 + $0x290] sm:$0xff]
  %v137 = vld [vmem:[%s1 + $0x298] sm:$0xff]
  %v138 = vld [vmem:[%s1 + $0x2a0] sm:$0xff]
  %v139 = vld [vmem:[%s1 + $0x2a8] sm:$0xff]
  %v140 = vld [vmem:[%s1 + $0x2b0] sm:$0xff]
  %v141 = vld [vmem:[%s1 + $0x2b8] sm:$0xff]
  %v142 = vld [vmem:[%s1 + $0x2c0] sm:$0xff]
  %v143 = vld [vmem:[%s1 + $0x2c8] sm:$0xff]
  %v144 = vld [vmem:[%s1 + $0x2d0] sm:$0xff]
  %v145 = vld [vmem:[%s1 + $0x2d8] sm:$0xff]
  %v146 = vld [vmem:[%s1 + $0x2e0] sm:$0xff]
  %v147 = vld [vmem:[%s1 + $0x2e8] sm:$0xff]
  %v148 = vld [vmem:[%s1 + $0x2f0] sm:$0xff]
  %v149 = vld [vmem:[%s1 + $0x2f8] sm:$0xff]
  %v150 = vld [vmem:[%s1 + $0x300] sm:$0xff]
  %v151 = vld [vmem:[%s1 + $0x308] sm:$0xff]
  %v152 = vld [vmem:[%s1 + $0x310] sm:$0xff]
  %v153 = vld [vmem:[%s1 + $0x318] sm:$0xff]
  %v154 = vld [vmem:[%s1 + $0x320] sm:$0xff]
  %v155 = vld [vmem:[%s1 + $0x328] sm:$0xff]
  %v156 = vld [vmem:[%s1 + $0x330] sm:$0xff]
  %v157 = vld [vmem:[%s1 + $0x338] sm:$0xff]
  %v158 = vld [vmem:[%s1 + $0x340] sm:$0xff]
  %v159 = vld [vmem:[%s1 + $0x348] sm:$0xff]
  %v160 = vld [vmem:[%s1 + $0x350] sm:$0xff]
  %v161 = vld [vmem:[%s1 + $0x358] sm:$0xff]
  %v162 = vld [vmem:[%s1 + $0x360] sm:$0xff]
  %v163 = vld [vmem:[%s1 + $0x368] sm:$0xff]
  %v164 = vld [vmem:[%s1 + $0x370] sm:$0xff]
  %v165 = vld [vmem:[%s1 + $0x378] sm:$0xff]
  %v166 = vld [vmem:[%s1 + $0x380] sm:$0xff]
  %v167 = vld [vmem:[%s1 + $0x388] sm:$0xff]
  %v168 = vld [vmem:[%s1 + $0x390] sm:$0xff]
  %v169 = vld [vmem:[%s1 + $0x398] sm:$0xff]
  %v170 = vld [vmem:[%s1 + $0x3a0] sm:$0xff]
  %v171 = vld [vmem:[%s1 + $0x3a8] sm:$0xff]
  %v172 = vld [vmem:[%s1 + $0x3b0] sm:$0xff]
  %v173 = vld [vmem:[%s1 + $0x3b8] sm:$0xff]
  %v174 = vld [vmem:[%s1 + $0x3c0] sm:$0xff]
  %v175 = vld [vmem:[%s1 + $0x3c8] sm:$0xff]
  %v176 = vld [vmem:[%s1 + $0x3d0] sm:$0xff]
  %v177 = vld [vmem:[%s1 + $0x3d8] sm:$0xff]
  %v178 = vld [vmem:[%s1 + $0x3e0] sm:$0xff]
  %v179 = vld [vmem:[%s1 + $0x3e8] sm:$0xff]
  %v180 = vld [vmem:[%s1 + $0x3f0] sm:$0xff]
  %v181 = vld [vmem:[%s1 + $0x3f8] sm:$0xff]
  %v182 = vld [vmem:[%s1 + $0x400] sm:$0xff]
  %v183 = vld [vmem:[%s1 + $0x408] sm:$0xff]
  %v184 = vld [vmem:[%s1 + $0x410] sm:$0xff]
  %v185 = vld [vmem:[%s1 + $0x418] sm:$0xff]
  %v186 = vld [vmem:[%s1 + $0x420] sm:$0xff]
  %v187 = vld [vmem:[%s1 + $0x428] sm:$0xff]
  %v188 = vld [vmem:[%s1 + $0x430] sm:$0xff]
  %v189 = vld [vmem:[%s1 + $0x438] sm:$0xff]
  %v190 = vld [vmem:[%s1 + $0x440] sm:$0xff]
  %v191 = vld [vmem:[%s1 + $0x448] sm:$0xff]
  %v192 = vld [vmem:[%s1 + $0x450] sm:$0xff]
  %v193 = vld [vmem:[%s1 + $0x458] sm:$0xff]
  %v194 = vld [vmem:[%s1 + $0x460] sm:$0xff]
  %v195 = vld [vmem:[%s1 + $0x468] sm:$0xff]
  %v196 = vld [vmem:[%s1 + $0x470] sm:$0xff]
  %v197 = vld [vmem:[%s1 + $0x478] sm:$0xff]
  %v198 = vld [vmem:[%s2] sm:$0xff]
  %v199 = vld [vmem:[%s2 + $0x8] sm:$0xff]
  %v200 = vld [vmem:[%s2 + $0x10] sm:$0xff]
  %v201 = vld [vmem:[%s2 + $0x18] sm:$0xff]
  %v202 = vld [vmem:[%s2 + $0x20] sm:$0xff]
  %v203 = vld [vmem:[%s2 + $0x28] sm:$0xff]
  %v204 = vld [vmem:[%s2 + $0x30] sm:$0xff]
  %v205 = vld [vmem:[%s2 + $0x38] sm:$0xff]
  %207 = vset.pattern.permute.xlu0 0
  %208 = vperm.xlu0 %207, %v198
  %v209 = vpop.permute.xlu0 %208
  %212 = vset.pattern.permute.xlu0 0
  %213 = vperm.xlu0 %212, %v199
  %v214 = vpop.permute.xlu0 %213
  %217 = vset.pattern.permute.xlu0 0
  %218 = vperm.xlu0 %217, %v200
  %v219 = vpop.permute.xlu0 %218
  %222 = vset.pattern.permute.xlu0 0
  %223 = vperm.xlu0 %222, %v201
  %v224 = vpop.permute.xlu0 %223
  %227 = vset.pattern.permute.xlu0 0
  %228 = vperm.xlu0 %227, %v202
  %v229 = vpop.permute.xlu0 %228
  %232 = vset.pattern.permute.xlu0 0
  %233 = vperm.xlu0 %232, %v203
  %v234 = vpop.permute.xlu0 %233
  %237 = vset.pattern.permute.xlu0 0
  %238 = vperm.xlu0 %237, %v204
  %v239 = vpop.permute.xlu0 %238
  %242 = vset.pattern.permute.xlu0 0
  %243 = vperm.xlu0 %242, %v205
  %v244 = vpop.permute.xlu0 %243
  %vm246 = vcmask 523264
  %v248 = vsel %vm246, %v18, 0
  %v251 = vsel %vm246, %v23, 0
  %v254 = vsel %vm246, %v28, 0
  %v257 = vsel %vm246, %v33, 0
  %v260 = vsel %vm246, %v38, 0
  %v263 = vsel %vm246, %v43, 0
  %v266 = vsel %vm246, %v48, 0
  %v269 = vsel %vm246, %v53, 0
  %271 = vmatpush.msra.mxu0 %v84
  %272 = vmatpush.msra.mxu0 %v82
  %273 = vmatpush.msra.mxu0 %v80
  %274 = vmatpush.msra.mxu0 %v78
  %275 = vmatpush.msra.mxu0 %v76
  %276 = vmatpush.msra.mxu0 %v74
  %277 = vmatpush.msra.mxu0 %v72
  %278 = vmatpush.msra.mxu0 %v70
  %279 = vmatpush.msra.mxu0 %v68
  %280 = vmatpush.msra.mxu0 %v66
  %281 = vmatpush.msra.mxu0 %v64
  %282 = vmatpush.msra.mxu0 %v62
  %283 = vmatpush.msra.mxu0 %v60
  %284 = vmatpush.msra.mxu0 %v58
  %285 = vmatpush.msra.mxu0 %v56
  %286 = vmatpush.msra.mxu0 %v54
  %287 = vmatmul.f32.gmra.mxu0 %v14
  %v288 = vpop.f32.mrf.mxu0
  %v289 = vadd.f32 %v209, %v288
  %290 = vmatmul.f32.gmra.mxu0 %v19
  %v291 = vpop.f32.mrf.mxu0
  %v292 = vadd.f32 %v214, %v291
  %293 = vmatmul.f32.gmra.mxu0 %v24
  %v294 = vpop.f32.mrf.mxu0
  %v295 = vadd.f32 %v219, %v294
  %296 = vmatmul.f32.gmra.mxu0 %v29
  %v297 = vpop.f32.mrf.mxu0
  %v298 = vadd.f32 %v224, %v297
  %299 = vmatmul.f32.gmra.mxu0 %v34
  %v300 = vpop.f32.mrf.mxu0
  %v301 = vadd.f32 %v229, %v300
  %302 = vmatmul.f32.gmra.mxu0 %v39
  %v303 = vpop.f32.mrf.mxu0
  %v304 = vadd.f32 %v234, %v303
  %305 = vmatmul.f32.gmra.mxu0 %v44
  %v306 = vpop.f32.mrf.mxu0
  %v307 = vadd.f32 %v239, %v306
  %308 = vmatmul.f32.gmra.mxu0 %v49
  %v309 = vpop.f32.mrf.mxu0
  %v310 = vadd.f32 %v244, %v309
  %311 = vdwg.mxu0
  %312 = vmatpush.msra.mxu0 %v116
  %313 = vmatpush.msra.mxu0 %v114
  %314 = vmatpush.msra.mxu0 %v112
  %315 = vmatpush.msra.mxu0 %v110
  %316 = vmatpush.msra.mxu0 %v108
  %317 = vmatpush.msra.mxu0 %v106
  %318 = vmatpush.msra.mxu0 %v104
  %319 = vmatpush.msra.mxu0 %v102
  %320 = vmatpush.msra.mxu0 %v100
  %321 = vmatpush.msra.mxu0 %v98
  %322 = vmatpush.msra.mxu0 %v96
  %323 = vmatpush.msra.mxu0 %v94
  %324 = vmatpush.msra.mxu0 %v92
  %325 = vmatpush.msra.mxu0 %v90
  %326 = vmatpush.msra.mxu0 %v88
  %327 = vmatpush.msra.mxu0 %v86
  %328 = vmatmul.f32.gmra.mxu0 %v15
  %v329 = vpop.f32.mrf.mxu0
  %v330 = vadd.f32 %v289, %v329
  %331 = vmatmul.f32.gmra.mxu0 %v20
  %v332 = vpop.f32.mrf.mxu0
  %v333 = vadd.f32 %v292, %v332
  %334 = vmatmul.f32.gmra.mxu0 %v25
  %v335 = vpop.f32.mrf.mxu0
  %v336 = vadd.f32 %v295, %v335
  %337 = vmatmul.f32.gmra.mxu0 %v30
  %v338 = vpop.f32.mrf.mxu0
  %v339 = vadd.f32 %v298, %v338
  %340 = vmatmul.f32.gmra.mxu0 %v35
  %v341 = vpop.f32.mrf.mxu0
  %v342 = vadd.f32 %v301, %v341
  %343 = vmatmul.f32.gmra.mxu0 %v40
  %v344 = vpop.f32.mrf.mxu0
  %v345 = vadd.f32 %v304, %v344
  %346 = vmatmul.f32.gmra.mxu0 %v45
  %v347 = vpop.f32.mrf.mxu0
  %v348 = vadd.f32 %v307, %v347
  %349 = vmatmul.f32.gmra.mxu0 %v50
  %v350 = vpop.f32.mrf.mxu0
  %v351 = vadd.f32 %v310, %v350
  %352 = vdwg.mxu0
  %353 = vmatpush.msra.mxu0 %v148
  %354 = vmatpush.msra.mxu0 %v146
  %355 = vmatpush.msra.mxu0 %v144
  %356 = vmatpush.msra.mxu0 %v142
  %357 = vmatpush.msra.mxu0 %v140
  %358 = vmatpush.msra.mxu0 %v138
  %359 = vmatpush.msra.mxu0 %v136
  %360 = vmatpush.msra.mxu0 %v134
  %361 = vmatpush.msra.mxu0 %v132
  %362 = vmatpush.msra.mxu0 %v130
  %363 = vmatpush.msra.mxu0 %v128
  %364 = vmatpush.msra.mxu0 %v126
  %365 = vmatpush.msra.mxu0 %v124
  %366 = vmatpush.msra.mxu0 %v122
  %367 = vmatpush.msra.mxu0 %v120
  %368 = vmatpush.msra.mxu0 %v118
  %369 = vmatmul.f32.gmra.mxu0 %v16
  %v370 = vpop.f32.mrf.mxu0
  %v371 = vadd.f32 %v330, %v370
  %372 = vmatmul.f32.gmra.mxu0 %v21
  %v373 = vpop.f32.mrf.mxu0
  %v374 = vadd.f32 %v333, %v373
  %375 = vmatmul.f32.gmra.mxu0 %v26
  %v376 = vpop.f32.mrf.mxu0
  %v377 = vadd.f32 %v336, %v376
  %378 = vmatmul.f32.gmra.mxu0 %v31
  %v379 = vpop.f32.mrf.mxu0
  %v380 = vadd.f32 %v339, %v379
  %381 = vmatmul.f32.gmra.mxu0 %v36
  %v382 = vpop.f32.mrf.mxu0
  %v383 = vadd.f32 %v342, %v382
  %384 = vmatmul.f32.gmra.mxu0 %v41
  %v385 = vpop.f32.mrf.mxu0
  %v386 = vadd.f32 %v345, %v385
  %387 = vmatmul.f32.gmra.mxu0 %v46
  %v388 = vpop.f32.mrf.mxu0
  %v389 = vadd.f32 %v348, %v388
  %390 = vmatmul.f32.gmra.mxu0 %v51
  %v391 = vpop.f32.mrf.mxu0
  %v392 = vadd.f32 %v351, %v391
  %393 = vdwg.mxu0
  %394 = vmatpush.msra.mxu0 %v180
  %395 = vmatpush.msra.mxu0 %v178
  %396 = vmatpush.msra.mxu0 %v176
  %397 = vmatpush.msra.mxu0 %v174
  %398 = vmatpush.msra.mxu0 %v172
  %399 = vmatpush.msra.mxu0 %v170
  %400 = vmatpush.msra.mxu0 %v168
  %401 = vmatpush.msra.mxu0 %v166
  %402 = vmatpush.msra.mxu0 %v164
  %403 = vmatpush.msra.mxu0 %v162
  %404 = vmatpush.msra.mxu0 %v160
  %405 = vmatpush.msra.mxu0 %v158
  %406 = vmatpush.msra.mxu0 %v156
  %407 = vmatpush.msra.mxu0 %v154
  %408 = vmatpush.msra.mxu0 %v152
  %409 = vmatpush.msra.mxu0 %v150
  %410 = vmatmul.f32.gmra.mxu0 %v17
  %v411 = vpop.f32.mrf.mxu0
  %v412 = vadd.f32 %v371, %v411
  %413 = vmatmul.f32.gmra.mxu0 %v22
  %v414 = vpop.f32.mrf.mxu0
  %v415 = vadd.f32 %v374, %v414
  %416 = vmatmul.f32.gmra.mxu0 %v27
  %v417 = vpop.f32.mrf.mxu0
  %v418 = vadd.f32 %v377, %v417
  %419 = vmatmul.f32.gmra.mxu0 %v32
  %v420 = vpop.f32.mrf.mxu0
  %v421 = vadd.f32 %v380, %v420
  %422 = vmatmul.f32.gmra.mxu0 %v37
  %v423 = vpop.f32.mrf.mxu0
  %v424 = vadd.f32 %v383, %v423
  %425 = vmatmul.f32.gmra.mxu0 %v42
  %v426 = vpop.f32.mrf.mxu0
  %v427 = vadd.f32 %v386, %v426
  %428 = vmatmul.f32.gmra.mxu0 %v47
  %v429 = vpop.f32.mrf.mxu0
  %v430 = vadd.f32 %v389, %v429
  %431 = vmatmul.f32.gmra.mxu0 %v52
  %v432 = vpop.f32.mrf.mxu0
  %v433 = vadd.f32 %v392, %v432
  %434 = vdwg.mxu0
  %435 = vmatpush.msra.mxu0 0.0
  %436 = vmatpush.msra.mxu0 0.0
  %437 = vmatpush.msra.mxu0 0.0
  %438 = vmatpush.msra.mxu0 0.0
  %439 = vmatpush.msra.mxu0 0.0
  %440 = vmatpush.msra.mxu0 0.0
  %441 = vmatpush.msra.mxu0 0.0
  %442 = vmatpush.msra.mxu0 0.0
  %443 = vmatpush.msra.mxu0 %v196
  %444 = vmatpush.msra.mxu0 %v194
  %445 = vmatpush.msra.mxu0 %v192
  %446 = vmatpush.msra.mxu0 %v190
  %447 = vmatpush.msra.mxu0 %v188
  %448 = vmatpush.msra.mxu0 %v186
  %449 = vmatpush.msra.mxu0 %v184
  %450 = vmatpush.msra.mxu0 %v182
  %451 = vmatmul.f32.gmra.mxu0 %v248
  %v452 = vpop.f32.mrf.mxu0
  %v453 = vadd.f32 %v412, %v452
  %454 = vmatmul.f32.gmra.mxu0 %v251
  %v455 = vpop.f32.mrf.mxu0
  %v456 = vadd.f32 %v415, %v455
  %457 = vmatmul.f32.gmra.mxu0 %v254
  %v458 = vpop.f32.mrf.mxu0
  %v459 = vadd.f32 %v418, %v458
  %460 = vmatmul.f32.gmra.mxu0 %v257
  %v461 = vpop.f32.mrf.mxu0
  %v462 = vadd.f32 %v421, %v461
  %463 = vmatmul.f32.gmra.mxu0 %v260
  %v464 = vpop.f32.mrf.mxu0
  %v465 = vadd.f32 %v424, %v464
  %466 = vmatmul.f32.gmra.mxu0 %v263
  %v467 = vpop.f32.mrf.mxu0
  %v468 = vadd.f32 %v427, %v467
  %469 = vmatmul.f32.gmra.mxu0 %v266
  %v470 = vpop.f32.mrf.mxu0
  %v471 = vadd.f32 %v430, %v470
  %472 = vmatmul.f32.gmra.mxu0 %v269
  %v473 = vpop.f32.mrf.mxu0
  %v474 = vadd.f32 %v433, %v473
  %475 = vdwg.mxu0
  %476 = vmatpush.msra.mxu0 %v85
  %477 = vmatpush.msra.mxu0 %v83
  %478 = vmatpush.msra.mxu0 %v81
  %479 = vmatpush.msra.mxu0 %v79
  %480 = vmatpush.msra.mxu0 %v77
  %481 = vmatpush.msra.mxu0 %v75
  %482 = vmatpush.msra.mxu0 %v73
  %483 = vmatpush.msra.mxu0 %v71
  %484 = vmatpush.msra.mxu0 %v69
  %485 = vmatpush.msra.mxu0 %v67
  %486 = vmatpush.msra.mxu0 %v65
  %487 = vmatpush.msra.mxu0 %v63
  %488 = vmatpush.msra.mxu0 %v61
  %489 = vmatpush.msra.mxu0 %v59
  %490 = vmatpush.msra.mxu0 %v57
  %491 = vmatpush.msra.mxu0 %v55
  %492 = vmatmul.f32.gmra.mxu0 %v14
  %v493 = vpop.f32.mrf.mxu0
  %v494 = vadd.f32 %v209, %v493
  %495 = vmatmul.f32.gmra.mxu0 %v19
  %v496 = vpop.f32.mrf.mxu0
  %v497 = vadd.f32 %v214, %v496
  %498 = vmatmul.f32.gmra.mxu0 %v24
  %v499 = vpop.f32.mrf.mxu0
  %v500 = vadd.f32 %v219, %v499
  %501 = vmatmul.f32.gmra.mxu0 %v29
  %v502 = vpop.f32.mrf.mxu0
  %v503 = vadd.f32 %v224, %v502
  %504 = vmatmul.f32.gmra.mxu0 %v34
  %v505 = vpop.f32.mrf.mxu0
  %v506 = vadd.f32 %v229, %v505
  %507 = vmatmul.f32.gmra.mxu0 %v39
  %v508 = vpop.f32.mrf.mxu0
  %v509 = vadd.f32 %v234, %v508
  %510 = vmatmul.f32.gmra.mxu0 %v44
  %v511 = vpop.f32.mrf.mxu0
  %v512 = vadd.f32 %v239, %v511
  %513 = vmatmul.f32.gmra.mxu0 %v49
  %v514 = vpop.f32.mrf.mxu0
  %v515 = vadd.f32 %v244, %v514
  %516 = vdwg.mxu0
  %517 = vmatpush.msra.mxu0 %v117
  %518 = vmatpush.msra.mxu0 %v115
  %519 = vmatpush.msra.mxu0 %v113
  %520 = vmatpush.msra.mxu0 %v111
  %521 = vmatpush.msra.mxu0 %v109
  %522 = vmatpush.msra.mxu0 %v107
  %523 = vmatpush.msra.mxu0 %v105
  %524 = vmatpush.msra.mxu0 %v103
  %525 = vmatpush.msra.mxu0 %v101
  %526 = vmatpush.msra.mxu0 %v99
  %527 = vmatpush.msra.mxu0 %v97
  %528 = vmatpush.msra.mxu0 %v95
  %529 = vmatpush.msra.mxu0 %v93
  %530 = vmatpush.msra.mxu0 %v91
  %531 = vmatpush.msra.mxu0 %v89
  %532 = vmatpush.msra.mxu0 %v87
  %533 = vmatmul.f32.gmra.mxu0 %v15
  %v534 = vpop.f32.mrf.mxu0
  %v535 = vadd.f32 %v494, %v534
  %536 = vmatmul.f32.gmra.mxu0 %v20
  %v537 = vpop.f32.mrf.mxu0
  %v538 = vadd.f32 %v497, %v537
  %539 = vmatmul.f32.gmra.mxu0 %v25
  %v540 = vpop.f32.mrf.mxu0
  %v541 = vadd.f32 %v500, %v540
  %542 = vmatmul.f32.gmra.mxu0 %v30
  %v543 = vpop.f32.mrf.mxu0
  %v544 = vadd.f32 %v503, %v543
  %545 = vmatmul.f32.gmra.mxu0 %v35
  %v546 = vpop.f32.mrf.mxu0
  %v547 = vadd.f32 %v506, %v546
  %548 = vmatmul.f32.gmra.mxu0 %v40
  %v549 = vpop.f32.mrf.mxu0
  %v550 = vadd.f32 %v509, %v549
  %551 = vmatmul.f32.gmra.mxu0 %v45
  %v552 = vpop.f32.mrf.mxu0
  %v553 = vadd.f32 %v512, %v552
  %554 = vmatmul.f32.gmra.mxu0 %v50
  %v555 = vpop.f32.mrf.mxu0
  %v556 = vadd.f32 %v515, %v555
  %557 = vdwg.mxu0
  %558 = vmatpush.msra.mxu0 %v149
  %559 = vmatpush.msra.mxu0 %v147
  %560 = vmatpush.msra.mxu0 %v145
  %561 = vmatpush.msra.mxu0 %v143
  %562 = vmatpush.msra.mxu0 %v141
  %563 = vmatpush.msra.mxu0 %v139
  %564 = vmatpush.msra.mxu0 %v137
  %565 = vmatpush.msra.mxu0 %v135
  %566 = vmatpush.msra.mxu0 %v133
  %567 = vmatpush.msra.mxu0 %v131
  %568 = vmatpush.msra.mxu0 %v129
  %569 = vmatpush.msra.mxu0 %v127
  %570 = vmatpush.msra.mxu0 %v125
  %571 = vmatpush.msra.mxu0 %v123
  %572 = vmatpush.msra.mxu0 %v121
  %573 = vmatpush.msra.mxu0 %v119
  %574 = vmatmul.f32.gmra.mxu0 %v16
  %v575 = vpop.f32.mrf.mxu0
  %v576 = vadd.f32 %v535, %v575
  %577 = vmatmul.f32.gmra.mxu0 %v21
  %v578 = vpop.f32.mrf.mxu0
  %v579 = vadd.f32 %v538, %v578
  %580 = vmatmul.f32.gmra.mxu0 %v26
  %v581 = vpop.f32.mrf.mxu0
  %v582 = vadd.f32 %v541, %v581
  %583 = vmatmul.f32.gmra.mxu0 %v31
  %v584 = vpop.f32.mrf.mxu0
  %v585 = vadd.f32 %v544, %v584
  %586 = vmatmul.f32.gmra.mxu0 %v36
  %v587 = vpop.f32.mrf.mxu0
  %v588 = vadd.f32 %v547, %v587
  %589 = vmatmul.f32.gmra.mxu0 %v41
  %v590 = vpop.f32.mrf.mxu0
  %v591 = vadd.f32 %v550, %v590
  %592 = vmatmul.f32.gmra.mxu0 %v46
  %v593 = vpop.f32.mrf.mxu0
  %v594 = vadd.f32 %v553, %v593
  %595 = vmatmul.f32.gmra.mxu0 %v51
  %v596 = vpop.f32.mrf.mxu0
  %v597 = vadd.f32 %v556, %v596
  %598 = vdwg.mxu0
  %599 = vmatpush.msra.mxu0 %v181
  %600 = vmatpush.msra.mxu0 %v179
  %601 = vmatpush.msra.mxu0 %v177
  %602 = vmatpush.msra.mxu0 %v175
  %603 = vmatpush.msra.mxu0 %v173
  %604 = vmatpush.msra.mxu0 %v171
  %605 = vmatpush.msra.mxu0 %v169
  %606 = vmatpush.msra.mxu0 %v167
  %607 = vmatpush.msra.mxu0 %v165
  %608 = vmatpush.msra.mxu0 %v163
  %609 = vmatpush.msra.mxu0 %v161
  %610 = vmatpush.msra.mxu0 %v159
  %611 = vmatpush.msra.mxu0 %v157
  %612 = vmatpush.msra.mxu0 %v155
  %613 = vmatpush.msra.mxu0 %v153
  %614 = vmatpush.msra.mxu0 %v151
  %615 = vmatmul.f32.gmra.mxu0 %v17
  %v616 = vpop.f32.mrf.mxu0
  %v617 = vadd.f32 %v576, %v616
  %618 = vmatmul.f32.gmra.mxu0 %v22
  %v619 = vpop.f32.mrf.mxu0
  %v620 = vadd.f32 %v579, %v619
  %621 = vmatmul.f32.gmra.mxu0 %v27
  %v622 = vpop.f32.mrf.mxu0
  %v623 = vadd.f32 %v582, %v622
  %624 = vmatmul.f32.gmra.mxu0 %v32
  %v625 = vpop.f32.mrf.mxu0
  %v626 = vadd.f32 %v585, %v625
  %627 = vmatmul.f32.gmra.mxu0 %v37
  %v628 = vpop.f32.mrf.mxu0
  %v629 = vadd.f32 %v588, %v628
  %630 = vmatmul.f32.gmra.mxu0 %v42
  %v631 = vpop.f32.mrf.mxu0
  %v632 = vadd.f32 %v591, %v631
  %633 = vmatmul.f32.gmra.mxu0 %v47
  %v634 = vpop.f32.mrf.mxu0
  %v635 = vadd.f32 %v594, %v634
  %636 = vmatmul.f32.gmra.mxu0 %v52
  %v637 = vpop.f32.mrf.mxu0
  %v638 = vadd.f32 %v597, %v637
  %639 = vdwg.mxu0
  %640 = vmatpush.msra.mxu0 0.0
  %641 = vmatpush.msra.mxu0 0.0
  %642 = vmatpush.msra.mxu0 0.0
  %643 = vmatpush.msra.mxu0 0.0
  %644 = vmatpush.msra.mxu0 0.0
  %645 = vmatpush.msra.mxu0 0.0
  %646 = vmatpush.msra.mxu0 0.0
  %647 = vmatpush.msra.mxu0 0.0
  %648 = vmatpush.msra.mxu0 %v197
  %649 = vmatpush.msra.mxu0 %v195
  %650 = vmatpush.msra.mxu0 %v193
  %651 = vmatpush.msra.mxu0 %v191
  %652 = vmatpush.msra.mxu0 %v189
  %653 = vmatpush.msra.mxu0 %v187
  %654 = vmatpush.msra.mxu0 %v185
  %655 = vmatpush.msra.mxu0 %v183
  %656 = vmatmul.f32.gmra.mxu0 %v248
  %v657 = vpop.f32.mrf.mxu0
  %v658 = vadd.f32 %v617, %v657
  %659 = vmatmul.f32.gmra.mxu0 %v251
  %v660 = vpop.f32.mrf.mxu0
  %v661 = vadd.f32 %v620, %v660
  %662 = vmatmul.f32.gmra.mxu0 %v254
  %v663 = vpop.f32.mrf.mxu0
  %v664 = vadd.f32 %v623, %v663
  %665 = vmatmul.f32.gmra.mxu0 %v257
  %v666 = vpop.f32.mrf.mxu0
  %v667 = vadd.f32 %v626, %v666
  %668 = vmatmul.f32.gmra.mxu0 %v260
  %v669 = vpop.f32.mrf.mxu0
  %v670 = vadd.f32 %v629, %v669
  %671 = vmatmul.f32.gmra.mxu0 %v263
  %v672 = vpop.f32.mrf.mxu0
  %v673 = vadd.f32 %v632, %v672
  %674 = vmatmul.f32.gmra.mxu0 %v266
  %v675 = vpop.f32.mrf.mxu0
  %v676 = vadd.f32 %v635, %v675
  %677 = vmatmul.f32.gmra.mxu0 %v269
  %v678 = vpop.f32.mrf.mxu0
  %v679 = vadd.f32 %v638, %v678
  %680 = vdwg.mxu0
  %681 = vst [vmem:[%s3] sm:$0xff] %v453
  %682 = vst [vmem:[%s3 + $0x8] sm:$0xff] %v658
  %683 = vst [vmem:[%s3 + $0x10] sm:$0xff] %v456
  %684 = vst [vmem:[%s3 + $0x18] sm:$0xff] %v661
  %685 = vst [vmem:[%s3 + $0x20] sm:$0xff] %v459
  %686 = vst [vmem:[%s3 + $0x28] sm:$0xff] %v664
  %687 = vst [vmem:[%s3 + $0x30] sm:$0xff] %v462
  %688 = vst [vmem:[%s3 + $0x38] sm:$0xff] %v667
  %689 = vst [vmem:[%s3 + $0x40] sm:$0xff] %v465
  %690 = vst [vmem:[%s3 + $0x48] sm:$0xff] %v670
  %691 = vst [vmem:[%s3 + $0x50] sm:$0xff] %v468
  %692 = vst [vmem:[%s3 + $0x58] sm:$0xff] %v673
  %693 = vst [vmem:[%s3 + $0x60] sm:$0xff] %v471
  %694 = vst [vmem:[%s3 + $0x68] sm:$0xff] %v676
  %695 = vst [vmem:[%s3 + $0x70] sm:$0xff] %v474
  %696 = vst [vmem:[%s3 + $0x78] sm:$0xff] %v679
  // Predicated region
  $region14: #{encoder_forward.15} parent=0 // pred_check
    _
  $region15: #{encoder_forward.15} parent=0 // pred_check_branch
    %698 = sbr.rel (0) target = $region17
  $region16: #{encoder_forward.15} parent=0 // pred_region
    _
  $region17: #{encoder_forward.15} parent=0 // pred_fallthru
    _
  // Predicated region
  $region18: #{encoder_forward.15} parent=0 // pred_check
    _
  $region19: #{encoder_forward.15} parent=0 // pred_check_branch
    %700 = sbr.rel (0) target = $region21
  $region20: #{encoder_forward.15} parent=0 // pred_region
    _
  $region21: #{encoder_forward.15} parent=0 // pred_fallthru
    _

</llo_original>
